<compile_context>
chip_gen: v7x
topology: tpu7x:2x2x1
jax: 0.10.0
libtpu: 0.0.40
codegen_flags: <defaults>
</compile_context>

<pallas_src>
import jax
import jax.numpy as jnp
from jax.experimental import pallas as pl
from jax.experimental.pallas import tpu as pltpu


def _lunet7_kernel(x_ref, poolm_ref, w1_ref, w2_ref, wexp_ref, fcb_ref, out_ref):
    # x_ref    : (tN, L=6500) f32 VMEM -- raw input rows (channel already squeezed)
    # poolm_ref: (L, P=52)    f32 VMEM -- block-diagonal avg-pool matrix, 1/125 baked in
    # w1_ref   : (4*1*3,) f32 SMEM     -- conv1 weight, flattened (o, ci, k)
    # w2_ref   : (4*4*3,) f32 SMEM     -- conv2 weight, flattened (o, ci, k)
    # wexp_ref : (1, 45)  f32 VMEM     -- fc weight scattered onto lanes 4*j
    # fcb_ref  : (1,)     f32 SMEM     -- fc bias
    # out_ref  : (4, tN)  f32 VMEM     -- sigmoid(fc(...)) per conv2 channel
    P = poolm_ref.shape[1]
    T1 = P - 2            # length after conv1 (valid, k=3)  -> 50
    T2 = T1 - 2           # length after conv2               -> 48
    S = T2 - 3            # length of width-4 sliding max    -> 45

    # F.avg_pool1d(X, 125): one MXU matmul against the resident pooling matrix.
    # Keeps the only heavy reduction off the XLU; fully hidden under the DMA.
    p = jnp.dot(x_ref[...], poolm_ref[...],
                preferred_element_type=jnp.float32)              # (tN, P)

    # conv1: Conv1d(1 -> 4, k=3, valid, no bias) + leaky_relu(0.01).
    # Shifted slices hoisted out of the output-channel loop (3 instead of 12).
    p_sh = [p[:, k:k + T1] for k in range(3)]
    c1 = []
    for o in range(4):
        acc = (w1_ref[3 * o + 0] * p_sh[0]
               + w1_ref[3 * o + 1] * p_sh[1]
               + w1_ref[3 * o + 2] * p_sh[2])
        c1.append(jnp.where(acc >= 0, acc, 0.01 * acc))          # (tN, T1)

    # conv2: Conv1d(4 -> 4, k=3, valid, no bias); slices hoisted (12 vs 48).
    c1_sh = [[c1[ci][:, k:k + T2] for k in range(3)] for ci in range(4)]

    wexp = wexp_ref[...]                                         # (1, S)
    bias = fcb_ref[0]
    for o in range(4):
        acc = w2_ref[o * 12] * c1_sh[0][0]                       # seed; no zeros+add
        for ci in range(4):
            for k in range(3):
                if ci == 0 and k == 0:
                    continue
                acc = acc + w2_ref[(o * 4 + ci) * 3 + k] * c1_sh[ci][k]
        # transpose(0, 1) is implicit: channels index the output rows below.
        # max_pool1d(4): width-4 sliding max; window-j max lands on lane 4*j.
        s = jnp.maximum(jnp.maximum(acc[:, 0:S], acc[:, 1:S + 1]),
                        jnp.maximum(acc[:, 2:S + 2], acc[:, 3:S + 3]))
        # Linear(12, 1): fc weights pre-scattered to lanes 4*j of wexp, so the
        # whole dot is one short lane reduction.  Then sigmoid.
        logit = jnp.sum(s * wexp, axis=-1) + bias                # (tN,)
        out_ref[o, :] = jax.nn.sigmoid(logit)                    # lane-dense row write


def _pick_tiling(N, L, block_n=None):
    """Per-generation batch tile + scoped-VMEM budget (trace-time query)."""
    try:
        vmem_cap = getattr(pltpu.get_tpu_info(), "vmem_capacity_bytes", None)
    except Exception:
        vmem_cap = None
    if vmem_cap is None:
        vmem_cap = 64 * 1024 * 1024          # assume the smallest (v7x per-TC)
    if block_n is None:
        # v5e/v6e (128 MiB VMEM): 1024 rows amortize the ~0.35us/step overhead.
        # v7x (64 MiB per TC): cap at 512 so 2x double-buffered 13.3 MB input
        # blocks + pooling matrix fit, and large batches still feed both TCs.
        block_n = 1024 if vmem_cap >= 96 * 1024 * 1024 else 512
    tN = max(1, min(block_n, N))
    # 2x double-buffered input block + resident pooling matrix + scratch headroom.
    need = 2 * tN * L * 4 + 2 * L * 52 * 4 + 8 * 1024 * 1024
    vmem_limit = int(max(32 * 1024 * 1024,
                         min(need, vmem_cap - 8 * 1024 * 1024)))
    return tN, vmem_limit


def lunet7_forward(X, w1, w2, fcW, fcb, *, block_n=None):
    """X: (N, 1, L) with L // 125 == 52 (required by Linear(12, 1))."""
    N, C, L = X.shape
    assert C == 1
    P = L // 125
    assert P == 52, "fc(12,1) requires floor(L/125) == 52 (e.g. L = 6500)"
    # TODO(synk): PyTorch .squeeze() also drops the batch dim when N == 1
    # (output (4, 1) there vs (4, 1, 1) here); callers with N == 1 must adapt.

    x2d = X[:, 0, :]                       # (N, L): free channel squeeze, no relayout

    tN, vmem_limit = _pick_tiling(N, L, block_n)
    n_blocks = pl.cdiv(N, tN)              # partial last block allowed (no jnp.pad)

    # Block-diagonal avg-pool matrix with 1/125 baked in; trailing L - P*125
    # columns of the input hit all-zero rows (matches floor-mode truncation).
    t = jnp.arange(P * 125)
    pool_mat = jnp.zeros((L, P), jnp.float32).at[t, t // 125].set(1.0 / 125.0)

    # fc weight scattered onto lanes 4*j of a length-45 vector (window-j max of
    # the fused sliding-max lives at lane 4*j inside the kernel).
    S = (P - 4) - 3
    w_exp = jnp.zeros((1, S), jnp.float32).at[0, ::4].set(fcW[0].astype(jnp.float32))

    out = pl.pallas_call(
        _lunet7_kernel,
        out_shape=jax.ShapeDtypeStruct((4, N), jnp.float32),
        grid=(n_blocks,),
        in_specs=[
            pl.BlockSpec((tN, L), lambda i: (i, 0)),              # raw input rows
            pl.BlockSpec((L, P), lambda i: (0, 0)),               # pooling matrix (resident)
            pl.BlockSpec(memory_space=pltpu.MemorySpace.SMEM),    # w1 flat
            pl.BlockSpec(memory_space=pltpu.MemorySpace.SMEM),    # w2 flat
            pl.BlockSpec((1, S), lambda i: (0, 0)),               # fc weight (expanded)
            pl.BlockSpec(memory_space=pltpu.MemorySpace.SMEM),    # fc bias
        ],
        out_specs=pl.BlockSpec((4, tN), lambda i: (0, i)),        # lane-dense output
        compiler_params=pltpu.CompilerParams(
            dimension_semantics=("parallel",),    # shard batch blocks across TCs (v7x)
            vmem_limit_bytes=vmem_limit,
        ),
    )(x2d, pool_mat,
      w1.reshape(-1).astype(jnp.float32),
      w2.reshape(-1).astype(jnp.float32),
      w_exp, fcb.astype(jnp.float32))

    # (4, N) -> (4, N, 1): PyTorch's output shape for N > 1.
    return out[..., None]


def _reference(X, w1, w2, fcW, fcb):
    """Pure-JAX reference replicating the PyTorch forward (for validation)."""
    N, _, L = X.shape
    P = L // 125
    p = X[:, 0, :P * 125].reshape(N, P, 125).mean(-1)            # avg_pool1d
    T1, T2 = P - 2, P - 4
    c1 = jnp.stack(
        [sum(w1[o, 0, k] * p[:, k:k + T1] for k in range(3)) for o in range(4)],
        axis=1)                                                  # (N, 4, 50)
    c1 = jnp.where(c1 >= 0, c1, 0.01 * c1)
    c2 = jnp.stack(
        [sum(w2[o, ci, k] * c1[:, ci, k:k + T2]
             for ci in range(4) for k in range(3)) for o in range(4)],
        axis=1)                                                  # (N, 4, 48)
    t = jnp.transpose(c2, (1, 0, 2))                             # (4, N, 48)
    m = t.reshape(4, N, T2 // 4, 4).max(-1)                      # (4, N, 12)
    y = jnp.einsum('onj,j->on', m, fcW[0])[..., None] + fcb[0]
    return jax.nn.sigmoid(y)


if __name__ == "__main__":
    key = jax.random.PRNGKey(0)
    k1, k2, k3, k4, kx = jax.random.split(key, 5)
    # Deterministic synthetic parameters (shapes from LuNet7_ip.__init__).
    w1 = jax.random.normal(k1, (4, 1, 3), jnp.float32) * 0.5     # conv1 weight
    w2 = jax.random.normal(k2, (4, 4, 3), jnp.float32) * 0.3     # conv2 weight
    fcW = jax.random.normal(k3, (1, 12), jnp.float32) * 0.3      # fc weight
    fcb = jax.random.normal(k4, (1,), jnp.float32) * 0.1         # fc bias
    # Smallest consistent input: batch=2, channels=1, length=6500 (52 * 125).
    X = jax.random.normal(kx, (2, 1, 6500), jnp.float32)

    out = jax.block_until_ready(lunet7_forward(X, w1, w2, fcW, fcb))
    ref = jax.block_until_ready(_reference(X, w1, w2, fcW, fcb))

    assert out.shape == (4, 2, 1), out.shape
    if not bool(jnp.allclose(out, ref, rtol=1e-4, atol=1e-5)):
        raise SystemExit(f"mismatch: pallas={out.ravel()} ref={ref.ravel()}")
    print("KERNEL_OK")
</pallas_src>

<mosaic_0001>
module attributes {stable_mosaic.version = 11 : i64} {
  func.func @_lunet7_kernel(%arg0: i32, %arg1: memref<2x6500xf32, #tpu.memory_space<vmem>>, %arg2: memref<6500x52xf32, #tpu.memory_space<vmem>>, %arg3: memref<12xf32, #tpu.memory_space<smem>>, %arg4: memref<48xf32, #tpu.memory_space<smem>>, %arg5: memref<1x45xf32, #tpu.memory_space<vmem>>, %arg6: memref<1xf32, #tpu.memory_space<smem>>, %arg7: memref<4x2xf32, #tpu.memory_space<vmem>>) attributes {dimension_semantics = [#tpu.dimension_semantics<parallel>], iteration_bounds = array<i64: 1>, scalar_prefetch = 0 : i64, scratch_operands = 0 : i64, tpu.core_type = #tpu.core_type<tc>, window_params = [{transform_indices = @transform_0, window_bounds = array<i64: 2, 6500>}, {pipeline_mode = #tpu.pipeline_mode<synchronous>, transform_indices = @transform_1, window_bounds = array<i64: 6500, 52>}, {transform_indices = @transform_2, window_bounds = array<i64: 12>}, {transform_indices = @transform_3, window_bounds = array<i64: 48>}, {pipeline_mode = #tpu.pipeline_mode<synchronous>, transform_indices = @transform_4, window_bounds = array<i64: 1, 45>}, {transform_indices = @transform_5, window_bounds = array<i64: 1>}, {transform_indices = @transform_6, window_bounds = array<i64: 4, 2>}]} {
    %c0 = arith.constant 0 : index
    %c0_0 = arith.constant 0 : index
    %0 = vector.load %arg1[%c0, %c0_0] : memref<2x6500xf32, #tpu.memory_space<vmem>>, vector<2x6500xf32>
    %c0_1 = arith.constant 0 : index
    %c0_2 = arith.constant 0 : index
    %1 = vector.load %arg2[%c0_1, %c0_2] : memref<6500x52xf32, #tpu.memory_space<vmem>>, vector<6500x52xf32>
    %cst = arith.constant dense<0.000000e+00> : vector<2x52xf32>
    %2 = tpu.matmul %0, %1, %cst {dimension_numbers = #tpu.dot_dimension_numbers<[1], [0], [0], [1], [0, 0, 1, 1], [], []>} : vector<2x6500xf32>, vector<6500x52xf32>, vector<2x52xf32> -> vector<2x52xf32>
    %3 = vector.extract_strided_slice %2 {offsets = [0, 0], sizes = [2, 50], strides = [1, 1]} : vector<2x52xf32> to vector<2x50xf32>
    %4 = vector.extract_strided_slice %2 {offsets = [0, 1], sizes = [2, 50], strides = [1, 1]} : vector<2x52xf32> to vector<2x50xf32>
    %5 = vector.extract_strided_slice %2 {offsets = [0, 2], sizes = [2, 50], strides = [1, 1]} : vector<2x52xf32> to vector<2x50xf32>
    %c0_3 = arith.constant 0 : index
    %6 = memref.load %arg3[%c0_3] : memref<12xf32, #tpu.memory_space<smem>>
    %7 = vector.broadcast %6 : f32 to vector<2x50xf32>
    %8 = arith.mulf %7, %3 : vector<2x50xf32>
    %c1 = arith.constant 1 : index
    %9 = memref.load %arg3[%c1] : memref<12xf32, #tpu.memory_space<smem>>
    %10 = vector.broadcast %9 : f32 to vector<2x50xf32>
    %11 = arith.mulf %10, %4 : vector<2x50xf32>
    %12 = arith.addf %8, %11 : vector<2x50xf32>
    %c2 = arith.constant 2 : index
    %13 = memref.load %arg3[%c2] : memref<12xf32, #tpu.memory_space<smem>>
    %14 = vector.broadcast %13 : f32 to vector<2x50xf32>
    %15 = arith.mulf %14, %5 : vector<2x50xf32>
    %16 = arith.addf %12, %15 : vector<2x50xf32>
    %cst_4 = arith.constant 0.000000e+00 : f32
    %17 = vector.broadcast %cst_4 : f32 to vector<2x50xf32>
    %18 = arith.cmpf oge, %16, %17 : vector<2x50xf32>
    %cst_5 = arith.constant 0.00999999977 : f32
    %19 = vector.broadcast %cst_5 : f32 to vector<2x50xf32>
    %20 = arith.mulf %19, %16 : vector<2x50xf32>
    %21 = arith.select %18, %16, %20 : vector<2x50xi1>, vector<2x50xf32>
    %c3 = arith.constant 3 : index
    %22 = memref.load %arg3[%c3] : memref<12xf32, #tpu.memory_space<smem>>
    %23 = vector.broadcast %22 : f32 to vector<2x50xf32>
    %24 = arith.mulf %23, %3 : vector<2x50xf32>
    %c4 = arith.constant 4 : index
    %25 = memref.load %arg3[%c4] : memref<12xf32, #tpu.memory_space<smem>>
    %26 = vector.broadcast %25 : f32 to vector<2x50xf32>
    %27 = arith.mulf %26, %4 : vector<2x50xf32>
    %28 = arith.addf %24, %27 : vector<2x50xf32>
    %c5 = arith.constant 5 : index
    %29 = memref.load %arg3[%c5] : memref<12xf32, #tpu.memory_space<smem>>
    %30 = vector.broadcast %29 : f32 to vector<2x50xf32>
    %31 = arith.mulf %30, %5 : vector<2x50xf32>
    %32 = arith.addf %28, %31 : vector<2x50xf32>
    %cst_6 = arith.constant 0.000000e+00 : f32
    %33 = vector.broadcast %cst_6 : f32 to vector<2x50xf32>
    %34 = arith.cmpf oge, %32, %33 : vector<2x50xf32>
    %cst_7 = arith.constant 0.00999999977 : f32
    %35 = vector.broadcast %cst_7 : f32 to vector<2x50xf32>
    %36 = arith.mulf %35, %32 : vector<2x50xf32>
    %37 = arith.select %34, %32, %36 : vector<2x50xi1>, vector<2x50xf32>
    %c6 = arith.constant 6 : index
    %38 = memref.load %arg3[%c6] : memref<12xf32, #tpu.memory_space<smem>>
    %39 = vector.broadcast %38 : f32 to vector<2x50xf32>
    %40 = arith.mulf %39, %3 : vector<2x50xf32>
    %c7 = arith.constant 7 : index
    %41 = memref.load %arg3[%c7] : memref<12xf32, #tpu.memory_space<smem>>
    %42 = vector.broadcast %41 : f32 to vector<2x50xf32>
    %43 = arith.mulf %42, %4 : vector<2x50xf32>
    %44 = arith.addf %40, %43 : vector<2x50xf32>
    %c8 = arith.constant 8 : index
    %45 = memref.load %arg3[%c8] : memref<12xf32, #tpu.memory_space<smem>>
    %46 = vector.broadcast %45 : f32 to vector<2x50xf32>
    %47 = arith.mulf %46, %5 : vector<2x50xf32>
    %48 = arith.addf %44, %47 : vector<2x50xf32>
    %cst_8 = arith.constant 0.000000e+00 : f32
    %49 = vector.broadcast %cst_8 : f32 to vector<2x50xf32>
    %50 = arith.cmpf oge, %48, %49 : vector<2x50xf32>
    %cst_9 = arith.constant 0.00999999977 : f32
    %51 = vector.broadcast %cst_9 : f32 to vector<2x50xf32>
    %52 = arith.mulf %51, %48 : vector<2x50xf32>
    %53 = arith.select %50, %48, %52 : vector<2x50xi1>, vector<2x50xf32>
    %c9 = arith.constant 9 : index
    %54 = memref.load %arg3[%c9] : memref<12xf32, #tpu.memory_space<smem>>
    %55 = vector.broadcast %54 : f32 to vector<2x50xf32>
    %56 = arith.mulf %55, %3 : vector<2x50xf32>
    %c10 = arith.constant 10 : index
    %57 = memref.load %arg3[%c10] : memref<12xf32, #tpu.memory_space<smem>>
    %58 = vector.broadcast %57 : f32 to vector<2x50xf32>
    %59 = arith.mulf %58, %4 : vector<2x50xf32>
    %60 = arith.addf %56, %59 : vector<2x50xf32>
    %c11 = arith.constant 11 : index
    %61 = memref.load %arg3[%c11] : memref<12xf32, #tpu.memory_space<smem>>
    %62 = vector.broadcast %61 : f32 to vector<2x50xf32>
    %63 = arith.mulf %62, %5 : vector<2x50xf32>
    %64 = arith.addf %60, %63 : vector<2x50xf32>
    %cst_10 = arith.constant 0.000000e+00 : f32
    %65 = vector.broadcast %cst_10 : f32 to vector<2x50xf32>
    %66 = arith.cmpf oge, %64, %65 : vector<2x50xf32>
    %cst_11 = arith.constant 0.00999999977 : f32
    %67 = vector.broadcast %cst_11 : f32 to vector<2x50xf32>
    %68 = arith.mulf %67, %64 : vector<2x50xf32>
    %69 = arith.select %66, %64, %68 : vector<2x50xi1>, vector<2x50xf32>
    %70 = vector.extract_strided_slice %21 {offsets = [0, 0], sizes = [2, 48], strides = [1, 1]} : vector<2x50xf32> to vector<2x48xf32>
    %71 = vector.extract_strided_slice %21 {offsets = [0, 1], sizes = [2, 48], strides = [1, 1]} : vector<2x50xf32> to vector<2x48xf32>
    %72 = vector.extract_strided_slice %21 {offsets = [0, 2], sizes = [2, 48], strides = [1, 1]} : vector<2x50xf32> to vector<2x48xf32>
    %73 = vector.extract_strided_slice %37 {offsets = [0, 0], sizes = [2, 48], strides = [1, 1]} : vector<2x50xf32> to vector<2x48xf32>
    %74 = vector.extract_strided_slice %37 {offsets = [0, 1], sizes = [2, 48], strides = [1, 1]} : vector<2x50xf32> to vector<2x48xf32>
    %75 = vector.extract_strided_slice %37 {offsets = [0, 2], sizes = [2, 48], strides = [1, 1]} : vector<2x50xf32> to vector<2x48xf32>
    %76 = vector.extract_strided_slice %53 {offsets = [0, 0], sizes = [2, 48], strides = [1, 1]} : vector<2x50xf32> to vector<2x48xf32>
    %77 = vector.extract_strided_slice %53 {offsets = [0, 1], sizes = [2, 48], strides = [1, 1]} : vector<2x50xf32> to vector<2x48xf32>
    %78 = vector.extract_strided_slice %53 {offsets = [0, 2], sizes = [2, 48], strides = [1, 1]} : vector<2x50xf32> to vector<2x48xf32>
    %79 = vector.extract_strided_slice %69 {offsets = [0, 0], sizes = [2, 48], strides = [1, 1]} : vector<2x50xf32> to vector<2x48xf32>
    %80 = vector.extract_strided_slice %69 {offsets = [0, 1], sizes = [2, 48], strides = [1, 1]} : vector<2x50xf32> to vector<2x48xf32>
    %81 = vector.extract_strided_slice %69 {offsets = [0, 2], sizes = [2, 48], strides = [1, 1]} : vector<2x50xf32> to vector<2x48xf32>
    %c0_12 = arith.constant 0 : index
    %c0_13 = arith.constant 0 : index
    %82 = vector.load %arg5[%c0_12, %c0_13] : memref<1x45xf32, #tpu.memory_space<vmem>>, vector<1x45xf32>
    %c0_14 = arith.constant 0 : index
    %83 = memref.load %arg6[%c0_14] : memref<1xf32, #tpu.memory_space<smem>>
    %c0_15 = arith.constant 0 : index
    %84 = memref.load %arg4[%c0_15] : memref<48xf32, #tpu.memory_space<smem>>
    %85 = vector.broadcast %84 : f32 to vector<2x48xf32>
    %86 = arith.mulf %85, %70 : vector<2x48xf32>
    %c1_16 = arith.constant 1 : index
    %87 = memref.load %arg4[%c1_16] : memref<48xf32, #tpu.memory_space<smem>>
    %88 = vector.broadcast %87 : f32 to vector<2x48xf32>
    %89 = arith.mulf %88, %71 : vector<2x48xf32>
    %90 = arith.addf %86, %89 : vector<2x48xf32>
    %c2_17 = arith.constant 2 : index
    %91 = memref.load %arg4[%c2_17] : memref<48xf32, #tpu.memory_space<smem>>
    %92 = vector.broadcast %91 : f32 to vector<2x48xf32>
    %93 = arith.mulf %92, %72 : vector<2x48xf32>
    %94 = arith.addf %90, %93 : vector<2x48xf32>
    %c3_18 = arith.constant 3 : index
    %95 = memref.load %arg4[%c3_18] : memref<48xf32, #tpu.memory_space<smem>>
    %96 = vector.broadcast %95 : f32 to vector<2x48xf32>
    %97 = arith.mulf %96, %73 : vector<2x48xf32>
    %98 = arith.addf %94, %97 : vector<2x48xf32>
    %c4_19 = arith.constant 4 : index
    %99 = memref.load %arg4[%c4_19] : memref<48xf32, #tpu.memory_space<smem>>
    %100 = vector.broadcast %99 : f32 to vector<2x48xf32>
    %101 = arith.mulf %100, %74 : vector<2x48xf32>
    %102 = arith.addf %98, %101 : vector<2x48xf32>
    %c5_20 = arith.constant 5 : index
    %103 = memref.load %arg4[%c5_20] : memref<48xf32, #tpu.memory_space<smem>>
    %104 = vector.broadcast %103 : f32 to vector<2x48xf32>
    %105 = arith.mulf %104, %75 : vector<2x48xf32>
    %106 = arith.addf %102, %105 : vector<2x48xf32>
    %c6_21 = arith.constant 6 : index
    %107 = memref.load %arg4[%c6_21] : memref<48xf32, #tpu.memory_space<smem>>
    %108 = vector.broadcast %107 : f32 to vector<2x48xf32>
    %109 = arith.mulf %108, %76 : vector<2x48xf32>
    %110 = arith.addf %106, %109 : vector<2x48xf32>
    %c7_22 = arith.constant 7 : index
    %111 = memref.load %arg4[%c7_22] : memref<48xf32, #tpu.memory_space<smem>>
    %112 = vector.broadcast %111 : f32 to vector<2x48xf32>
    %113 = arith.mulf %112, %77 : vector<2x48xf32>
    %114 = arith.addf %110, %113 : vector<2x48xf32>
    %c8_23 = arith.constant 8 : index
    %115 = memref.load %arg4[%c8_23] : memref<48xf32, #tpu.memory_space<smem>>
    %116 = vector.broadcast %115 : f32 to vector<2x48xf32>
    %117 = arith.mulf %116, %78 : vector<2x48xf32>
    %118 = arith.addf %114, %117 : vector<2x48xf32>
    %c9_24 = arith.constant 9 : index
    %119 = memref.load %arg4[%c9_24] : memref<48xf32, #tpu.memory_space<smem>>
    %120 = vector.broadcast %119 : f32 to vector<2x48xf32>
    %121 = arith.mulf %120, %79 : vector<2x48xf32>
    %122 = arith.addf %118, %121 : vector<2x48xf32>
    %c10_25 = arith.constant 10 : index
    %123 = memref.load %arg4[%c10_25] : memref<48xf32, #tpu.memory_space<smem>>
    %124 = vector.broadcast %123 : f32 to vector<2x48xf32>
    %125 = arith.mulf %124, %80 : vector<2x48xf32>
    %126 = arith.addf %122, %125 : vector<2x48xf32>
    %c11_26 = arith.constant 11 : index
    %127 = memref.load %arg4[%c11_26] : memref<48xf32, #tpu.memory_space<smem>>
    %128 = vector.broadcast %127 : f32 to vector<2x48xf32>
    %129 = arith.mulf %128, %81 : vector<2x48xf32>
    %130 = arith.addf %126, %129 : vector<2x48xf32>
    %131 = vector.extract_strided_slice %130 {offsets = [0, 0], sizes = [2, 45], strides = [1, 1]} : vector<2x48xf32> to vector<2x45xf32>
    %132 = vector.extract_strided_slice %130 {offsets = [0, 1], sizes = [2, 45], strides = [1, 1]} : vector<2x48xf32> to vector<2x45xf32>
    %133 = arith.maximumf %131, %132 : vector<2x45xf32>
    %134 = vector.extract_strided_slice %130 {offsets = [0, 2], sizes = [2, 45], strides = [1, 1]} : vector<2x48xf32> to vector<2x45xf32>
    %135 = vector.extract_strided_slice %130 {offsets = [0, 3], sizes = [2, 45], strides = [1, 1]} : vector<2x48xf32> to vector<2x45xf32>
    %136 = arith.maximumf %134, %135 : vector<2x45xf32>
    %137 = arith.maximumf %133, %136 : vector<2x45xf32>
    %138 = vector.broadcast %82 : vector<1x45xf32> to vector<2x45xf32>
    %139 = arith.mulf %137, %138 : vector<2x45xf32>
    %cst_27 = arith.constant dense<0.000000e+00> : vector<2xf32>
    %140 = vector.multi_reduction <add>, %139, %cst_27 [1] : vector<2x45xf32> to vector<2xf32>
    %141 = vector.broadcast %83 : f32 to vector<2xf32>
    %142 = arith.addf %140, %141 : vector<2xf32>
    %143 = arith.negf %142 : vector<2xf32>
    %144 = math.exp %143 : vector<2xf32>
    %cst_28 = arith.constant 1.000000e+00 : f32
    %145 = vector.broadcast %cst_28 : f32 to vector<2xf32>
    %146 = arith.addf %145, %144 : vector<2xf32>
    %147 = arith.divf %145, %146 : vector<2xf32>
    %c0_29 = arith.constant 0 : index
    %c0_30 = arith.constant 0 : index
    %148 = vector.load %arg7[%c0_29, %c0_30] : memref<4x2xf32, #tpu.memory_space<vmem>>, vector<1x2xf32>
    %149 = vector.shape_cast %148 : vector<1x2xf32> to vector<2xf32>
    %150 = vector.shape_cast %147 : vector<2xf32> to vector<1x2xf32>
    tpu.vector_store %arg7[%c0_29, %c0_30], %150 {strides = array<i32>} : memref<4x2xf32, #tpu.memory_space<vmem>>, vector<1x2xf32>,
    %c12 = arith.constant 12 : index
    %151 = memref.load %arg4[%c12] : memref<48xf32, #tpu.memory_space<smem>>
    %152 = vector.broadcast %151 : f32 to vector<2x48xf32>
    %153 = arith.mulf %152, %70 : vector<2x48xf32>
    %c13 = arith.constant 13 : index
    %154 = memref.load %arg4[%c13] : memref<48xf32, #tpu.memory_space<smem>>
    %155 = vector.broadcast %154 : f32 to vector<2x48xf32>
    %156 = arith.mulf %155, %71 : vector<2x48xf32>
    %157 = arith.addf %153, %156 : vector<2x48xf32>
    %c14 = arith.constant 14 : index
    %158 = memref.load %arg4[%c14] : memref<48xf32, #tpu.memory_space<smem>>
    %159 = vector.broadcast %158 : f32 to vector<2x48xf32>
    %160 = arith.mulf %159, %72 : vector<2x48xf32>
    %161 = arith.addf %157, %160 : vector<2x48xf32>
    %c15 = arith.constant 15 : index
    %162 = memref.load %arg4[%c15] : memref<48xf32, #tpu.memory_space<smem>>
    %163 = vector.broadcast %162 : f32 to vector<2x48xf32>
    %164 = arith.mulf %163, %73 : vector<2x48xf32>
    %165 = arith.addf %161, %164 : vector<2x48xf32>
    %c16 = arith.constant 16 : index
    %166 = memref.load %arg4[%c16] : memref<48xf32, #tpu.memory_space<smem>>
    %167 = vector.broadcast %166 : f32 to vector<2x48xf32>
    %168 = arith.mulf %167, %74 : vector<2x48xf32>
    %169 = arith.addf %165, %168 : vector<2x48xf32>
    %c17 = arith.constant 17 : index
    %170 = memref.load %arg4[%c17] : memref<48xf32, #tpu.memory_space<smem>>
    %171 = vector.broadcast %170 : f32 to vector<2x48xf32>
    %172 = arith.mulf %171, %75 : vector<2x48xf32>
    %173 = arith.addf %169, %172 : vector<2x48xf32>
    %c18 = arith.constant 18 : index
    %174 = memref.load %arg4[%c18] : memref<48xf32, #tpu.memory_space<smem>>
    %175 = vector.broadcast %174 : f32 to vector<2x48xf32>
    %176 = arith.mulf %175, %76 : vector<2x48xf32>
    %177 = arith.addf %173, %176 : vector<2x48xf32>
    %c19 = arith.constant 19 : index
    %178 = memref.load %arg4[%c19] : memref<48xf32, #tpu.memory_space<smem>>
    %179 = vector.broadcast %178 : f32 to vector<2x48xf32>
    %180 = arith.mulf %179, %77 : vector<2x48xf32>
    %181 = arith.addf %177, %180 : vector<2x48xf32>
    %c20 = arith.constant 20 : index
    %182 = memref.load %arg4[%c20] : memref<48xf32, #tpu.memory_space<smem>>
    %183 = vector.broadcast %182 : f32 to vector<2x48xf32>
    %184 = arith.mulf %183, %78 : vector<2x48xf32>
    %185 = arith.addf %181, %184 : vector<2x48xf32>
    %c21 = arith.constant 21 : index
    %186 = memref.load %arg4[%c21] : memref<48xf32, #tpu.memory_space<smem>>
    %187 = vector.broadcast %186 : f32 to vector<2x48xf32>
    %188 = arith.mulf %187, %79 : vector<2x48xf32>
    %189 = arith.addf %185, %188 : vector<2x48xf32>
    %c22 = arith.constant 22 : index
    %190 = memref.load %arg4[%c22] : memref<48xf32, #tpu.memory_space<smem>>
    %191 = vector.broadcast %190 : f32 to vector<2x48xf32>
    %192 = arith.mulf %191, %80 : vector<2x48xf32>
    %193 = arith.addf %189, %192 : vector<2x48xf32>
    %c23 = arith.constant 23 : index
    %194 = memref.load %arg4[%c23] : memref<48xf32, #tpu.memory_space<smem>>
    %195 = vector.broadcast %194 : f32 to vector<2x48xf32>
    %196 = arith.mulf %195, %81 : vector<2x48xf32>
    %197 = arith.addf %193, %196 : vector<2x48xf32>
    %198 = vector.extract_strided_slice %197 {offsets = [0, 0], sizes = [2, 45], strides = [1, 1]} : vector<2x48xf32> to vector<2x45xf32>
    %199 = vector.extract_strided_slice %197 {offsets = [0, 1], sizes = [2, 45], strides = [1, 1]} : vector<2x48xf32> to vector<2x45xf32>
    %200 = arith.maximumf %198, %199 : vector<2x45xf32>
    %201 = vector.extract_strided_slice %197 {offsets = [0, 2], sizes = [2, 45], strides = [1, 1]} : vector<2x48xf32> to vector<2x45xf32>
    %202 = vector.extract_strided_slice %197 {offsets = [0, 3], sizes = [2, 45], strides = [1, 1]} : vector<2x48xf32> to vector<2x45xf32>
    %203 = arith.maximumf %201, %202 : vector<2x45xf32>
    %204 = arith.maximumf %200, %203 : vector<2x45xf32>
    %205 = vector.broadcast %82 : vector<1x45xf32> to vector<2x45xf32>
    %206 = arith.mulf %204, %205 : vector<2x45xf32>
    %cst_31 = arith.constant dense<0.000000e+00> : vector<2xf32>
    %207 = vector.multi_reduction <add>, %206, %cst_31 [1] : vector<2x45xf32> to vector<2xf32>
    %208 = vector.broadcast %83 : f32 to vector<2xf32>
    %209 = arith.addf %207, %208 : vector<2xf32>
    %210 = arith.negf %209 : vector<2xf32>
    %211 = math.exp %210 : vector<2xf32>
    %cst_32 = arith.constant 1.000000e+00 : f32
    %212 = vector.broadcast %cst_32 : f32 to vector<2xf32>
    %213 = arith.addf %212, %211 : vector<2xf32>
    %214 = arith.divf %212, %213 : vector<2xf32>
    %c1_33 = arith.constant 1 : index
    %c0_34 = arith.constant 0 : index
    %215 = vector.load %arg7[%c1_33, %c0_34] : memref<4x2xf32, #tpu.memory_space<vmem>>, vector<1x2xf32>
    %216 = vector.shape_cast %215 : vector<1x2xf32> to vector<2xf32>
    %217 = vector.shape_cast %214 : vector<2xf32> to vector<1x2xf32>
    tpu.vector_store %arg7[%c1_33, %c0_34], %217 {strides = array<i32>} : memref<4x2xf32, #tpu.memory_space<vmem>>, vector<1x2xf32>,
    %c24 = arith.constant 24 : index
    %218 = memref.load %arg4[%c24] : memref<48xf32, #tpu.memory_space<smem>>
    %219 = vector.broadcast %218 : f32 to vector<2x48xf32>
    %220 = arith.mulf %219, %70 : vector<2x48xf32>
    %c25 = arith.constant 25 : index
    %221 = memref.load %arg4[%c25] : memref<48xf32, #tpu.memory_space<smem>>
    %222 = vector.broadcast %221 : f32 to vector<2x48xf32>
    %223 = arith.mulf %222, %71 : vector<2x48xf32>
    %224 = arith.addf %220, %223 : vector<2x48xf32>
    %c26 = arith.constant 26 : index
    %225 = memref.load %arg4[%c26] : memref<48xf32, #tpu.memory_space<smem>>
    %226 = vector.broadcast %225 : f32 to vector<2x48xf32>
    %227 = arith.mulf %226, %72 : vector<2x48xf32>
    %228 = arith.addf %224, %227 : vector<2x48xf32>
    %c27 = arith.constant 27 : index
    %229 = memref.load %arg4[%c27] : memref<48xf32, #tpu.memory_space<smem>>
    %230 = vector.broadcast %229 : f32 to vector<2x48xf32>
    %231 = arith.mulf %230, %73 : vector<2x48xf32>
    %232 = arith.addf %228, %231 : vector<2x48xf32>
    %c28 = arith.constant 28 : index
    %233 = memref.load %arg4[%c28] : memref<48xf32, #tpu.memory_space<smem>>
    %234 = vector.broadcast %233 : f32 to vector<2x48xf32>
    %235 = arith.mulf %234, %74 : vector<2x48xf32>
    %236 = arith.addf %232, %235 : vector<2x48xf32>
    %c29 = arith.constant 29 : index
    %237 = memref.load %arg4[%c29] : memref<48xf32, #tpu.memory_space<smem>>
    %238 = vector.broadcast %237 : f32 to vector<2x48xf32>
    %239 = arith.mulf %238, %75 : vector<2x48xf32>
    %240 = arith.addf %236, %239 : vector<2x48xf32>
    %c30 = arith.constant 30 : index
    %241 = memref.load %arg4[%c30] : memref<48xf32, #tpu.memory_space<smem>>
    %242 = vector.broadcast %241 : f32 to vector<2x48xf32>
    %243 = arith.mulf %242, %76 : vector<2x48xf32>
    %244 = arith.addf %240, %243 : vector<2x48xf32>
    %c31 = arith.constant 31 : index
    %245 = memref.load %arg4[%c31] : memref<48xf32, #tpu.memory_space<smem>>
    %246 = vector.broadcast %245 : f32 to vector<2x48xf32>
    %247 = arith.mulf %246, %77 : vector<2x48xf32>
    %248 = arith.addf %244, %247 : vector<2x48xf32>
    %c32 = arith.constant 32 : index
    %249 = memref.load %arg4[%c32] : memref<48xf32, #tpu.memory_space<smem>>
    %250 = vector.broadcast %249 : f32 to vector<2x48xf32>
    %251 = arith.mulf %250, %78 : vector<2x48xf32>
    %252 = arith.addf %248, %251 : vector<2x48xf32>
    %c33 = arith.constant 33 : index
    %253 = memref.load %arg4[%c33] : memref<48xf32, #tpu.memory_space<smem>>
    %254 = vector.broadcast %253 : f32 to vector<2x48xf32>
    %255 = arith.mulf %254, %79 : vector<2x48xf32>
    %256 = arith.addf %252, %255 : vector<2x48xf32>
    %c34 = arith.constant 34 : index
    %257 = memref.load %arg4[%c34] : memref<48xf32, #tpu.memory_space<smem>>
    %258 = vector.broadcast %257 : f32 to vector<2x48xf32>
    %259 = arith.mulf %258, %80 : vector<2x48xf32>
    %260 = arith.addf %256, %259 : vector<2x48xf32>
    %c35 = arith.constant 35 : index
    %261 = memref.load %arg4[%c35] : memref<48xf32, #tpu.memory_space<smem>>
    %262 = vector.broadcast %261 : f32 to vector<2x48xf32>
    %263 = arith.mulf %262, %81 : vector<2x48xf32>
    %264 = arith.addf %260, %263 : vector<2x48xf32>
    %265 = vector.extract_strided_slice %264 {offsets = [0, 0], sizes = [2, 45], strides = [1, 1]} : vector<2x48xf32> to vector<2x45xf32>
    %266 = vector.extract_strided_slice %264 {offsets = [0, 1], sizes = [2, 45], strides = [1, 1]} : vector<2x48xf32> to vector<2x45xf32>
    %267 = arith.maximumf %265, %266 : vector<2x45xf32>
    %268 = vector.extract_strided_slice %264 {offsets = [0, 2], sizes = [2, 45], strides = [1, 1]} : vector<2x48xf32> to vector<2x45xf32>
    %269 = vector.extract_strided_slice %264 {offsets = [0, 3], sizes = [2, 45], strides = [1, 1]} : vector<2x48xf32> to vector<2x45xf32>
    %270 = arith.maximumf %268, %269 : vector<2x45xf32>
    %271 = arith.maximumf %267, %270 : vector<2x45xf32>
    %272 = vector.broadcast %82 : vector<1x45xf32> to vector<2x45xf32>
    %273 = arith.mulf %271, %272 : vector<2x45xf32>
    %cst_35 = arith.constant dense<0.000000e+00> : vector<2xf32>
    %274 = vector.multi_reduction <add>, %273, %cst_35 [1] : vector<2x45xf32> to vector<2xf32>
    %275 = vector.broadcast %83 : f32 to vector<2xf32>
    %276 = arith.addf %274, %275 : vector<2xf32>
    %277 = arith.negf %276 : vector<2xf32>
    %278 = math.exp %277 : vector<2xf32>
    %cst_36 = arith.constant 1.000000e+00 : f32
    %279 = vector.broadcast %cst_36 : f32 to vector<2xf32>
    %280 = arith.addf %279, %278 : vector<2xf32>
    %281 = arith.divf %279, %280 : vector<2xf32>
    %c2_37 = arith.constant 2 : index
    %c0_38 = arith.constant 0 : index
    %282 = vector.load %arg7[%c2_37, %c0_38] : memref<4x2xf32, #tpu.memory_space<vmem>>, vector<1x2xf32>
    %283 = vector.shape_cast %282 : vector<1x2xf32> to vector<2xf32>
    %284 = vector.shape_cast %281 : vector<2xf32> to vector<1x2xf32>
    tpu.vector_store %arg7[%c2_37, %c0_38], %284 {strides = array<i32>} : memref<4x2xf32, #tpu.memory_space<vmem>>, vector<1x2xf32>,
    %c36 = arith.constant 36 : index
    %285 = memref.load %arg4[%c36] : memref<48xf32, #tpu.memory_space<smem>>
    %286 = vector.broadcast %285 : f32 to vector<2x48xf32>
    %287 = arith.mulf %286, %70 : vector<2x48xf32>
    %c37 = arith.constant 37 : index
    %288 = memref.load %arg4[%c37] : memref<48xf32, #tpu.memory_space<smem>>
    %289 = vector.broadcast %288 : f32 to vector<2x48xf32>
    %290 = arith.mulf %289, %71 : vector<2x48xf32>
    %291 = arith.addf %287, %290 : vector<2x48xf32>
    %c38 = arith.constant 38 : index
    %292 = memref.load %arg4[%c38] : memref<48xf32, #tpu.memory_space<smem>>
    %293 = vector.broadcast %292 : f32 to vector<2x48xf32>
    %294 = arith.mulf %293, %72 : vector<2x48xf32>
    %295 = arith.addf %291, %294 : vector<2x48xf32>
    %c39 = arith.constant 39 : index
    %296 = memref.load %arg4[%c39] : memref<48xf32, #tpu.memory_space<smem>>
    %297 = vector.broadcast %296 : f32 to vector<2x48xf32>
    %298 = arith.mulf %297, %73 : vector<2x48xf32>
    %299 = arith.addf %295, %298 : vector<2x48xf32>
    %c40 = arith.constant 40 : index
    %300 = memref.load %arg4[%c40] : memref<48xf32, #tpu.memory_space<smem>>
    %301 = vector.broadcast %300 : f32 to vector<2x48xf32>
    %302 = arith.mulf %301, %74 : vector<2x48xf32>
    %303 = arith.addf %299, %302 : vector<2x48xf32>
    %c41 = arith.constant 41 : index
    %304 = memref.load %arg4[%c41] : memref<48xf32, #tpu.memory_space<smem>>
    %305 = vector.broadcast %304 : f32 to vector<2x48xf32>
    %306 = arith.mulf %305, %75 : vector<2x48xf32>
    %307 = arith.addf %303, %306 : vector<2x48xf32>
    %c42 = arith.constant 42 : index
    %308 = memref.load %arg4[%c42] : memref<48xf32, #tpu.memory_space<smem>>
    %309 = vector.broadcast %308 : f32 to vector<2x48xf32>
    %310 = arith.mulf %309, %76 : vector<2x48xf32>
    %311 = arith.addf %307, %310 : vector<2x48xf32>
    %c43 = arith.constant 43 : index
    %312 = memref.load %arg4[%c43] : memref<48xf32, #tpu.memory_space<smem>>
    %313 = vector.broadcast %312 : f32 to vector<2x48xf32>
    %314 = arith.mulf %313, %77 : vector<2x48xf32>
    %315 = arith.addf %311, %314 : vector<2x48xf32>
    %c44 = arith.constant 44 : index
    %316 = memref.load %arg4[%c44] : memref<48xf32, #tpu.memory_space<smem>>
    %317 = vector.broadcast %316 : f32 to vector<2x48xf32>
    %318 = arith.mulf %317, %78 : vector<2x48xf32>
    %319 = arith.addf %315, %318 : vector<2x48xf32>
    %c45 = arith.constant 45 : index
    %320 = memref.load %arg4[%c45] : memref<48xf32, #tpu.memory_space<smem>>
    %321 = vector.broadcast %320 : f32 to vector<2x48xf32>
    %322 = arith.mulf %321, %79 : vector<2x48xf32>
    %323 = arith.addf %319, %322 : vector<2x48xf32>
    %c46 = arith.constant 46 : index
    %324 = memref.load %arg4[%c46] : memref<48xf32, #tpu.memory_space<smem>>
    %325 = vector.broadcast %324 : f32 to vector<2x48xf32>
    %326 = arith.mulf %325, %80 : vector<2x48xf32>
    %327 = arith.addf %323, %326 : vector<2x48xf32>
    %c47 = arith.constant 47 : index
    %328 = memref.load %arg4[%c47] : memref<48xf32, #tpu.memory_space<smem>>
    %329 = vector.broadcast %328 : f32 to vector<2x48xf32>
    %330 = arith.mulf %329, %81 : vector<2x48xf32>
    %331 = arith.addf %327, %330 : vector<2x48xf32>
    %332 = vector.extract_strided_slice %331 {offsets = [0, 0], sizes = [2, 45], strides = [1, 1]} : vector<2x48xf32> to vector<2x45xf32>
    %333 = vector.extract_strided_slice %331 {offsets = [0, 1], sizes = [2, 45], strides = [1, 1]} : vector<2x48xf32> to vector<2x45xf32>
    %334 = arith.maximumf %332, %333 : vector<2x45xf32>
    %335 = vector.extract_strided_slice %331 {offsets = [0, 2], sizes = [2, 45], strides = [1, 1]} : vector<2x48xf32> to vector<2x45xf32>
    %336 = vector.extract_strided_slice %331 {offsets = [0, 3], sizes = [2, 45], strides = [1, 1]} : vector<2x48xf32> to vector<2x45xf32>
    %337 = arith.maximumf %335, %336 : vector<2x45xf32>
    %338 = arith.maximumf %334, %337 : vector<2x45xf32>
    %339 = vector.broadcast %82 : vector<1x45xf32> to vector<2x45xf32>
    %340 = arith.mulf %338, %339 : vector<2x45xf32>
    %cst_39 = arith.constant dense<0.000000e+00> : vector<2xf32>
    %341 = vector.multi_reduction <add>, %340, %cst_39 [1] : vector<2x45xf32> to vector<2xf32>
    %342 = vector.broadcast %83 : f32 to vector<2xf32>
    %343 = arith.addf %341, %342 : vector<2xf32>
    %344 = arith.negf %343 : vector<2xf32>
    %345 = math.exp %344 : vector<2xf32>
    %cst_40 = arith.constant 1.000000e+00 : f32
    %346 = vector.broadcast %cst_40 : f32 to vector<2xf32>
    %347 = arith.addf %346, %345 : vector<2xf32>
    %348 = arith.divf %346, %347 : vector<2xf32>
    %c3_41 = arith.constant 3 : index
    %c0_42 = arith.constant 0 : index
    %349 = vector.load %arg7[%c3_41, %c0_42] : memref<4x2xf32, #tpu.memory_space<vmem>>, vector<1x2xf32>
    %350 = vector.shape_cast %349 : vector<1x2xf32> to vector<2xf32>
    %351 = vector.shape_cast %348 : vector<2xf32> to vector<1x2xf32>
    tpu.vector_store %arg7[%c3_41, %c0_42], %351 {strides = array<i32>} : memref<4x2xf32, #tpu.memory_space<vmem>>, vector<1x2xf32>,
    return
  }
  func.func @transform_0(%arg0: i32) -> (i32, i32) {
    %c0_i32 = arith.constant 0 : i32
    %c0_i32_0 = arith.constant 0 : i32
    return %arg0, %c0_i32 : i32, i32
  }
  func.func @transform_1(%arg0: i32) -> (i32, i32) {
    %c0_i32 = arith.constant 0 : i32
    %c0_i32_0 = arith.constant 0 : i32
    %c0_i32_1 = arith.constant 0 : i32
    return %c0_i32, %c0_i32_0 : i32, i32
  }
  func.func @transform_2(%arg0: i32) -> i32 {
    %c0_i32 = arith.constant 0 : i32
    %c0_i32_0 = arith.constant 0 : i32
    return %c0_i32 : i32
  }
  func.func @transform_3(%arg0: i32) -> i32 {
    %c0_i32 = arith.constant 0 : i32
    %c0_i32_0 = arith.constant 0 : i32
    return %c0_i32 : i32
  }
  func.func @transform_4(%arg0: i32) -> (i32, i32) {
    %c0_i32 = arith.constant 0 : i32
    %c0_i32_0 = arith.constant 0 : i32
    %c0_i32_1 = arith.constant 0 : i32
    return %c0_i32, %c0_i32_0 : i32, i32
  }
  func.func @transform_5(%arg0: i32) -> i32 {
    %c0_i32 = arith.constant 0 : i32
    %c0_i32_0 = arith.constant 0 : i32
    return %c0_i32 : i32
  }
  func.func @transform_6(%arg0: i32) -> (i32, i32) {
    %c0_i32 = arith.constant 0 : i32
    %c0_i32_0 = arith.constant 0 : i32
    return %c0_i32, %arg0 : i32, i32
  }
}

</mosaic_0001>

<llo_original>
// kernel: tpu_custom_call.1
$region0: #{tpu_custom_call.1}
  #allocation0 [shape = 'u32[]', space=smem, size = 0x4, offset = 0x4, fixed_abs, tag = 'smem constant byte address 0x4 - core index']
  #allocation1 [shape = 'u32[144,128]{1,0:T(1,128)}', space=vmem, size = 0x12000, scoped, tag = 'internal scratch']
  #allocation2 [shape = 'f32[1]{0:T(128)S(6)}', space=smem, size = 0x200, scoped, tag = 'scoped memory for tpu_custom_call.1']
  %s0 = inlined_call_operand.vmem [shape: f32[2,6500], index: 0, kind: input, shape index: {}]
  %s1 = inlined_call_operand.vmem [shape: f32[6500,52], index: 1, kind: input, shape index: {}]
  %s2 = inlined_call_operand.vmem [shape: f32[12], index: 2, kind: input, shape index: {}]
  %s3 = inlined_call_operand.vmem [shape: f32[48], index: 3, kind: input, shape index: {}]
  %s4 = inlined_call_operand.vmem [shape: f32[1,45], index: 4, kind: input, shape index: {}]
  %s5 = inlined_call_operand.<no memory space> [shape: f32[1], index: 5, kind: input, shape index: {}]
  %s6 = inlined_call_operand.vmem [shape: f32[4,2], index: 6, kind: output, shape index: {}]
  %s7 = sld [smem:[#allocation0]]
  $region42: #{tpu_custom_call.1} parent=0
    _
  %s9 = ssub.s32 1, %s7
  %s10 = scalar_select 0, %s9, %s7
  %11 = sst [smem:[#allocation2]] %s5
  $region1: #{tpu_custom_call.1} parent=0
    #allocation3 [shape = 'u8[512]{0}', space=smem, size = 0x200, scoped, tag = 'input window, operand 2, single buffered']
    #allocation4 [shape = 's32[1]{0}', space=sflag, size = 0x4, scoped, tag = 'scoped memory for tpu_custom_call.1']
    #allocation5 [shape = 'u8[512]{0}', space=smem, size = 0x200, scoped, tag = 'input window, operand 3, single buffered']
    #allocation6 [shape = 's32[1]{0}', space=sflag, size = 0x4, scoped, tag = 'scoped memory for tpu_custom_call.1']
    %12 = vsyncpa [#allocation4], 0
    %13 = vsyncpa [#allocation6], 0
    // Predicated region
    $region2: #{tpu_custom_call.1} parent=1 // pred_check
      _
    $region3: #{tpu_custom_call.1} parent=1 // pred_check_branch
      %15 = sbr.rel (0) target = $region5
    $region4: #{tpu_custom_call.1} parent=1 // pred_region
      _
    $region5: #{tpu_custom_call.1} parent=1 // pred_fallthru
      _
    // Predicated region
    $region6: #{tpu_custom_call.1} parent=1 // pred_check
      _
    $region7: #{tpu_custom_call.1} parent=1 // pred_check_branch
      %17 = sbr.rel (0) target = $region9
    $region8: #{tpu_custom_call.1} parent=1 // pred_region
      _
    $region9: #{tpu_custom_call.1} parent=1 // pred_fallthru
      _
    // Predicated region
    $region10: #{tpu_custom_call.1} parent=1 // pred_check
      _
    $region11: #{tpu_custom_call.1} parent=1 // pred_check_branch
      %19 = sbr.rel (0) target = $region13
    $region12: #{tpu_custom_call.1} parent=1 // pred_region
      %s21 = ssub.s32 16, 16
      %22 = vsyncadd [#allocation4], %s21
      %s24 = sshll.u32 %s2, 4
      %s25 = int_to_ptr.vmem [resolvable:$true] %s24
      %27 = dma.vmem_to_smem %s25, 16, [#allocation3], [#allocation4]
    $region13: #{tpu_custom_call.1} parent=1 // pred_fallthru
      _
    // Predicated region
    $region14: #{tpu_custom_call.1} parent=1 // pred_check
      _
    $region15: #{tpu_custom_call.1} parent=1 // pred_check_branch
      %29 = sbr.rel (0) target = $region17
    $region16: #{tpu_custom_call.1} parent=1 // pred_region
      %s31 = ssub.s32 16, 16
      %32 = vsyncadd [#allocation6], %s31
      %s34 = sshll.u32 %s3, 4
      %s35 = int_to_ptr.vmem [resolvable:$true] %s34
      %37 = dma.vmem_to_smem %s35, 16, [#allocation5], [#allocation6]
    $region17: #{tpu_custom_call.1} parent=1 // pred_fallthru
      _
    // Predicated region
    $region18: #{tpu_custom_call.1} parent=1 // pred_check
      _
    $region19: #{tpu_custom_call.1} parent=1 // pred_check_branch
      %39 = sbr.rel (0) target = $region21
    $region20: #{tpu_custom_call.1} parent=1 // pred_region
      _
    $region21: #{tpu_custom_call.1} parent=1 // pred_fallthru
      _
    // Predicated region
    $region22: #{tpu_custom_call.1} parent=1 // pred_check
      _
    $region23: #{tpu_custom_call.1} parent=1 // pred_check_branch
      %41 = sbr.rel (0) target = $region25
    $region24: #{tpu_custom_call.1} parent=1 // pred_region
      _
    $region25: #{tpu_custom_call.1} parent=1 // pred_fallthru
      _
    // Predicated region
    $region26: #{tpu_custom_call.1} parent=1 // pred_check
      _
    $region27: #{tpu_custom_call.1} parent=1 // pred_check_branch
      %43 = sbr.rel (0) target = $region29
    $region28: #{tpu_custom_call.1} parent=1 // pred_region
      %44 = dma.done [#allocation4], 16
    $region29: #{tpu_custom_call.1} parent=1 // pred_fallthru
      _
    // Predicated region
    $region30: #{tpu_custom_call.1} parent=1 // pred_check
      _
    $region31: #{tpu_custom_call.1} parent=1 // pred_check_branch
      %46 = sbr.rel (0) target = $region33
    $region32: #{tpu_custom_call.1} parent=1 // pred_region
      %47 = dma.done [#allocation6], 16
    $region33: #{tpu_custom_call.1} parent=1 // pred_fallthru
      _
    %48 = sfence
    %v49 = vld [vmem:[%s0] sm:$0xff]
    %v50 = vld [vmem:[%s0 + $0x8] sm:$0xff]
    %v51 = vld [vmem:[%s0 + $0x10] sm:$0xff]
    %v52 = vld [vmem:[%s0 + $0x18] sm:$0xff]
    %v53 = vld [vmem:[%s0 + $0x20] sm:$0xff]
    %v54 = vld [vmem:[%s0 + $0x28] sm:$0xff]
    %v55 = vld [vmem:[%s0 + $0x30] sm:$0xff]
    %v56 = vld [vmem:[%s0 + $0x38] sm:$0xff]
    %v57 = vld [vmem:[%s0 + $0x40] sm:$0xff]
    %v58 = vld [vmem:[%s0 + $0x48] sm:$0xff]
    %v59 = vld [vmem:[%s0 + $0x50] sm:$0xff]
    %v60 = vld [vmem:[%s0 + $0x58] sm:$0xff]
    %v61 = vld [vmem:[%s0 + $0x60] sm:$0x3f]
    %v62 = vld [vmem:[%s1] sm:$0xff]
    %v63 = vld [vmem:[%s1 + $0x8] sm:$0xff]
    %v64 = vld [vmem:[%s1 + $0x10] sm:$0xff]
    %v65 = vld [vmem:[%s1 + $0x18] sm:$0xff]
    %v66 = vld [vmem:[%s1 + $0x20] sm:$0xff]
    %v67 = vld [vmem:[%s1 + $0x28] sm:$0xff]
    %v68 = vld [vmem:[%s1 + $0x30] sm:$0xff]
    %v69 = vld [vmem:[%s1 + $0x38] sm:$0xff]
    %v70 = vld [vmem:[%s1 + $0x40] sm:$0xff]
    %v71 = vld [vmem:[%s1 + $0x48] sm:$0xff]
    %v72 = vld [vmem:[%s1 + $0x50] sm:$0xff]
    %v73 = vld [vmem:[%s1 + $0x58] sm:$0xff]
    %v74 = vld [vmem:[%s1 + $0x60] sm:$0xff]
    %v75 = vld [vmem:[%s1 + $0x68] sm:$0xff]
    %v76 = vld [vmem:[%s1 + $0x70] sm:$0xff]
    %v77 = vld [vmem:[%s1 + $0x78] sm:$0xff]
    %v78 = vld [vmem:[%s1 + $0x80] sm:$0xff]
    %v79 = vld [vmem:[%s1 + $0x88] sm:$0xff]
    %v80 = vld [vmem:[%s1 + $0x90] sm:$0xff]
    %v81 = vld [vmem:[%s1 + $0x98] sm:$0xff]
    %v82 = vld [vmem:[%s1 + $0xa0] sm:$0xff]
    %v83 = vld [vmem:[%s1 + $0xa8] sm:$0xff]
    %v84 = vld [vmem:[%s1 + $0xb0] sm:$0xff]
    %v85 = vld [vmem:[%s1 + $0xb8] sm:$0xff]
    %v86 = vld [vmem:[%s1 + $0xc0] sm:$0xff]
    %v87 = vld [vmem:[%s1 + $0xc8] sm:$0xff]
    %v88 = vld [vmem:[%s1 + $0xd0] sm:$0xff]
    %v89 = vld [vmem:[%s1 + $0xd8] sm:$0xff]
    %v90 = vld [vmem:[%s1 + $0xe0] sm:$0xff]
    %v91 = vld [vmem:[%s1 + $0xe8] sm:$0xff]
    %v92 = vld [vmem:[%s1 + $0xf0] sm:$0xff]
    %v93 = vld [vmem:[%s1 + $0xf8] sm:$0xff]
    %v94 = vld [vmem:[%s1 + $0x100] sm:$0xff]
    %v95 = vld [vmem:[%s1 + $0x108] sm:$0xff]
    %v96 = vld [vmem:[%s1 + $0x110] sm:$0xff]
    %v97 = vld [vmem:[%s1 + $0x118] sm:$0xff]
    %v98 = vld [vmem:[%s1 + $0x120] sm:$0xff]
    %v99 = vld [vmem:[%s1 + $0x128] sm:$0xff]
    %v100 = vld [vmem:[%s1 + $0x130] sm:$0xff]
    %v101 = vld [vmem:[%s1 + $0x138] sm:$0xff]
    %v102 = vld [vmem:[%s1 + $0x140] sm:$0xff]
    %v103 = vld [vmem:[%s1 + $0x148] sm:$0xff]
    %v104 = vld [vmem:[%s1 + $0x150] sm:$0xff]
    %v105 = vld [vmem:[%s1 + $0x158] sm:$0xff]
    %v106 = vld [vmem:[%s1 + $0x160] sm:$0xff]
    %v107 = vld [vmem:[%s1 + $0x168] sm:$0xff]
    %v108 = vld [vmem:[%s1 + $0x170] sm:$0xff]
    %v109 = vld [vmem:[%s1 + $0x178] sm:$0xff]
    %v110 = vld [vmem:[%s1 + $0x180] sm:$0xff]
    %v111 = vld [vmem:[%s1 + $0x188] sm:$0xff]
    %v112 = vld [vmem:[%s1 + $0x190] sm:$0xff]
    %v113 = vld [vmem:[%s1 + $0x198] sm:$0xff]
    %v114 = vld [vmem:[%s1 + $0x1a0] sm:$0xff]
    %v115 = vld [vmem:[%s1 + $0x1a8] sm:$0xff]
    %v116 = vld [vmem:[%s1 + $0x1b0] sm:$0xff]
    %v117 = vld [vmem:[%s1 + $0x1b8] sm:$0xff]
    %v118 = vld [vmem:[%s1 + $0x1c0] sm:$0xff]
    %v119 = vld [vmem:[%s1 + $0x1c8] sm:$0xff]
    %v120 = vld [vmem:[%s1 + $0x1d0] sm:$0xff]
    %v121 = vld [vmem:[%s1 + $0x1d8] sm:$0xff]
    %v122 = vld [vmem:[%s1 + $0x1e0] sm:$0xff]
    %v123 = vld [vmem:[%s1 + $0x1e8] sm:$0xff]
    %v124 = vld [vmem:[%s1 + $0x1f0] sm:$0xff]
    %v125 = vld [vmem:[%s1 + $0x1f8] sm:$0xff]
    %v126 = vld [vmem:[%s1 + $0x200] sm:$0xff]
    %v127 = vld [vmem:[%s1 + $0x208] sm:$0xff]
    %v128 = vld [vmem:[%s1 + $0x210] sm:$0xff]
    %v129 = vld [vmem:[%s1 + $0x218] sm:$0xff]
    %v130 = vld [vmem:[%s1 + $0x220] sm:$0xff]
    %v131 = vld [vmem:[%s1 + $0x228] sm:$0xff]
    %v132 = vld [vmem:[%s1 + $0x230] sm:$0xff]
    %v133 = vld [vmem:[%s1 + $0x238] sm:$0xff]
    %v134 = vld [vmem:[%s1 + $0x240] sm:$0xff]
    %v135 = vld [vmem:[%s1 + $0x248] sm:$0xff]
    %v136 = vld [vmem:[%s1 + $0x250] sm:$0xff]
    %v137 = vld [vmem:[%s1 + $0x258] sm:$0xff]
    %v138 = vld [vmem:[%s1 + $0x260] sm:$0xff]
    %v139 = vld [vmem:[%s1 + $0x268] sm:$0xff]
    %v140 = vld [vmem:[%s1 + $0x270] sm:$0xff]
    %v141 = vld [vmem:[%s1 + $0x278] sm:$0xff]
    %v142 = vld [vmem:[%s1 + $0x280] sm:$0xff]
    %v143 = vld [vmem:[%s1 + $0x288] sm:$0xff]
    %v144 = vld [vmem:[%s1 + $0x290] sm:$0xff]
    %v145 = vld [vmem:[%s1 + $0x298] sm:$0xff]
    %v146 = vld [vmem:[%s1 + $0x2a0] sm:$0xff]
    %v147 = vld [vmem:[%s1 + $0x2a8] sm:$0xff]
    %v148 = vld [vmem:[%s1 + $0x2b0] sm:$0xff]
    %v149 = vld [vmem:[%s1 + $0x2b8] sm:$0xff]
    %v150 = vld [vmem:[%s1 + $0x2c0] sm:$0xff]
    %v151 = vld [vmem:[%s1 + $0x2c8] sm:$0xff]
    %v152 = vld [vmem:[%s1 + $0x2d0] sm:$0xff]
    %v153 = vld [vmem:[%s1 + $0x2d8] sm:$0xff]
    %v154 = vld [vmem:[%s1 + $0x2e0] sm:$0xff]
    %v155 = vld [vmem:[%s1 + $0x2e8] sm:$0xff]
    %v156 = vld [vmem:[%s1 + $0x2f0] sm:$0xff]
    %v157 = vld [vmem:[%s1 + $0x2f8] sm:$0xff]
    %v158 = vld [vmem:[%s1 + $0x300] sm:$0xff]
    %v159 = vld [vmem:[%s1 + $0x308] sm:$0xff]
    %v160 = vld [vmem:[%s1 + $0x310] sm:$0xff]
    %v161 = vld [vmem:[%s1 + $0x318] sm:$0xff]
    %v162 = vld [vmem:[%s1 + $0x320] sm:$0xff]
    %v163 = vld [vmem:[%s1 + $0x328] sm:$0xff]
    %v164 = vld [vmem:[%s1 + $0x330] sm:$0xff]
    %v165 = vld [vmem:[%s1 + $0x338] sm:$0xff]
    %v166 = vld [vmem:[%s1 + $0x340] sm:$0xff]
    %v167 = vld [vmem:[%s1 + $0x348] sm:$0xff]
    %v168 = vld [vmem:[%s1 + $0x350] sm:$0xff]
    %v169 = vld [vmem:[%s1 + $0x358] sm:$0xff]
    %v170 = vld [vmem:[%s1 + $0x360] sm:$0xff]
    %v171 = vld [vmem:[%s1 + $0x368] sm:$0xff]
    %v172 = vld [vmem:[%s1 + $0x370] sm:$0xff]
    %v173 = vld [vmem:[%s1 + $0x378] sm:$0xff]
    %v174 = vld [vmem:[%s1 + $0x380] sm:$0xff]
    %v175 = vld [vmem:[%s1 + $0x388] sm:$0xff]
    %v176 = vld [vmem:[%s1 + $0x390] sm:$0xff]
    %v177 = vld [vmem:[%s1 + $0x398] sm:$0xff]
    %v178 = vld [vmem:[%s1 + $0x3a0] sm:$0xff]
    %v179 = vld [vmem:[%s1 + $0x3a8] sm:$0xff]
    %v180 = vld [vmem:[%s1 + $0x3b0] sm:$0xff]
    %v181 = vld [vmem:[%s1 + $0x3b8] sm:$0xff]
    %v182 = vld [vmem:[%s1 + $0x3c0] sm:$0xff]
    %v183 = vld [vmem:[%s1 + $0x3c8] sm:$0xff]
    %v184 = vld [vmem:[%s1 + $0x3d0] sm:$0xff]
    %v185 = vld [vmem:[%s1 + $0x3d8] sm:$0xff]
    %v186 = vld [vmem:[%s1 + $0x3e0] sm:$0xff]
    %v187 = vld [vmem:[%s1 + $0x3e8] sm:$0xff]
    %v188 = vld [vmem:[%s1 + $0x3f0] sm:$0xff]
    %v189 = vld [vmem:[%s1 + $0x3f8] sm:$0xff]
    %v190 = vld [vmem:[%s1 + $0x400] sm:$0xff]
    %v191 = vld [vmem:[%s1 + $0x408] sm:$0xff]
    %v192 = vld [vmem:[%s1 + $0x410] sm:$0xff]
    %v193 = vld [vmem:[%s1 + $0x418] sm:$0xff]
    %v194 = vld [vmem:[%s1 + $0x420] sm:$0xff]
    %v195 = vld [vmem:[%s1 + $0x428] sm:$0xff]
    %v196 = vld [vmem:[%s1 + $0x430] sm:$0xff]
    %v197 = vld [vmem:[%s1 + $0x438] sm:$0xff]
    %v198 = vld [vmem:[%s1 + $0x440] sm:$0xff]
    %v199 = vld [vmem:[%s1 + $0x448] sm:$0xff]
    %v200 = vld [vmem:[%s1 + $0x450] sm:$0xff]
    %v201 = vld [vmem:[%s1 + $0x458] sm:$0xff]
    %v202 = vld [vmem:[%s1 + $0x460] sm:$0xff]
    %v203 = vld [vmem:[%s1 + $0x468] sm:$0xff]
    %v204 = vld [vmem:[%s1 + $0x470] sm:$0xff]
    %v205 = vld [vmem:[%s1 + $0x478] sm:$0xff]
    %v206 = vld [vmem:[%s1 + $0x480] sm:$0xff]
    %v207 = vld [vmem:[%s1 + $0x488] sm:$0xff]
    %v208 = vld [vmem:[%s1 + $0x490] sm:$0xff]
    %v209 = vld [vmem:[%s1 + $0x498] sm:$0xff]
    %v210 = vld [vmem:[%s1 + $0x4a0] sm:$0xff]
    %v211 = vld [vmem:[%s1 + $0x4a8] sm:$0xff]
    %v212 = vld [vmem:[%s1 + $0x4b0] sm:$0xff]
    %v213 = vld [vmem:[%s1 + $0x4b8] sm:$0xff]
    %v214 = vld [vmem:[%s1 + $0x4c0] sm:$0xff]
    %v215 = vld [vmem:[%s1 + $0x4c8] sm:$0xff]
    %v216 = vld [vmem:[%s1 + $0x4d0] sm:$0xff]
    %v217 = vld [vmem:[%s1 + $0x4d8] sm:$0xff]
    %v218 = vld [vmem:[%s1 + $0x4e0] sm:$0xff]
    %v219 = vld [vmem:[%s1 + $0x4e8] sm:$0xff]
    %v220 = vld [vmem:[%s1 + $0x4f0] sm:$0xff]
    %v221 = vld [vmem:[%s1 + $0x4f8] sm:$0xff]
    %v222 = vld [vmem:[%s1 + $0x500] sm:$0xff]
    %v223 = vld [vmem:[%s1 + $0x508] sm:$0xff]
    %v224 = vld [vmem:[%s1 + $0x510] sm:$0xff]
    %v225 = vld [vmem:[%s1 + $0x518] sm:$0xff]
    %v226 = vld [vmem:[%s1 + $0x520] sm:$0xff]
    %v227 = vld [vmem:[%s1 + $0x528] sm:$0xff]
    %v228 = vld [vmem:[%s1 + $0x530] sm:$0xff]
    %v229 = vld [vmem:[%s1 + $0x538] sm:$0xff]
    %v230 = vld [vmem:[%s1 + $0x540] sm:$0xff]
    %v231 = vld [vmem:[%s1 + $0x548] sm:$0xff]
    %v232 = vld [vmem:[%s1 + $0x550] sm:$0xff]
    %v233 = vld [vmem:[%s1 + $0x558] sm:$0xff]
    %v234 = vld [vmem:[%s1 + $0x560] sm:$0xff]
    %v235 = vld [vmem:[%s1 + $0x568] sm:$0xff]
    %v236 = vld [vmem:[%s1 + $0x570] sm:$0xff]
    %v237 = vld [vmem:[%s1 + $0x578] sm:$0xff]
    %v238 = vld [vmem:[%s1 + $0x580] sm:$0xff]
    %v239 = vld [vmem:[%s1 + $0x588] sm:$0xff]
    %v240 = vld [vmem:[%s1 + $0x590] sm:$0xff]
    %v241 = vld [vmem:[%s1 + $0x598] sm:$0xff]
    %v242 = vld [vmem:[%s1 + $0x5a0] sm:$0xff]
    %v243 = vld [vmem:[%s1 + $0x5a8] sm:$0xff]
    %v244 = vld [vmem:[%s1 + $0x5b0] sm:$0xff]
    %v245 = vld [vmem:[%s1 + $0x5b8] sm:$0xff]
    %v246 = vld [vmem:[%s1 + $0x5c0] sm:$0xff]
    %v247 = vld [vmem:[%s1 + $0x5c8] sm:$0xff]
    %v248 = vld [vmem:[%s1 + $0x5d0] sm:$0xff]
    %v249 = vld [vmem:[%s1 + $0x5d8] sm:$0xff]
    %v250 = vld [vmem:[%s1 + $0x5e0] sm:$0xff]
    %v251 = vld [vmem:[%s1 + $0x5e8] sm:$0xff]
    %v252 = vld [vmem:[%s1 + $0x5f0] sm:$0xff]
    %v253 = vld [vmem:[%s1 + $0x5f8] sm:$0xff]
    %v254 = vld [vmem:[%s1 + $0x600] sm:$0xff]
    %v255 = vld [vmem:[%s1 + $0x608] sm:$0xff]
    %v256 = vld [vmem:[%s1 + $0x610] sm:$0xff]
    %v257 = vld [vmem:[%s1 + $0x618] sm:$0xff]
    %v258 = vld [vmem:[%s1 + $0x620] sm:$0xff]
    %v259 = vld [vmem:[%s1 + $0x628] sm:$0xff]
    %v260 = vld [vmem:[%s1 + $0x630] sm:$0xff]
    %v261 = vld [vmem:[%s1 + $0x638] sm:$0xff]
    %v262 = vld [vmem:[%s1 + $0x640] sm:$0xff]
    %v263 = vld [vmem:[%s1 + $0x648] sm:$0xff]
    %v264 = vld [vmem:[%s1 + $0x650] sm:$0xff]
    %v265 = vld [vmem:[%s1 + $0x658] sm:$0xff]
    %v266 = vld [vmem:[%s1 + $0x660] sm:$0xff]
    %v267 = vld [vmem:[%s1 + $0x668] sm:$0xff]
    %v268 = vld [vmem:[%s1 + $0x670] sm:$0xff]
    %v269 = vld [vmem:[%s1 + $0x678] sm:$0xff]
    %v270 = vld [vmem:[%s1 + $0x680] sm:$0xff]
    %v271 = vld [vmem:[%s1 + $0x688] sm:$0xff]
    %v272 = vld [vmem:[%s1 + $0x690] sm:$0xff]
    %v273 = vld [vmem:[%s1 + $0x698] sm:$0xff]
    %v274 = vld [vmem:[%s1 + $0x6a0] sm:$0xff]
    %v275 = vld [vmem:[%s1 + $0x6a8] sm:$0xff]
    %v276 = vld [vmem:[%s1 + $0x6b0] sm:$0xff]
    %v277 = vld [vmem:[%s1 + $0x6b8] sm:$0xff]
    %v278 = vld [vmem:[%s1 + $0x6c0] sm:$0xff]
    %v279 = vld [vmem:[%s1 + $0x6c8] sm:$0xff]
    %v280 = vld [vmem:[%s1 + $0x6d0] sm:$0xff]
    %v281 = vld [vmem:[%s1 + $0x6d8] sm:$0xff]
    %v282 = vld [vmem:[%s1 + $0x6e0] sm:$0xff]
    %v283 = vld [vmem:[%s1 + $0x6e8] sm:$0xff]
    %v284 = vld [vmem:[%s1 + $0x6f0] sm:$0xff]
    %v285 = vld [vmem:[%s1 + $0x6f8] sm:$0xff]
    %v286 = vld [vmem:[%s1 + $0x700] sm:$0xff]
    %v287 = vld [vmem:[%s1 + $0x708] sm:$0xff]
    %v288 = vld [vmem:[%s1 + $0x710] sm:$0xff]
    %v289 = vld [vmem:[%s1 + $0x718] sm:$0xff]
    %v290 = vld [vmem:[%s1 + $0x720] sm:$0xff]
    %v291 = vld [vmem:[%s1 + $0x728] sm:$0xff]
    %v292 = vld [vmem:[%s1 + $0x730] sm:$0xff]
    %v293 = vld [vmem:[%s1 + $0x738] sm:$0xff]
    %v294 = vld [vmem:[%s1 + $0x740] sm:$0xff]
    %v295 = vld [vmem:[%s1 + $0x748] sm:$0xff]
    %v296 = vld [vmem:[%s1 + $0x750] sm:$0xff]
    %v297 = vld [vmem:[%s1 + $0x758] sm:$0xff]
    %v298 = vld [vmem:[%s1 + $0x760] sm:$0xff]
    %v299 = vld [vmem:[%s1 + $0x768] sm:$0xff]
    %v300 = vld [vmem:[%s1 + $0x770] sm:$0xff]
    %v301 = vld [vmem:[%s1 + $0x778] sm:$0xff]
    %v302 = vld [vmem:[%s1 + $0x780] sm:$0xff]
    %v303 = vld [vmem:[%s1 + $0x788] sm:$0xff]
    %v304 = vld [vmem:[%s1 + $0x790] sm:$0xff]
    %v305 = vld [vmem:[%s1 + $0x798] sm:$0xff]
    %v306 = vld [vmem:[%s1 + $0x7a0] sm:$0xff]
    %v307 = vld [vmem:[%s1 + $0x7a8] sm:$0xff]
    %v308 = vld [vmem:[%s1 + $0x7b0] sm:$0xff]
    %v309 = vld [vmem:[%s1 + $0x7b8] sm:$0xff]
    %v310 = vld [vmem:[%s1 + $0x7c0] sm:$0xff]
    %v311 = vld [vmem:[%s1 + $0x7c8] sm:$0xff]
    %v312 = vld [vmem:[%s1 + $0x7d0] sm:$0xff]
    %v313 = vld [vmem:[%s1 + $0x7d8] sm:$0xff]
    %v314 = vld [vmem:[%s1 + $0x7e0] sm:$0xff]
    %v315 = vld [vmem:[%s1 + $0x7e8] sm:$0xff]
    %v316 = vld [vmem:[%s1 + $0x7f0] sm:$0xff]
    %v317 = vld [vmem:[%s1 + $0x7f8] sm:$0xff]
    %v318 = vld [vmem:[%s1 + $0x800] sm:$0xff]
    %v319 = vld [vmem:[%s1 + $0x808] sm:$0xff]
    %v320 = vld [vmem:[%s1 + $0x810] sm:$0xff]
    %v321 = vld [vmem:[%s1 + $0x818] sm:$0xff]
    %v322 = vld [vmem:[%s1 + $0x820] sm:$0xff]
    %v323 = vld [vmem:[%s1 + $0x828] sm:$0xff]
    %v324 = vld [vmem:[%s1 + $0x830] sm:$0xff]
    %v325 = vld [vmem:[%s1 + $0x838] sm:$0xff]
    %v326 = vld [vmem:[%s1 + $0x840] sm:$0xff]
    %v327 = vld [vmem:[%s1 + $0x848] sm:$0xff]
    %v328 = vld [vmem:[%s1 + $0x850] sm:$0xff]
    %v329 = vld [vmem:[%s1 + $0x858] sm:$0xff]
    %v330 = vld [vmem:[%s1 + $0x860] sm:$0xff]
    %v331 = vld [vmem:[%s1 + $0x868] sm:$0xff]
    %v332 = vld [vmem:[%s1 + $0x870] sm:$0xff]
    %v333 = vld [vmem:[%s1 + $0x878] sm:$0xff]
    %v334 = vld [vmem:[%s1 + $0x880] sm:$0xff]
    %v335 = vld [vmem:[%s1 + $0x888] sm:$0xff]
    %v336 = vld [vmem:[%s1 + $0x890] sm:$0xff]
    %v337 = vld [vmem:[%s1 + $0x898] sm:$0xff]
    %v338 = vld [vmem:[%s1 + $0x8a0] sm:$0xff]
    %v339 = vld [vmem:[%s1 + $0x8a8] sm:$0xff]
    %v340 = vld [vmem:[%s1 + $0x8b0] sm:$0xff]
    %v341 = vld [vmem:[%s1 + $0x8b8] sm:$0xff]
    %v342 = vld [vmem:[%s1 + $0x8c0] sm:$0xff]
    %v343 = vld [vmem:[%s1 + $0x8c8] sm:$0xff]
    %v344 = vld [vmem:[%s1 + $0x8d0] sm:$0xff]
    %v345 = vld [vmem:[%s1 + $0x8d8] sm:$0xff]
    %v346 = vld [vmem:[%s1 + $0x8e0] sm:$0xff]
    %v347 = vld [vmem:[%s1 + $0x8e8] sm:$0xff]
    %v348 = vld [vmem:[%s1 + $0x8f0] sm:$0xff]
    %v349 = vld [vmem:[%s1 + $0x8f8] sm:$0xff]
    %v350 = vld [vmem:[%s1 + $0x900] sm:$0xff]
    %v351 = vld [vmem:[%s1 + $0x908] sm:$0xff]
    %v352 = vld [vmem:[%s1 + $0x910] sm:$0xff]
    %v353 = vld [vmem:[%s1 + $0x918] sm:$0xff]
    %v354 = vld [vmem:[%s1 + $0x920] sm:$0xff]
    %v355 = vld [vmem:[%s1 + $0x928] sm:$0xff]
    %v356 = vld [vmem:[%s1 + $0x930] sm:$0xff]
    %v357 = vld [vmem:[%s1 + $0x938] sm:$0xff]
    %v358 = vld [vmem:[%s1 + $0x940] sm:$0xff]
    %v359 = vld [vmem:[%s1 + $0x948] sm:$0xff]
    %v360 = vld [vmem:[%s1 + $0x950] sm:$0xff]
    %v361 = vld [vmem:[%s1 + $0x958] sm:$0xff]
    %v362 = vld [vmem:[%s1 + $0x960] sm:$0xff]
    %v363 = vld [vmem:[%s1 + $0x968] sm:$0xff]
    %v364 = vld [vmem:[%s1 + $0x970] sm:$0xff]
    %v365 = vld [vmem:[%s1 + $0x978] sm:$0xff]
    %v366 = vld [vmem:[%s1 + $0x980] sm:$0xff]
    %v367 = vld [vmem:[%s1 + $0x988] sm:$0xff]
    %v368 = vld [vmem:[%s1 + $0x990] sm:$0xff]
    %v369 = vld [vmem:[%s1 + $0x998] sm:$0xff]
    %v370 = vld [vmem:[%s1 + $0x9a0] sm:$0xff]
    %v371 = vld [vmem:[%s1 + $0x9a8] sm:$0xff]
    %v372 = vld [vmem:[%s1 + $0x9b0] sm:$0xff]
    %v373 = vld [vmem:[%s1 + $0x9b8] sm:$0xff]
    %v374 = vld [vmem:[%s1 + $0x9c0] sm:$0xff]
    %v375 = vld [vmem:[%s1 + $0x9c8] sm:$0xff]
    %v376 = vld [vmem:[%s1 + $0x9d0] sm:$0xff]
    %v377 = vld [vmem:[%s1 + $0x9d8] sm:$0xff]
    %v378 = vld [vmem:[%s1 + $0x9e0] sm:$0xff]
    %v379 = vld [vmem:[%s1 + $0x9e8] sm:$0xff]
    %v380 = vld [vmem:[%s1 + $0x9f0] sm:$0xff]
    %v381 = vld [vmem:[%s1 + $0x9f8] sm:$0xff]
    %v382 = vld [vmem:[%s1 + $0xa00] sm:$0xff]
    %v383 = vld [vmem:[%s1 + $0xa08] sm:$0xff]
    %v384 = vld [vmem:[%s1 + $0xa10] sm:$0xff]
    %v385 = vld [vmem:[%s1 + $0xa18] sm:$0xff]
    %v386 = vld [vmem:[%s1 + $0xa20] sm:$0xff]
    %v387 = vld [vmem:[%s1 + $0xa28] sm:$0xff]
    %v388 = vld [vmem:[%s1 + $0xa30] sm:$0xff]
    %v389 = vld [vmem:[%s1 + $0xa38] sm:$0xff]
    %v390 = vld [vmem:[%s1 + $0xa40] sm:$0xff]
    %v391 = vld [vmem:[%s1 + $0xa48] sm:$0xff]
    %v392 = vld [vmem:[%s1 + $0xa50] sm:$0xff]
    %v393 = vld [vmem:[%s1 + $0xa58] sm:$0xff]
    %v394 = vld [vmem:[%s1 + $0xa60] sm:$0xff]
    %v395 = vld [vmem:[%s1 + $0xa68] sm:$0xff]
    %v396 = vld [vmem:[%s1 + $0xa70] sm:$0xff]
    %v397 = vld [vmem:[%s1 + $0xa78] sm:$0xff]
    %v398 = vld [vmem:[%s1 + $0xa80] sm:$0xff]
    %v399 = vld [vmem:[%s1 + $0xa88] sm:$0xff]
    %v400 = vld [vmem:[%s1 + $0xa90] sm:$0xff]
    %v401 = vld [vmem:[%s1 + $0xa98] sm:$0xff]
    %v402 = vld [vmem:[%s1 + $0xaa0] sm:$0xff]
    %v403 = vld [vmem:[%s1 + $0xaa8] sm:$0xff]
    %v404 = vld [vmem:[%s1 + $0xab0] sm:$0xff]
    %v405 = vld [vmem:[%s1 + $0xab8] sm:$0xff]
    %v406 = vld [vmem:[%s1 + $0xac0] sm:$0xff]
    %v407 = vld [vmem:[%s1 + $0xac8] sm:$0xff]
    %v408 = vld [vmem:[%s1 + $0xad0] sm:$0xff]
    %v409 = vld [vmem:[%s1 + $0xad8] sm:$0xff]
    %v410 = vld [vmem:[%s1 + $0xae0] sm:$0xff]
    %v411 = vld [vmem:[%s1 + $0xae8] sm:$0xff]
    %v412 = vld [vmem:[%s1 + $0xaf0] sm:$0xff]
    %v413 = vld [vmem:[%s1 + $0xaf8] sm:$0xff]
    %v414 = vld [vmem:[%s1 + $0xb00] sm:$0xff]
    %v415 = vld [vmem:[%s1 + $0xb08] sm:$0xff]
    %v416 = vld [vmem:[%s1 + $0xb10] sm:$0xff]
    %v417 = vld [vmem:[%s1 + $0xb18] sm:$0xff]
    %v418 = vld [vmem:[%s1 + $0xb20] sm:$0xff]
    %v419 = vld [vmem:[%s1 + $0xb28] sm:$0xff]
    %v420 = vld [vmem:[%s1 + $0xb30] sm:$0xff]
    %v421 = vld [vmem:[%s1 + $0xb38] sm:$0xff]
    %v422 = vld [vmem:[%s1 + $0xb40] sm:$0xff]
    %v423 = vld [vmem:[%s1 + $0xb48] sm:$0xff]
    %v424 = vld [vmem:[%s1 + $0xb50] sm:$0xff]
    %v425 = vld [vmem:[%s1 + $0xb58] sm:$0xff]
    %v426 = vld [vmem:[%s1 + $0xb60] sm:$0xff]
    %v427 = vld [vmem:[%s1 + $0xb68] sm:$0xff]
    %v428 = vld [vmem:[%s1 + $0xb70] sm:$0xff]
    %v429 = vld [vmem:[%s1 + $0xb78] sm:$0xff]
    %v430 = vld [vmem:[%s1 + $0xb80] sm:$0xff]
    %v431 = vld [vmem:[%s1 + $0xb88] sm:$0xff]
    %v432 = vld [vmem:[%s1 + $0xb90] sm:$0xff]
    %v433 = vld [vmem:[%s1 + $0xb98] sm:$0xff]
    %v434 = vld [vmem:[%s1 + $0xba0] sm:$0xff]
    %v435 = vld [vmem:[%s1 + $0xba8] sm:$0xff]
    %v436 = vld [vmem:[%s1 + $0xbb0] sm:$0xff]
    %v437 = vld [vmem:[%s1 + $0xbb8] sm:$0xff]
    %v438 = vld [vmem:[%s1 + $0xbc0] sm:$0xff]
    %v439 = vld [vmem:[%s1 + $0xbc8] sm:$0xff]
    %v440 = vld [vmem:[%s1 + $0xbd0] sm:$0xff]
    %v441 = vld [vmem:[%s1 + $0xbd8] sm:$0xff]
    %v442 = vld [vmem:[%s1 + $0xbe0] sm:$0xff]
    %v443 = vld [vmem:[%s1 + $0xbe8] sm:$0xff]
    %v444 = vld [vmem:[%s1 + $0xbf0] sm:$0xff]
    %v445 = vld [vmem:[%s1 + $0xbf8] sm:$0xff]
    %v446 = vld [vmem:[%s1 + $0xc00] sm:$0xff]
    %v447 = vld [vmem:[%s1 + $0xc08] sm:$0xff]
    %v448 = vld [vmem:[%s1 + $0xc10] sm:$0xff]
    %v449 = vld [vmem:[%s1 + $0xc18] sm:$0xff]
    %v450 = vld [vmem:[%s1 + $0xc20] sm:$0xff]
    %v451 = vld [vmem:[%s1 + $0xc28] sm:$0xff]
    %v452 = vld [vmem:[%s1 + $0xc30] sm:$0xff]
    %v453 = vld [vmem:[%s1 + $0xc38] sm:$0xff]
    %v454 = vld [vmem:[%s1 + $0xc40] sm:$0xff]
    %v455 = vld [vmem:[%s1 + $0xc48] sm:$0xff]
    %v456 = vld [vmem:[%s1 + $0xc50] sm:$0xff]
    %v457 = vld [vmem:[%s1 + $0xc58] sm:$0xff]
    %v458 = vld [vmem:[%s1 + $0xc60] sm:$0xff]
    %v459 = vld [vmem:[%s1 + $0xc68] sm:$0xff]
    %v460 = vld [vmem:[%s1 + $0xc70] sm:$0xff]
    %v461 = vld [vmem:[%s1 + $0xc78] sm:$0xff]
    %v462 = vld [vmem:[%s1 + $0xc80] sm:$0xff]
    %v463 = vld [vmem:[%s1 + $0xc88] sm:$0xff]
    %v464 = vld [vmem:[%s1 + $0xc90] sm:$0xff]
    %v465 = vld [vmem:[%s1 + $0xc98] sm:$0xff]
    %v466 = vld [vmem:[%s1 + $0xca0] sm:$0xff]
    %v467 = vld [vmem:[%s1 + $0xca8] sm:$0xff]
    %v468 = vld [vmem:[%s1 + $0xcb0] sm:$0xff]
    %v469 = vld [vmem:[%s1 + $0xcb8] sm:$0xff]
    %v470 = vld [vmem:[%s1 + $0xcc0] sm:$0xff]
    %v471 = vld [vmem:[%s1 + $0xcc8] sm:$0xff]
    %v472 = vld [vmem:[%s1 + $0xcd0] sm:$0xff]
    %v473 = vld [vmem:[%s1 + $0xcd8] sm:$0xff]
    %v474 = vld [vmem:[%s1 + $0xce0] sm:$0xff]
    %v475 = vld [vmem:[%s1 + $0xce8] sm:$0xff]
    %v476 = vld [vmem:[%s1 + $0xcf0] sm:$0xff]
    %v477 = vld [vmem:[%s1 + $0xcf8] sm:$0xff]
    %v478 = vld [vmem:[%s1 + $0xd00] sm:$0xff]
    %v479 = vld [vmem:[%s1 + $0xd08] sm:$0xff]
    %v480 = vld [vmem:[%s1 + $0xd10] sm:$0xff]
    %v481 = vld [vmem:[%s1 + $0xd18] sm:$0xff]
    %v482 = vld [vmem:[%s1 + $0xd20] sm:$0xff]
    %v483 = vld [vmem:[%s1 + $0xd28] sm:$0xff]
    %v484 = vld [vmem:[%s1 + $0xd30] sm:$0xff]
    %v485 = vld [vmem:[%s1 + $0xd38] sm:$0xff]
    %v486 = vld [vmem:[%s1 + $0xd40] sm:$0xff]
    %v487 = vld [vmem:[%s1 + $0xd48] sm:$0xff]
    %v488 = vld [vmem:[%s1 + $0xd50] sm:$0xff]
    %v489 = vld [vmem:[%s1 + $0xd58] sm:$0xff]
    %v490 = vld [vmem:[%s1 + $0xd60] sm:$0xff]
    %v491 = vld [vmem:[%s1 + $0xd68] sm:$0xff]
    %v492 = vld [vmem:[%s1 + $0xd70] sm:$0xff]
    %v493 = vld [vmem:[%s1 + $0xd78] sm:$0xff]
    %v494 = vld [vmem:[%s1 + $0xd80] sm:$0xff]
    %v495 = vld [vmem:[%s1 + $0xd88] sm:$0xff]
    %v496 = vld [vmem:[%s1 + $0xd90] sm:$0xff]
    %v497 = vld [vmem:[%s1 + $0xd98] sm:$0xff]
    %v498 = vld [vmem:[%s1 + $0xda0] sm:$0xff]
    %v499 = vld [vmem:[%s1 + $0xda8] sm:$0xff]
    %v500 = vld [vmem:[%s1 + $0xdb0] sm:$0xff]
    %v501 = vld [vmem:[%s1 + $0xdb8] sm:$0xff]
    %v502 = vld [vmem:[%s1 + $0xdc0] sm:$0xff]
    %v503 = vld [vmem:[%s1 + $0xdc8] sm:$0xff]
    %v504 = vld [vmem:[%s1 + $0xdd0] sm:$0xff]
    %v505 = vld [vmem:[%s1 + $0xdd8] sm:$0xff]
    %v506 = vld [vmem:[%s1 + $0xde0] sm:$0xff]
    %v507 = vld [vmem:[%s1 + $0xde8] sm:$0xff]
    %v508 = vld [vmem:[%s1 + $0xdf0] sm:$0xff]
    %v509 = vld [vmem:[%s1 + $0xdf8] sm:$0xff]
    %v510 = vld [vmem:[%s1 + $0xe00] sm:$0xff]
    %v511 = vld [vmem:[%s1 + $0xe08] sm:$0xff]
    %v512 = vld [vmem:[%s1 + $0xe10] sm:$0xff]
    %v513 = vld [vmem:[%s1 + $0xe18] sm:$0xff]
    %v514 = vld [vmem:[%s1 + $0xe20] sm:$0xff]
    %v515 = vld [vmem:[%s1 + $0xe28] sm:$0xff]
    %v516 = vld [vmem:[%s1 + $0xe30] sm:$0xff]
    %v517 = vld [vmem:[%s1 + $0xe38] sm:$0xff]
    %v518 = vld [vmem:[%s1 + $0xe40] sm:$0xff]
    %v519 = vld [vmem:[%s1 + $0xe48] sm:$0xff]
    %v520 = vld [vmem:[%s1 + $0xe50] sm:$0xff]
    %v521 = vld [vmem:[%s1 + $0xe58] sm:$0xff]
    %v522 = vld [vmem:[%s1 + $0xe60] sm:$0xff]
    %v523 = vld [vmem:[%s1 + $0xe68] sm:$0xff]
    %v524 = vld [vmem:[%s1 + $0xe70] sm:$0xff]
    %v525 = vld [vmem:[%s1 + $0xe78] sm:$0xff]
    %v526 = vld [vmem:[%s1 + $0xe80] sm:$0xff]
    %v527 = vld [vmem:[%s1 + $0xe88] sm:$0xff]
    %v528 = vld [vmem:[%s1 + $0xe90] sm:$0xff]
    %v529 = vld [vmem:[%s1 + $0xe98] sm:$0xff]
    %v530 = vld [vmem:[%s1 + $0xea0] sm:$0xff]
    %v531 = vld [vmem:[%s1 + $0xea8] sm:$0xff]
    %v532 = vld [vmem:[%s1 + $0xeb0] sm:$0xff]
    %v533 = vld [vmem:[%s1 + $0xeb8] sm:$0xff]
    %v534 = vld [vmem:[%s1 + $0xec0] sm:$0xff]
    %v535 = vld [vmem:[%s1 + $0xec8] sm:$0xff]
    %v536 = vld [vmem:[%s1 + $0xed0] sm:$0xff]
    %v537 = vld [vmem:[%s1 + $0xed8] sm:$0xff]
    %v538 = vld [vmem:[%s1 + $0xee0] sm:$0xff]
    %v539 = vld [vmem:[%s1 + $0xee8] sm:$0xff]
    %v540 = vld [vmem:[%s1 + $0xef0] sm:$0xff]
    %v541 = vld [vmem:[%s1 + $0xef8] sm:$0xff]
    %v542 = vld [vmem:[%s1 + $0xf00] sm:$0xff]
    %v543 = vld [vmem:[%s1 + $0xf08] sm:$0xff]
    %v544 = vld [vmem:[%s1 + $0xf10] sm:$0xff]
    %v545 = vld [vmem:[%s1 + $0xf18] sm:$0xff]
    %v546 = vld [vmem:[%s1 + $0xf20] sm:$0xff]
    %v547 = vld [vmem:[%s1 + $0xf28] sm:$0xff]
    %v548 = vld [vmem:[%s1 + $0xf30] sm:$0xff]
    %v549 = vld [vmem:[%s1 + $0xf38] sm:$0xff]
    %v550 = vld [vmem:[%s1 + $0xf40] sm:$0xff]
    %v551 = vld [vmem:[%s1 + $0xf48] sm:$0xff]
    %v552 = vld [vmem:[%s1 + $0xf50] sm:$0xff]
    %v553 = vld [vmem:[%s1 + $0xf58] sm:$0xff]
    %v554 = vld [vmem:[%s1 + $0xf60] sm:$0xff]
    %v555 = vld [vmem:[%s1 + $0xf68] sm:$0xff]
    %v556 = vld [vmem:[%s1 + $0xf70] sm:$0xff]
    %v557 = vld [vmem:[%s1 + $0xf78] sm:$0xff]
    %v558 = vld [vmem:[%s1 + $0xf80] sm:$0xff]
    %v559 = vld [vmem:[%s1 + $0xf88] sm:$0xff]
    %v560 = vld [vmem:[%s1 + $0xf90] sm:$0xff]
    %v561 = vld [vmem:[%s1 + $0xf98] sm:$0xff]
    %v562 = vld [vmem:[%s1 + $0xfa0] sm:$0xff]
    %v563 = vld [vmem:[%s1 + $0xfa8] sm:$0xff]
    %v564 = vld [vmem:[%s1 + $0xfb0] sm:$0xff]
    %v565 = vld [vmem:[%s1 + $0xfb8] sm:$0xff]
    %v566 = vld [vmem:[%s1 + $0xfc0] sm:$0xff]
    %v567 = vld [vmem:[%s1 + $0xfc8] sm:$0xff]
    %v568 = vld [vmem:[%s1 + $0xfd0] sm:$0xff]
    %v569 = vld [vmem:[%s1 + $0xfd8] sm:$0xff]
    %v570 = vld [vmem:[%s1 + $0xfe0] sm:$0xff]
    %v571 = vld [vmem:[%s1 + $0xfe8] sm:$0xff]
    %v572 = vld [vmem:[%s1 + $0xff0] sm:$0xff]
    %v573 = vld [vmem:[%s1 + $0xff8] sm:$0xff]
    %v574 = vld [vmem:[%s1 + $0x1000] sm:$0xff]
    %v575 = vld [vmem:[%s1 + $0x1008] sm:$0xff]
    %v576 = vld [vmem:[%s1 + $0x1010] sm:$0xff]
    %v577 = vld [vmem:[%s1 + $0x1018] sm:$0xff]
    %v578 = vld [vmem:[%s1 + $0x1020] sm:$0xff]
    %v579 = vld [vmem:[%s1 + $0x1028] sm:$0xff]
    %v580 = vld [vmem:[%s1 + $0x1030] sm:$0xff]
    %v581 = vld [vmem:[%s1 + $0x1038] sm:$0xff]
    %v582 = vld [vmem:[%s1 + $0x1040] sm:$0xff]
    %v583 = vld [vmem:[%s1 + $0x1048] sm:$0xff]
    %v584 = vld [vmem:[%s1 + $0x1050] sm:$0xff]
    %v585 = vld [vmem:[%s1 + $0x1058] sm:$0xff]
    %v586 = vld [vmem:[%s1 + $0x1060] sm:$0xff]
    %v587 = vld [vmem:[%s1 + $0x1068] sm:$0xff]
    %v588 = vld [vmem:[%s1 + $0x1070] sm:$0xff]
    %v589 = vld [vmem:[%s1 + $0x1078] sm:$0xff]
    %v590 = vld [vmem:[%s1 + $0x1080] sm:$0xff]
    %v591 = vld [vmem:[%s1 + $0x1088] sm:$0xff]
    %v592 = vld [vmem:[%s1 + $0x1090] sm:$0xff]
    %v593 = vld [vmem:[%s1 + $0x1098] sm:$0xff]
    %v594 = vld [vmem:[%s1 + $0x10a0] sm:$0xff]
    %v595 = vld [vmem:[%s1 + $0x10a8] sm:$0xff]
    %v596 = vld [vmem:[%s1 + $0x10b0] sm:$0xff]
    %v597 = vld [vmem:[%s1 + $0x10b8] sm:$0xff]
    %v598 = vld [vmem:[%s1 + $0x10c0] sm:$0xff]
    %v599 = vld [vmem:[%s1 + $0x10c8] sm:$0xff]
    %v600 = vld [vmem:[%s1 + $0x10d0] sm:$0xff]
    %v601 = vld [vmem:[%s1 + $0x10d8] sm:$0xff]
    %v602 = vld [vmem:[%s1 + $0x10e0] sm:$0xff]
    %v603 = vld [vmem:[%s1 + $0x10e8] sm:$0xff]
    %v604 = vld [vmem:[%s1 + $0x10f0] sm:$0xff]
    %v605 = vld [vmem:[%s1 + $0x10f8] sm:$0xff]
    %v606 = vld [vmem:[%s1 + $0x1100] sm:$0xff]
    %v607 = vld [vmem:[%s1 + $0x1108] sm:$0xff]
    %v608 = vld [vmem:[%s1 + $0x1110] sm:$0xff]
    %v609 = vld [vmem:[%s1 + $0x1118] sm:$0xff]
    %v610 = vld [vmem:[%s1 + $0x1120] sm:$0xff]
    %v611 = vld [vmem:[%s1 + $0x1128] sm:$0xff]
    %v612 = vld [vmem:[%s1 + $0x1130] sm:$0xff]
    %v613 = vld [vmem:[%s1 + $0x1138] sm:$0xff]
    %v614 = vld [vmem:[%s1 + $0x1140] sm:$0xff]
    %v615 = vld [vmem:[%s1 + $0x1148] sm:$0xff]
    %v616 = vld [vmem:[%s1 + $0x1150] sm:$0xff]
    %v617 = vld [vmem:[%s1 + $0x1158] sm:$0xff]
    %v618 = vld [vmem:[%s1 + $0x1160] sm:$0xff]
    %v619 = vld [vmem:[%s1 + $0x1168] sm:$0xff]
    %v620 = vld [vmem:[%s1 + $0x1170] sm:$0xff]
    %v621 = vld [vmem:[%s1 + $0x1178] sm:$0xff]
    %v622 = vld [vmem:[%s1 + $0x1180] sm:$0xff]
    %v623 = vld [vmem:[%s1 + $0x1188] sm:$0xff]
    %v624 = vld [vmem:[%s1 + $0x1190] sm:$0xff]
    %v625 = vld [vmem:[%s1 + $0x1198] sm:$0xff]
    %v626 = vld [vmem:[%s1 + $0x11a0] sm:$0xff]
    %v627 = vld [vmem:[%s1 + $0x11a8] sm:$0xff]
    %v628 = vld [vmem:[%s1 + $0x11b0] sm:$0xff]
    %v629 = vld [vmem:[%s1 + $0x11b8] sm:$0xff]
    %v630 = vld [vmem:[%s1 + $0x11c0] sm:$0xff]
    %v631 = vld [vmem:[%s1 + $0x11c8] sm:$0xff]
    %v632 = vld [vmem:[%s1 + $0x11d0] sm:$0xff]
    %v633 = vld [vmem:[%s1 + $0x11d8] sm:$0xff]
    %v634 = vld [vmem:[%s1 + $0x11e0] sm:$0xff]
    %v635 = vld [vmem:[%s1 + $0x11e8] sm:$0xff]
    %v636 = vld [vmem:[%s1 + $0x11f0] sm:$0xff]
    %v637 = vld [vmem:[%s1 + $0x11f8] sm:$0xff]
    %v638 = vld [vmem:[%s1 + $0x1200] sm:$0xff]
    %v639 = vld [vmem:[%s1 + $0x1208] sm:$0xff]
    %v640 = vld [vmem:[%s1 + $0x1210] sm:$0xff]
    %v641 = vld [vmem:[%s1 + $0x1218] sm:$0xff]
    %v642 = vld [vmem:[%s1 + $0x1220] sm:$0xff]
    %v643 = vld [vmem:[%s1 + $0x1228] sm:$0xff]
    %v644 = vld [vmem:[%s1 + $0x1230] sm:$0xff]
    %v645 = vld [vmem:[%s1 + $0x1238] sm:$0xff]
    %v646 = vld [vmem:[%s1 + $0x1240] sm:$0xff]
    %v647 = vld [vmem:[%s1 + $0x1248] sm:$0xff]
    %v648 = vld [vmem:[%s1 + $0x1250] sm:$0xff]
    %v649 = vld [vmem:[%s1 + $0x1258] sm:$0xff]
    %v650 = vld [vmem:[%s1 + $0x1260] sm:$0xff]
    %v651 = vld [vmem:[%s1 + $0x1268] sm:$0xff]
    %v652 = vld [vmem:[%s1 + $0x1270] sm:$0xff]
    %v653 = vld [vmem:[%s1 + $0x1278] sm:$0xff]
    %v654 = vld [vmem:[%s1 + $0x1280] sm:$0xff]
    %v655 = vld [vmem:[%s1 + $0x1288] sm:$0xff]
    %v656 = vld [vmem:[%s1 + $0x1290] sm:$0xff]
    %v657 = vld [vmem:[%s1 + $0x1298] sm:$0xff]
    %v658 = vld [vmem:[%s1 + $0x12a0] sm:$0xff]
    %v659 = vld [vmem:[%s1 + $0x12a8] sm:$0xff]
    %v660 = vld [vmem:[%s1 + $0x12b0] sm:$0xff]
    %v661 = vld [vmem:[%s1 + $0x12b8] sm:$0xff]
    %v662 = vld [vmem:[%s1 + $0x12c0] sm:$0xff]
    %v663 = vld [vmem:[%s1 + $0x12c8] sm:$0xff]
    %v664 = vld [vmem:[%s1 + $0x12d0] sm:$0xff]
    %v665 = vld [vmem:[%s1 + $0x12d8] sm:$0xff]
    %v666 = vld [vmem:[%s1 + $0x12e0] sm:$0xff]
    %v667 = vld [vmem:[%s1 + $0x12e8] sm:$0xff]
    %v668 = vld [vmem:[%s1 + $0x12f0] sm:$0xff]
    %v669 = vld [vmem:[%s1 + $0x12f8] sm:$0xff]
    %v670 = vld [vmem:[%s1 + $0x1300] sm:$0xff]
    %v671 = vld [vmem:[%s1 + $0x1308] sm:$0xff]
    %v672 = vld [vmem:[%s1 + $0x1310] sm:$0xff]
    %v673 = vld [vmem:[%s1 + $0x1318] sm:$0xff]
    %v674 = vld [vmem:[%s1 + $0x1320] sm:$0xff]
    %v675 = vld [vmem:[%s1 + $0x1328] sm:$0xff]
    %v676 = vld [vmem:[%s1 + $0x1330] sm:$0xff]
    %v677 = vld [vmem:[%s1 + $0x1338] sm:$0xff]
    %v678 = vld [vmem:[%s1 + $0x1340] sm:$0xff]
    %v679 = vld [vmem:[%s1 + $0x1348] sm:$0xff]
    %v680 = vld [vmem:[%s1 + $0x1350] sm:$0xff]
    %v681 = vld [vmem:[%s1 + $0x1358] sm:$0xff]
    %v682 = vld [vmem:[%s1 + $0x1360] sm:$0xff]
    %v683 = vld [vmem:[%s1 + $0x1368] sm:$0xff]
    %v684 = vld [vmem:[%s1 + $0x1370] sm:$0xff]
    %v685 = vld [vmem:[%s1 + $0x1378] sm:$0xff]
    %v686 = vld [vmem:[%s1 + $0x1380] sm:$0xff]
    %v687 = vld [vmem:[%s1 + $0x1388] sm:$0xff]
    %v688 = vld [vmem:[%s1 + $0x1390] sm:$0xff]
    %v689 = vld [vmem:[%s1 + $0x1398] sm:$0xff]
    %v690 = vld [vmem:[%s1 + $0x13a0] sm:$0xff]
    %v691 = vld [vmem:[%s1 + $0x13a8] sm:$0xff]
    %v692 = vld [vmem:[%s1 + $0x13b0] sm:$0xff]
    %v693 = vld [vmem:[%s1 + $0x13b8] sm:$0xff]
    %v694 = vld [vmem:[%s1 + $0x13c0] sm:$0xff]
    %v695 = vld [vmem:[%s1 + $0x13c8] sm:$0xff]
    %v696 = vld [vmem:[%s1 + $0x13d0] sm:$0xff]
    %v697 = vld [vmem:[%s1 + $0x13d8] sm:$0xff]
    %v698 = vld [vmem:[%s1 + $0x13e0] sm:$0xff]
    %v699 = vld [vmem:[%s1 + $0x13e8] sm:$0xff]
    %v700 = vld [vmem:[%s1 + $0x13f0] sm:$0xff]
    %v701 = vld [vmem:[%s1 + $0x13f8] sm:$0xff]
    %v702 = vld [vmem:[%s1 + $0x1400] sm:$0xff]
    %v703 = vld [vmem:[%s1 + $0x1408] sm:$0xff]
    %v704 = vld [vmem:[%s1 + $0x1410] sm:$0xff]
    %v705 = vld [vmem:[%s1 + $0x1418] sm:$0xff]
    %v706 = vld [vmem:[%s1 + $0x1420] sm:$0xff]
    %v707 = vld [vmem:[%s1 + $0x1428] sm:$0xff]
    %v708 = vld [vmem:[%s1 + $0x1430] sm:$0xff]
    %v709 = vld [vmem:[%s1 + $0x1438] sm:$0xff]
    %v710 = vld [vmem:[%s1 + $0x1440] sm:$0xff]
    %v711 = vld [vmem:[%s1 + $0x1448] sm:$0xff]
    %v712 = vld [vmem:[%s1 + $0x1450] sm:$0xff]
    %v713 = vld [vmem:[%s1 + $0x1458] sm:$0xff]
    %v714 = vld [vmem:[%s1 + $0x1460] sm:$0xff]
    %v715 = vld [vmem:[%s1 + $0x1468] sm:$0xff]
    %v716 = vld [vmem:[%s1 + $0x1470] sm:$0xff]
    %v717 = vld [vmem:[%s1 + $0x1478] sm:$0xff]
    %v718 = vld [vmem:[%s1 + $0x1480] sm:$0xff]
    %v719 = vld [vmem:[%s1 + $0x1488] sm:$0xff]
    %v720 = vld [vmem:[%s1 + $0x1490] sm:$0xff]
    %v721 = vld [vmem:[%s1 + $0x1498] sm:$0xff]
    %v722 = vld [vmem:[%s1 + $0x14a0] sm:$0xff]
    %v723 = vld [vmem:[%s1 + $0x14a8] sm:$0xff]
    %v724 = vld [vmem:[%s1 + $0x14b0] sm:$0xff]
    %v725 = vld [vmem:[%s1 + $0x14b8] sm:$0xff]
    %v726 = vld [vmem:[%s1 + $0x14c0] sm:$0xff]
    %v727 = vld [vmem:[%s1 + $0x14c8] sm:$0xff]
    %v728 = vld [vmem:[%s1 + $0x14d0] sm:$0xff]
    %v729 = vld [vmem:[%s1 + $0x14d8] sm:$0xff]
    %v730 = vld [vmem:[%s1 + $0x14e0] sm:$0xff]
    %v731 = vld [vmem:[%s1 + $0x14e8] sm:$0xff]
    %v732 = vld [vmem:[%s1 + $0x14f0] sm:$0xff]
    %v733 = vld [vmem:[%s1 + $0x14f8] sm:$0xff]
    %v734 = vld [vmem:[%s1 + $0x1500] sm:$0xff]
    %v735 = vld [vmem:[%s1 + $0x1508] sm:$0xff]
    %v736 = vld [vmem:[%s1 + $0x1510] sm:$0xff]
    %v737 = vld [vmem:[%s1 + $0x1518] sm:$0xff]
    %v738 = vld [vmem:[%s1 + $0x1520] sm:$0xff]
    %v739 = vld [vmem:[%s1 + $0x1528] sm:$0xff]
    %v740 = vld [vmem:[%s1 + $0x1530] sm:$0xff]
    %v741 = vld [vmem:[%s1 + $0x1538] sm:$0xff]
    %v742 = vld [vmem:[%s1 + $0x1540] sm:$0xff]
    %v743 = vld [vmem:[%s1 + $0x1548] sm:$0xff]
    %v744 = vld [vmem:[%s1 + $0x1550] sm:$0xff]
    %v745 = vld [vmem:[%s1 + $0x1558] sm:$0xff]
    %v746 = vld [vmem:[%s1 + $0x1560] sm:$0xff]
    %v747 = vld [vmem:[%s1 + $0x1568] sm:$0xff]
    %v748 = vld [vmem:[%s1 + $0x1570] sm:$0xff]
    %v749 = vld [vmem:[%s1 + $0x1578] sm:$0xff]
    %v750 = vld [vmem:[%s1 + $0x1580] sm:$0xff]
    %v751 = vld [vmem:[%s1 + $0x1588] sm:$0xff]
    %v752 = vld [vmem:[%s1 + $0x1590] sm:$0xff]
    %v753 = vld [vmem:[%s1 + $0x1598] sm:$0xff]
    %v754 = vld [vmem:[%s1 + $0x15a0] sm:$0xff]
    %v755 = vld [vmem:[%s1 + $0x15a8] sm:$0xff]
    %v756 = vld [vmem:[%s1 + $0x15b0] sm:$0xff]
    %v757 = vld [vmem:[%s1 + $0x15b8] sm:$0xff]
    %v758 = vld [vmem:[%s1 + $0x15c0] sm:$0xff]
    %v759 = vld [vmem:[%s1 + $0x15c8] sm:$0xff]
    %v760 = vld [vmem:[%s1 + $0x15d0] sm:$0xff]
    %v761 = vld [vmem:[%s1 + $0x15d8] sm:$0xff]
    %v762 = vld [vmem:[%s1 + $0x15e0] sm:$0xff]
    %v763 = vld [vmem:[%s1 + $0x15e8] sm:$0xff]
    %v764 = vld [vmem:[%s1 + $0x15f0] sm:$0xff]
    %v765 = vld [vmem:[%s1 + $0x15f8] sm:$0xff]
    %v766 = vld [vmem:[%s1 + $0x1600] sm:$0xff]
    %v767 = vld [vmem:[%s1 + $0x1608] sm:$0xff]
    %v768 = vld [vmem:[%s1 + $0x1610] sm:$0xff]
    %v769 = vld [vmem:[%s1 + $0x1618] sm:$0xff]
    %v770 = vld [vmem:[%s1 + $0x1620] sm:$0xff]
    %v771 = vld [vmem:[%s1 + $0x1628] sm:$0xff]
    %v772 = vld [vmem:[%s1 + $0x1630] sm:$0xff]
    %v773 = vld [vmem:[%s1 + $0x1638] sm:$0xff]
    %v774 = vld [vmem:[%s1 + $0x1640] sm:$0xff]
    %v775 = vld [vmem:[%s1 + $0x1648] sm:$0xff]
    %v776 = vld [vmem:[%s1 + $0x1650] sm:$0xff]
    %v777 = vld [vmem:[%s1 + $0x1658] sm:$0xff]
    %v778 = vld [vmem:[%s1 + $0x1660] sm:$0xff]
    %v779 = vld [vmem:[%s1 + $0x1668] sm:$0xff]
    %v780 = vld [vmem:[%s1 + $0x1670] sm:$0xff]
    %v781 = vld [vmem:[%s1 + $0x1678] sm:$0xff]
    %v782 = vld [vmem:[%s1 + $0x1680] sm:$0xff]
    %v783 = vld [vmem:[%s1 + $0x1688] sm:$0xff]
    %v784 = vld [vmem:[%s1 + $0x1690] sm:$0xff]
    %v785 = vld [vmem:[%s1 + $0x1698] sm:$0xff]
    %v786 = vld [vmem:[%s1 + $0x16a0] sm:$0xff]
    %v787 = vld [vmem:[%s1 + $0x16a8] sm:$0xff]
    %v788 = vld [vmem:[%s1 + $0x16b0] sm:$0xff]
    %v789 = vld [vmem:[%s1 + $0x16b8] sm:$0xff]
    %v790 = vld [vmem:[%s1 + $0x16c0] sm:$0xff]
    %v791 = vld [vmem:[%s1 + $0x16c8] sm:$0xff]
    %v792 = vld [vmem:[%s1 + $0x16d0] sm:$0xff]
    %v793 = vld [vmem:[%s1 + $0x16d8] sm:$0xff]
    %v794 = vld [vmem:[%s1 + $0x16e0] sm:$0xff]
    %v795 = vld [vmem:[%s1 + $0x16e8] sm:$0xff]
    %v796 = vld [vmem:[%s1 + $0x16f0] sm:$0xff]
    %v797 = vld [vmem:[%s1 + $0x16f8] sm:$0xff]
    %v798 = vld [vmem:[%s1 + $0x1700] sm:$0xff]
    %v799 = vld [vmem:[%s1 + $0x1708] sm:$0xff]
    %v800 = vld [vmem:[%s1 + $0x1710] sm:$0xff]
    %v801 = vld [vmem:[%s1 + $0x1718] sm:$0xff]
    %v802 = vld [vmem:[%s1 + $0x1720] sm:$0xff]
    %v803 = vld [vmem:[%s1 + $0x1728] sm:$0xff]
    %v804 = vld [vmem:[%s1 + $0x1730] sm:$0xff]
    %v805 = vld [vmem:[%s1 + $0x1738] sm:$0xff]
    %v806 = vld [vmem:[%s1 + $0x1740] sm:$0xff]
    %v807 = vld [vmem:[%s1 + $0x1748] sm:$0xff]
    %v808 = vld [vmem:[%s1 + $0x1750] sm:$0xff]
    %v809 = vld [vmem:[%s1 + $0x1758] sm:$0xff]
    %v810 = vld [vmem:[%s1 + $0x1760] sm:$0xff]
    %v811 = vld [vmem:[%s1 + $0x1768] sm:$0xff]
    %v812 = vld [vmem:[%s1 + $0x1770] sm:$0xff]
    %v813 = vld [vmem:[%s1 + $0x1778] sm:$0xff]
    %v814 = vld [vmem:[%s1 + $0x1780] sm:$0xff]
    %v815 = vld [vmem:[%s1 + $0x1788] sm:$0xff]
    %v816 = vld [vmem:[%s1 + $0x1790] sm:$0xff]
    %v817 = vld [vmem:[%s1 + $0x1798] sm:$0xff]
    %v818 = vld [vmem:[%s1 + $0x17a0] sm:$0xff]
    %v819 = vld [vmem:[%s1 + $0x17a8] sm:$0xff]
    %v820 = vld [vmem:[%s1 + $0x17b0] sm:$0xff]
    %v821 = vld [vmem:[%s1 + $0x17b8] sm:$0xff]
    %v822 = vld [vmem:[%s1 + $0x17c0] sm:$0xff]
    %v823 = vld [vmem:[%s1 + $0x17c8] sm:$0xff]
    %v824 = vld [vmem:[%s1 + $0x17d0] sm:$0xff]
    %v825 = vld [vmem:[%s1 + $0x17d8] sm:$0xff]
    %v826 = vld [vmem:[%s1 + $0x17e0] sm:$0xff]
    %v827 = vld [vmem:[%s1 + $0x17e8] sm:$0xff]
    %v828 = vld [vmem:[%s1 + $0x17f0] sm:$0xff]
    %v829 = vld [vmem:[%s1 + $0x17f8] sm:$0xff]
    %v830 = vld [vmem:[%s1 + $0x1800] sm:$0xff]
    %v831 = vld [vmem:[%s1 + $0x1808] sm:$0xff]
    %v832 = vld [vmem:[%s1 + $0x1810] sm:$0xff]
    %v833 = vld [vmem:[%s1 + $0x1818] sm:$0xff]
    %v834 = vld [vmem:[%s1 + $0x1820] sm:$0xff]
    %v835 = vld [vmem:[%s1 + $0x1828] sm:$0xff]
    %v836 = vld [vmem:[%s1 + $0x1830] sm:$0xff]
    %v837 = vld [vmem:[%s1 + $0x1838] sm:$0xff]
    %v838 = vld [vmem:[%s1 + $0x1840] sm:$0xff]
    %v839 = vld [vmem:[%s1 + $0x1848] sm:$0xff]
    %v840 = vld [vmem:[%s1 + $0x1850] sm:$0xff]
    %v841 = vld [vmem:[%s1 + $0x1858] sm:$0xff]
    %v842 = vld [vmem:[%s1 + $0x1860] sm:$0xff]
    %v843 = vld [vmem:[%s1 + $0x1868] sm:$0xff]
    %v844 = vld [vmem:[%s1 + $0x1870] sm:$0xff]
    %v845 = vld [vmem:[%s1 + $0x1878] sm:$0xff]
    %v846 = vld [vmem:[%s1 + $0x1880] sm:$0xff]
    %v847 = vld [vmem:[%s1 + $0x1888] sm:$0xff]
    %v848 = vld [vmem:[%s1 + $0x1890] sm:$0xff]
    %v849 = vld [vmem:[%s1 + $0x1898] sm:$0xff]
    %v850 = vld [vmem:[%s1 + $0x18a0] sm:$0xff]
    %v851 = vld [vmem:[%s1 + $0x18a8] sm:$0xff]
    %v852 = vld [vmem:[%s1 + $0x18b0] sm:$0xff]
    %v853 = vld [vmem:[%s1 + $0x18b8] sm:$0xff]
    %v854 = vld [vmem:[%s1 + $0x18c0] sm:$0xff]
    %v855 = vld [vmem:[%s1 + $0x18c8] sm:$0xff]
    %v856 = vld [vmem:[%s1 + $0x18d0] sm:$0xff]
    %v857 = vld [vmem:[%s1 + $0x18d8] sm:$0xff]
    %v858 = vld [vmem:[%s1 + $0x18e0] sm:$0xff]
    %v859 = vld [vmem:[%s1 + $0x18e8] sm:$0xff]
    %v860 = vld [vmem:[%s1 + $0x18f0] sm:$0xff]
    %v861 = vld [vmem:[%s1 + $0x18f8] sm:$0xff]
    %v862 = vld [vmem:[%s1 + $0x1900] sm:$0xff]
    %v863 = vld [vmem:[%s1 + $0x1908] sm:$0xff]
    %v864 = vld [vmem:[%s1 + $0x1910] sm:$0xff]
    %v865 = vld [vmem:[%s1 + $0x1918] sm:$0xff]
    %v866 = vld [vmem:[%s1 + $0x1920] sm:$0xff]
    %v867 = vld [vmem:[%s1 + $0x1928] sm:$0xff]
    %v868 = vld [vmem:[%s1 + $0x1930] sm:$0xff]
    %v869 = vld [vmem:[%s1 + $0x1938] sm:$0xff]
    %v870 = vld [vmem:[%s1 + $0x1940] sm:$0xff]
    %v871 = vld [vmem:[%s1 + $0x1948] sm:$0xff]
    %v872 = vld [vmem:[%s1 + $0x1950] sm:$0xff]
    %v873 = vld [vmem:[%s1 + $0x1958] sm:$0xff]
    %v874 = vld [vmem:[%s1 + $0x1960] sm:$0xf]
    %v888 = vcombine.high %v49, %v49
    %v890 = vunpack.c.l.s4 1983009808
    %v891 = vunpack.c.0.s8 %v890
    %v892 = vlaneseq
    %v893 = vshrl.u32 %v892, 7
    %v894 = vsub.s32 %v891, %v893
    %v895 = vrot.slane %v49, %v894
    %v897 = vunpack.c.l.s4 1983009808
    %v898 = vunpack.c.0.s8 %v897
    %v899 = vlaneseq
    %v900 = vshrl.u32 %v899, 7
    %v901 = vsub.s32 %v898, %v900
    %v902 = vrot.slane %v888, %v901
    %v903 = vcombine.high %v895, %v895
    %v904 = vcombine.high %v902, %v902
    %v905 = vcombine.high %v50, %v50
    %v907 = vunpack.c.l.s4 1983009808
    %v908 = vunpack.c.0.s8 %v907
    %v909 = vlaneseq
    %v910 = vshrl.u32 %v909, 7
    %v911 = vsub.s32 %v908, %v910
    %v912 = vrot.slane %v50, %v911
    %v914 = vunpack.c.l.s4 1983009808
    %v915 = vunpack.c.0.s8 %v914
    %v916 = vlaneseq
    %v917 = vshrl.u32 %v916, 7
    %v918 = vsub.s32 %v915, %v917
    %v919 = vrot.slane %v905, %v918
    %v920 = vcombine.high %v912, %v912
    %v921 = vcombine.high %v919, %v919
    %v922 = vcombine.high %v51, %v51
    %v924 = vunpack.c.l.s4 1983009808
    %v925 = vunpack.c.0.s8 %v924
    %v926 = vlaneseq
    %v927 = vshrl.u32 %v926, 7
    %v928 = vsub.s32 %v925, %v927
    %v929 = vrot.slane %v51, %v928
    %v931 = vunpack.c.l.s4 1983009808
    %v932 = vunpack.c.0.s8 %v931
    %v933 = vlaneseq
    %v934 = vshrl.u32 %v933, 7
    %v935 = vsub.s32 %v932, %v934
    %v936 = vrot.slane %v922, %v935
    %v937 = vcombine.high %v929, %v929
    %v938 = vcombine.high %v936, %v936
    %v939 = vcombine.high %v52, %v52
    %v941 = vunpack.c.l.s4 1983009808
    %v942 = vunpack.c.0.s8 %v941
    %v943 = vlaneseq
    %v944 = vshrl.u32 %v943, 7
    %v945 = vsub.s32 %v942, %v944
    %v946 = vrot.slane %v52, %v945
    %v948 = vunpack.c.l.s4 1983009808
    %v949 = vunpack.c.0.s8 %v948
    %v950 = vlaneseq
    %v951 = vshrl.u32 %v950, 7
    %v952 = vsub.s32 %v949, %v951
    %v953 = vrot.slane %v939, %v952
    %v954 = vcombine.high %v946, %v946
    %v955 = vcombine.high %v953, %v953
    %v956 = vcombine.high %v53, %v53
    %v958 = vunpack.c.l.s4 1983009808
    %v959 = vunpack.c.0.s8 %v958
    %v960 = vlaneseq
    %v961 = vshrl.u32 %v960, 7
    %v962 = vsub.s32 %v959, %v961
    %v963 = vrot.slane %v53, %v962
    %v965 = vunpack.c.l.s4 1983009808
    %v966 = vunpack.c.0.s8 %v965
    %v967 = vlaneseq
    %v968 = vshrl.u32 %v967, 7
    %v969 = vsub.s32 %v966, %v968
    %v970 = vrot.slane %v956, %v969
    %v971 = vcombine.high %v963, %v963
    %v972 = vcombine.high %v970, %v970
    %v973 = vcombine.high %v54, %v54
    %v975 = vunpack.c.l.s4 1983009808
    %v976 = vunpack.c.0.s8 %v975
    %v977 = vlaneseq
    %v978 = vshrl.u32 %v977, 7
    %v979 = vsub.s32 %v976, %v978
    %v980 = vrot.slane %v54, %v979
    %v982 = vunpack.c.l.s4 1983009808
    %v983 = vunpack.c.0.s8 %v982
    %v984 = vlaneseq
    %v985 = vshrl.u32 %v984, 7
    %v986 = vsub.s32 %v983, %v985
    %v987 = vrot.slane %v973, %v986
    %v988 = vcombine.high %v980, %v980
    %v989 = vcombine.high %v987, %v987
    %v990 = vcombine.high %v55, %v55
    %v992 = vunpack.c.l.s4 1983009808
    %v993 = vunpack.c.0.s8 %v992
    %v994 = vlaneseq
    %v995 = vshrl.u32 %v994, 7
    %v996 = vsub.s32 %v993, %v995
    %v997 = vrot.slane %v55, %v996
    %v999 = vunpack.c.l.s4 1983009808
    %v1000 = vunpack.c.0.s8 %v999
    %v1001 = vlaneseq
    %v1002 = vshrl.u32 %v1001, 7
    %v1003 = vsub.s32 %v1000, %v1002
    %v1004 = vrot.slane %v990, %v1003
    %v1005 = vcombine.high %v997, %v997
    %v1006 = vcombine.high %v1004, %v1004
    %v1007 = vcombine.high %v56, %v56
    %v1009 = vunpack.c.l.s4 1983009808
    %v1010 = vunpack.c.0.s8 %v1009
    %v1011 = vlaneseq
    %v1012 = vshrl.u32 %v1011, 7
    %v1013 = vsub.s32 %v1010, %v1012
    %v1014 = vrot.slane %v56, %v1013
    %v1016 = vunpack.c.l.s4 1983009808
    %v1017 = vunpack.c.0.s8 %v1016
    %v1018 = vlaneseq
    %v1019 = vshrl.u32 %v1018, 7
    %v1020 = vsub.s32 %v1017, %v1019
    %v1021 = vrot.slane %v1007, %v1020
    %v1022 = vcombine.high %v1014, %v1014
    %v1023 = vcombine.high %v1021, %v1021
    %v1024 = vcombine.high %v57, %v57
    %v1026 = vunpack.c.l.s4 1983009808
    %v1027 = vunpack.c.0.s8 %v1026
    %v1028 = vlaneseq
    %v1029 = vshrl.u32 %v1028, 7
    %v1030 = vsub.s32 %v1027, %v1029
    %v1031 = vrot.slane %v57, %v1030
    %v1033 = vunpack.c.l.s4 1983009808
    %v1034 = vunpack.c.0.s8 %v1033
    %v1035 = vlaneseq
    %v1036 = vshrl.u32 %v1035, 7
    %v1037 = vsub.s32 %v1034, %v1036
    %v1038 = vrot.slane %v1024, %v1037
    %v1039 = vcombine.high %v1031, %v1031
    %v1040 = vcombine.high %v1038, %v1038
    %v1041 = vcombine.high %v58, %v58
    %v1043 = vunpack.c.l.s4 1983009808
    %v1044 = vunpack.c.0.s8 %v1043
    %v1045 = vlaneseq
    %v1046 = vshrl.u32 %v1045, 7
    %v1047 = vsub.s32 %v1044, %v1046
    %v1048 = vrot.slane %v58, %v1047
    %v1050 = vunpack.c.l.s4 1983009808
    %v1051 = vunpack.c.0.s8 %v1050
    %v1052 = vlaneseq
    %v1053 = vshrl.u32 %v1052, 7
    %v1054 = vsub.s32 %v1051, %v1053
    %v1055 = vrot.slane %v1041, %v1054
    %v1056 = vcombine.high %v1048, %v1048
    %v1057 = vcombine.high %v1055, %v1055
    %v1058 = vcombine.high %v59, %v59
    %v1060 = vunpack.c.l.s4 1983009808
    %v1061 = vunpack.c.0.s8 %v1060
    %v1062 = vlaneseq
    %v1063 = vshrl.u32 %v1062, 7
    %v1064 = vsub.s32 %v1061, %v1063
    %v1065 = vrot.slane %v59, %v1064
    %v1067 = vunpack.c.l.s4 1983009808
    %v1068 = vunpack.c.0.s8 %v1067
    %v1069 = vlaneseq
    %v1070 = vshrl.u32 %v1069, 7
    %v1071 = vsub.s32 %v1068, %v1070
    %v1072 = vrot.slane %v1058, %v1071
    %v1073 = vcombine.high %v1065, %v1065
    %v1074 = vcombine.high %v1072, %v1072
    %v1075 = vcombine.high %v60, %v60
    %v1077 = vunpack.c.l.s4 1983009808
    %v1078 = vunpack.c.0.s8 %v1077
    %v1079 = vlaneseq
    %v1080 = vshrl.u32 %v1079, 7
    %v1081 = vsub.s32 %v1078, %v1080
    %v1082 = vrot.slane %v60, %v1081
    %v1084 = vunpack.c.l.s4 1983009808
    %v1085 = vunpack.c.0.s8 %v1084
    %v1086 = vlaneseq
    %v1087 = vshrl.u32 %v1086, 7
    %v1088 = vsub.s32 %v1085, %v1087
    %v1089 = vrot.slane %v1075, %v1088
    %v1090 = vcombine.high %v1082, %v1082
    %v1091 = vcombine.high %v1089, %v1089
    %v1092 = vcombine.high %v61, %v61
    %v1094 = vunpack.c.l.s4 1983009808
    %v1095 = vunpack.c.0.s8 %v1094
    %v1096 = vlaneseq
    %v1097 = vshrl.u32 %v1096, 7
    %v1098 = vsub.s32 %v1095, %v1097
    %v1099 = vrot.slane %v61, %v1098
    %v1101 = vunpack.c.l.s4 1983009808
    %v1102 = vunpack.c.0.s8 %v1101
    %v1103 = vlaneseq
    %v1104 = vshrl.u32 %v1103, 7
    %v1105 = vsub.s32 %v1102, %v1104
    %v1106 = vrot.slane %v1092, %v1105
    %v1107 = vcombine.high %v1099, %v1099
    %vm1158 = vcmask 818176
    %v1159 = vsel %vm1158, %v1106, 0
    %vm1161 = vcmask 1043456
    %v1163 = vsel %vm1161, %v874, 0
    %1165 = vmatprep.subr.mxu0 0.0
    %1166 = vmatpush1.msra.mxu0 %v62
    %1167 = vmatprep.subr.mxu0 0.0
    %1168 = vmatpush1.msra.mxu0 %v63
    %1169 = vmatprep.subr.mxu0 0.0
    %1170 = vmatpush1.msra.mxu0 %v64
    %1171 = vmatprep.subr.mxu0 0.0
    %1172 = vmatpush1.msra.mxu0 %v65
    %1173 = vmatprep.subr.mxu0 0.0
    %1174 = vmatpush1.msra.mxu0 %v66
    %1175 = vmatprep.subr.mxu0 0.0
    %1176 = vmatpush1.msra.mxu0 %v67
    %1177 = vmatprep.subr.mxu0 0.0
    %1178 = vmatpush1.msra.mxu0 %v68
    %1179 = vmatprep.subr.mxu0 0.0
    %1180 = vmatpush1.msra.mxu0 %v69
    %1181 = vmatprep.subr.mxu0 0.0
    %1182 = vmatpush1.msra.mxu0 %v70
    %1183 = vmatprep.subr.mxu0 0.0
    %1184 = vmatpush1.msra.mxu0 %v71
    %1185 = vmatprep.subr.mxu0 0.0
    %1186 = vmatpush1.msra.mxu0 %v72
    %1187 = vmatprep.subr.mxu0 0.0
    %1188 = vmatpush1.msra.mxu0 %v73
    %1189 = vmatprep.subr.mxu0 0.0
    %1190 = vmatpush1.msra.mxu0 %v74
    %1191 = vmatprep.subr.mxu0 0.0
    %1192 = vmatpush1.msra.mxu0 %v75
    %1193 = vmatprep.subr.mxu0 0.0
    %1194 = vmatpush1.msra.mxu0 %v76
    %1195 = vmatprep.subr.mxu0 0.0
    %1196 = vmatpush1.msra.mxu0 %v77
    %1197 = vmatprep.subr.mxu0 0.0
    %1198 = vmatpush1.msra.mxu0 %v78
    %1199 = vmatprep.subr.mxu0 0.0
    %1200 = vmatpush1.msra.mxu0 %v79
    %1201 = vmatprep.subr.mxu0 0.0
    %1202 = vmatpush1.msra.mxu0 %v80
    %1203 = vmatprep.subr.mxu0 0.0
    %1204 = vmatpush1.msra.mxu0 %v81
    %1205 = vmatprep.subr.mxu0 0.0
    %1206 = vmatpush1.msra.mxu0 %v82
    %1207 = vmatprep.subr.mxu0 0.0
    %1208 = vmatpush1.msra.mxu0 %v83
    %1209 = vmatprep.subr.mxu0 0.0
    %1210 = vmatpush1.msra.mxu0 %v84
    %1211 = vmatprep.subr.mxu0 0.0
    %1212 = vmatpush1.msra.mxu0 %v85
    %1213 = vmatprep.subr.mxu0 0.0
    %1214 = vmatpush1.msra.mxu0 %v86
    %1215 = vmatprep.subr.mxu0 0.0
    %1216 = vmatpush1.msra.mxu0 %v87
    %1217 = vmatprep.subr.mxu0 0.0
    %1218 = vmatpush1.msra.mxu0 %v88
    %1219 = vmatprep.subr.mxu0 0.0
    %1220 = vmatpush1.msra.mxu0 %v89
    %1221 = vmatprep.subr.mxu0 0.0
    %1222 = vmatpush1.msra.mxu0 %v90
    %1223 = vmatprep.subr.mxu0 0.0
    %1224 = vmatpush1.msra.mxu0 %v91
    %1225 = vmatprep.subr.mxu0 0.0
    %1226 = vmatpush1.msra.mxu0 %v92
    %1227 = vmatprep.subr.mxu0 0.0
    %1228 = vmatpush1.msra.mxu0 %v93
    %1229 = vmatprep.mubr.f32.mxu0 %v903
    %1230 = vmatmul.mubr.f32.gmra.mrb[0].mxu0 %v895
    %v1231 = vpop.f32.mrb[0].mxu0
    %v1232 = vadd.f32 0.0, %v1231
    %v1233 = vpop.f32.mrb[0].mxu0
    %1234 = vdwg.mxu0
    %1235 = vmatprep.subr.mxu0 0.0
    %1236 = vmatpush1.msra.mxu0 %v94
    %1237 = vmatprep.subr.mxu0 0.0
    %1238 = vmatpush1.msra.mxu0 %v95
    %1239 = vmatprep.subr.mxu0 0.0
    %1240 = vmatpush1.msra.mxu0 %v96
    %1241 = vmatprep.subr.mxu0 0.0
    %1242 = vmatpush1.msra.mxu0 %v97
    %1243 = vmatprep.subr.mxu0 0.0
    %1244 = vmatpush1.msra.mxu0 %v98
    %1245 = vmatprep.subr.mxu0 0.0
    %1246 = vmatpush1.msra.mxu0 %v99
    %1247 = vmatprep.subr.mxu0 0.0
    %1248 = vmatpush1.msra.mxu0 %v100
    %1249 = vmatprep.subr.mxu0 0.0
    %1250 = vmatpush1.msra.mxu0 %v101
    %1251 = vmatprep.subr.mxu0 0.0
    %1252 = vmatpush1.msra.mxu0 %v102
    %1253 = vmatprep.subr.mxu0 0.0
    %1254 = vmatpush1.msra.mxu0 %v103
    %1255 = vmatprep.subr.mxu0 0.0
    %1256 = vmatpush1.msra.mxu0 %v104
    %1257 = vmatprep.subr.mxu0 0.0
    %1258 = vmatpush1.msra.mxu0 %v105
    %1259 = vmatprep.subr.mxu0 0.0
    %1260 = vmatpush1.msra.mxu0 %v106
    %1261 = vmatprep.subr.mxu0 0.0
    %1262 = vmatpush1.msra.mxu0 %v107
    %1263 = vmatprep.subr.mxu0 0.0
    %1264 = vmatpush1.msra.mxu0 %v108
    %1265 = vmatprep.subr.mxu0 0.0
    %1266 = vmatpush1.msra.mxu0 %v109
    %1267 = vmatprep.subr.mxu0 0.0
    %1268 = vmatpush1.msra.mxu0 %v110
    %1269 = vmatprep.subr.mxu0 0.0
    %1270 = vmatpush1.msra.mxu0 %v111
    %1271 = vmatprep.subr.mxu0 0.0
    %1272 = vmatpush1.msra.mxu0 %v112
    %1273 = vmatprep.subr.mxu0 0.0
    %1274 = vmatpush1.msra.mxu0 %v113
    %1275 = vmatprep.subr.mxu0 0.0
    %1276 = vmatpush1.msra.mxu0 %v114
    %1277 = vmatprep.subr.mxu0 0.0
    %1278 = vmatpush1.msra.mxu0 %v115
    %1279 = vmatprep.subr.mxu0 0.0
    %1280 = vmatpush1.msra.mxu0 %v116
    %1281 = vmatprep.subr.mxu0 0.0
    %1282 = vmatpush1.msra.mxu0 %v117
    %1283 = vmatprep.subr.mxu0 0.0
    %1284 = vmatpush1.msra.mxu0 %v118
    %1285 = vmatprep.subr.mxu0 0.0
    %1286 = vmatpush1.msra.mxu0 %v119
    %1287 = vmatprep.subr.mxu0 0.0
    %1288 = vmatpush1.msra.mxu0 %v120
    %1289 = vmatprep.subr.mxu0 0.0
    %1290 = vmatpush1.msra.mxu0 %v121
    %1291 = vmatprep.subr.mxu0 0.0
    %1292 = vmatpush1.msra.mxu0 %v122
    %1293 = vmatprep.subr.mxu0 0.0
    %1294 = vmatpush1.msra.mxu0 %v123
    %1295 = vmatprep.subr.mxu0 0.0
    %1296 = vmatpush1.msra.mxu0 %v124
    %1297 = vmatprep.subr.mxu0 0.0
    %1298 = vmatpush1.msra.mxu0 %v125
    %1299 = vmatprep.mubr.f32.mxu0 %v904
    %1300 = vmatmul.mubr.f32.gmra.mrb[0].mxu0 %v902
    %v1301 = vpop.f32.mrb[0].mxu0
    %v1302 = vadd.f32 %v1232, %v1301
    %v1303 = vpop.f32.mrb[0].mxu0
    %1304 = vdwg.mxu0
    %1305 = vmatprep.subr.mxu0 0.0
    %1306 = vmatpush1.msra.mxu0 %v126
    %1307 = vmatprep.subr.mxu0 0.0
    %1308 = vmatpush1.msra.mxu0 %v127
    %1309 = vmatprep.subr.mxu0 0.0
    %1310 = vmatpush1.msra.mxu0 %v128
    %1311 = vmatprep.subr.mxu0 0.0
    %1312 = vmatpush1.msra.mxu0 %v129
    %1313 = vmatprep.subr.mxu0 0.0
    %1314 = vmatpush1.msra.mxu0 %v130
    %1315 = vmatprep.subr.mxu0 0.0
    %1316 = vmatpush1.msra.mxu0 %v131
    %1317 = vmatprep.subr.mxu0 0.0
    %1318 = vmatpush1.msra.mxu0 %v132
    %1319 = vmatprep.subr.mxu0 0.0
    %1320 = vmatpush1.msra.mxu0 %v133
    %1321 = vmatprep.subr.mxu0 0.0
    %1322 = vmatpush1.msra.mxu0 %v134
    %1323 = vmatprep.subr.mxu0 0.0
    %1324 = vmatpush1.msra.mxu0 %v135
    %1325 = vmatprep.subr.mxu0 0.0
    %1326 = vmatpush1.msra.mxu0 %v136
    %1327 = vmatprep.subr.mxu0 0.0
    %1328 = vmatpush1.msra.mxu0 %v137
    %1329 = vmatprep.subr.mxu0 0.0
    %1330 = vmatpush1.msra.mxu0 %v138
    %1331 = vmatprep.subr.mxu0 0.0
    %1332 = vmatpush1.msra.mxu0 %v139
    %1333 = vmatprep.subr.mxu0 0.0
    %1334 = vmatpush1.msra.mxu0 %v140
    %1335 = vmatprep.subr.mxu0 0.0
    %1336 = vmatpush1.msra.mxu0 %v141
    %1337 = vmatprep.subr.mxu0 0.0
    %1338 = vmatpush1.msra.mxu0 %v142
    %1339 = vmatprep.subr.mxu0 0.0
    %1340 = vmatpush1.msra.mxu0 %v143
    %1341 = vmatprep.subr.mxu0 0.0
    %1342 = vmatpush1.msra.mxu0 %v144
    %1343 = vmatprep.subr.mxu0 0.0
    %1344 = vmatpush1.msra.mxu0 %v145
    %1345 = vmatprep.subr.mxu0 0.0
    %1346 = vmatpush1.msra.mxu0 %v146
    %1347 = vmatprep.subr.mxu0 0.0
    %1348 = vmatpush1.msra.mxu0 %v147
    %1349 = vmatprep.subr.mxu0 0.0
    %1350 = vmatpush1.msra.mxu0 %v148
    %1351 = vmatprep.subr.mxu0 0.0
    %1352 = vmatpush1.msra.mxu0 %v149
    %1353 = vmatprep.subr.mxu0 0.0
    %1354 = vmatpush1.msra.mxu0 %v150
    %1355 = vmatprep.subr.mxu0 0.0
    %1356 = vmatpush1.msra.mxu0 %v151
    %1357 = vmatprep.subr.mxu0 0.0
    %1358 = vmatpush1.msra.mxu0 %v152
    %1359 = vmatprep.subr.mxu0 0.0
    %1360 = vmatpush1.msra.mxu0 %v153
    %1361 = vmatprep.subr.mxu0 0.0
    %1362 = vmatpush1.msra.mxu0 %v154
    %1363 = vmatprep.subr.mxu0 0.0
    %1364 = vmatpush1.msra.mxu0 %v155
    %1365 = vmatprep.subr.mxu0 0.0
    %1366 = vmatpush1.msra.mxu0 %v156
    %1367 = vmatprep.subr.mxu0 0.0
    %1368 = vmatpush1.msra.mxu0 %v157
    %1369 = vmatprep.mubr.f32.mxu0 %v920
    %1370 = vmatmul.mubr.f32.gmra.mrb[0].mxu0 %v912
    %v1371 = vpop.f32.mrb[0].mxu0
    %v1372 = vadd.f32 %v1302, %v1371
    %v1373 = vpop.f32.mrb[0].mxu0
    %1374 = vdwg.mxu0
    %1375 = vmatprep.subr.mxu0 0.0
    %1376 = vmatpush1.msra.mxu0 %v158
    %1377 = vmatprep.subr.mxu0 0.0
    %1378 = vmatpush1.msra.mxu0 %v159
    %1379 = vmatprep.subr.mxu0 0.0
    %1380 = vmatpush1.msra.mxu0 %v160
    %1381 = vmatprep.subr.mxu0 0.0
    %1382 = vmatpush1.msra.mxu0 %v161
    %1383 = vmatprep.subr.mxu0 0.0
    %1384 = vmatpush1.msra.mxu0 %v162
    %1385 = vmatprep.subr.mxu0 0.0
    %1386 = vmatpush1.msra.mxu0 %v163
    %1387 = vmatprep.subr.mxu0 0.0
    %1388 = vmatpush1.msra.mxu0 %v164
    %1389 = vmatprep.subr.mxu0 0.0
    %1390 = vmatpush1.msra.mxu0 %v165
    %1391 = vmatprep.subr.mxu0 0.0
    %1392 = vmatpush1.msra.mxu0 %v166
    %1393 = vmatprep.subr.mxu0 0.0
    %1394 = vmatpush1.msra.mxu0 %v167
    %1395 = vmatprep.subr.mxu0 0.0
    %1396 = vmatpush1.msra.mxu0 %v168
    %1397 = vmatprep.subr.mxu0 0.0
    %1398 = vmatpush1.msra.mxu0 %v169
    %1399 = vmatprep.subr.mxu0 0.0
    %1400 = vmatpush1.msra.mxu0 %v170
    %1401 = vmatprep.subr.mxu0 0.0
    %1402 = vmatpush1.msra.mxu0 %v171
    %1403 = vmatprep.subr.mxu0 0.0
    %1404 = vmatpush1.msra.mxu0 %v172
    %1405 = vmatprep.subr.mxu0 0.0
    %1406 = vmatpush1.msra.mxu0 %v173
    %1407 = vmatprep.subr.mxu0 0.0
    %1408 = vmatpush1.msra.mxu0 %v174
    %1409 = vmatprep.subr.mxu0 0.0
    %1410 = vmatpush1.msra.mxu0 %v175
    %1411 = vmatprep.subr.mxu0 0.0
    %1412 = vmatpush1.msra.mxu0 %v176
    %1413 = vmatprep.subr.mxu0 0.0
    %1414 = vmatpush1.msra.mxu0 %v177
    %1415 = vmatprep.subr.mxu0 0.0
    %1416 = vmatpush1.msra.mxu0 %v178
    %1417 = vmatprep.subr.mxu0 0.0
    %1418 = vmatpush1.msra.mxu0 %v179
    %1419 = vmatprep.subr.mxu0 0.0
    %1420 = vmatpush1.msra.mxu0 %v180
    %1421 = vmatprep.subr.mxu0 0.0
    %1422 = vmatpush1.msra.mxu0 %v181
    %1423 = vmatprep.subr.mxu0 0.0
    %1424 = vmatpush1.msra.mxu0 %v182
    %1425 = vmatprep.subr.mxu0 0.0
    %1426 = vmatpush1.msra.mxu0 %v183
    %1427 = vmatprep.subr.mxu0 0.0
    %1428 = vmatpush1.msra.mxu0 %v184
    %1429 = vmatprep.subr.mxu0 0.0
    %1430 = vmatpush1.msra.mxu0 %v185
    %1431 = vmatprep.subr.mxu0 0.0
    %1432 = vmatpush1.msra.mxu0 %v186
    %1433 = vmatprep.subr.mxu0 0.0
    %1434 = vmatpush1.msra.mxu0 %v187
    %1435 = vmatprep.subr.mxu0 0.0
    %1436 = vmatpush1.msra.mxu0 %v188
    %1437 = vmatprep.subr.mxu0 0.0
    %1438 = vmatpush1.msra.mxu0 %v189
    %1439 = vmatprep.mubr.f32.mxu0 %v921
    %1440 = vmatmul.mubr.f32.gmra.mrb[0].mxu0 %v919
    %v1441 = vpop.f32.mrb[0].mxu0
    %v1442 = vadd.f32 %v1372, %v1441
    %v1443 = vpop.f32.mrb[0].mxu0
    %1444 = vdwg.mxu0
    %1445 = vmatprep.subr.mxu0 0.0
    %1446 = vmatpush1.msra.mxu0 %v190
    %1447 = vmatprep.subr.mxu0 0.0
    %1448 = vmatpush1.msra.mxu0 %v191
    %1449 = vmatprep.subr.mxu0 0.0
    %1450 = vmatpush1.msra.mxu0 %v192
    %1451 = vmatprep.subr.mxu0 0.0
    %1452 = vmatpush1.msra.mxu0 %v193
    %1453 = vmatprep.subr.mxu0 0.0
    %1454 = vmatpush1.msra.mxu0 %v194
    %1455 = vmatprep.subr.mxu0 0.0
    %1456 = vmatpush1.msra.mxu0 %v195
    %1457 = vmatprep.subr.mxu0 0.0
    %1458 = vmatpush1.msra.mxu0 %v196
    %1459 = vmatprep.subr.mxu0 0.0
    %1460 = vmatpush1.msra.mxu0 %v197
    %1461 = vmatprep.subr.mxu0 0.0
    %1462 = vmatpush1.msra.mxu0 %v198
    %1463 = vmatprep.subr.mxu0 0.0
    %1464 = vmatpush1.msra.mxu0 %v199
    %1465 = vmatprep.subr.mxu0 0.0
    %1466 = vmatpush1.msra.mxu0 %v200
    %1467 = vmatprep.subr.mxu0 0.0
    %1468 = vmatpush1.msra.mxu0 %v201
    %1469 = vmatprep.subr.mxu0 0.0
    %1470 = vmatpush1.msra.mxu0 %v202
    %1471 = vmatprep.subr.mxu0 0.0
    %1472 = vmatpush1.msra.mxu0 %v203
    %1473 = vmatprep.subr.mxu0 0.0
    %1474 = vmatpush1.msra.mxu0 %v204
    %1475 = vmatprep.subr.mxu0 0.0
    %1476 = vmatpush1.msra.mxu0 %v205
    %1477 = vmatprep.subr.mxu0 0.0
    %1478 = vmatpush1.msra.mxu0 %v206
    %1479 = vmatprep.subr.mxu0 0.0
    %1480 = vmatpush1.msra.mxu0 %v207
    %1481 = vmatprep.subr.mxu0 0.0
    %1482 = vmatpush1.msra.mxu0 %v208
    %1483 = vmatprep.subr.mxu0 0.0
    %1484 = vmatpush1.msra.mxu0 %v209
    %1485 = vmatprep.subr.mxu0 0.0
    %1486 = vmatpush1.msra.mxu0 %v210
    %1487 = vmatprep.subr.mxu0 0.0
    %1488 = vmatpush1.msra.mxu0 %v211
    %1489 = vmatprep.subr.mxu0 0.0
    %1490 = vmatpush1.msra.mxu0 %v212
    %1491 = vmatprep.subr.mxu0 0.0
    %1492 = vmatpush1.msra.mxu0 %v213
    %1493 = vmatprep.subr.mxu0 0.0
    %1494 = vmatpush1.msra.mxu0 %v214
    %1495 = vmatprep.subr.mxu0 0.0
    %1496 = vmatpush1.msra.mxu0 %v215
    %1497 = vmatprep.subr.mxu0 0.0
    %1498 = vmatpush1.msra.mxu0 %v216
    %1499 = vmatprep.subr.mxu0 0.0
    %1500 = vmatpush1.msra.mxu0 %v217
    %1501 = vmatprep.subr.mxu0 0.0
    %1502 = vmatpush1.msra.mxu0 %v218
    %1503 = vmatprep.subr.mxu0 0.0
    %1504 = vmatpush1.msra.mxu0 %v219
    %1505 = vmatprep.subr.mxu0 0.0
    %1506 = vmatpush1.msra.mxu0 %v220
    %1507 = vmatprep.subr.mxu0 0.0
    %1508 = vmatpush1.msra.mxu0 %v221
    %1509 = vmatprep.mubr.f32.mxu0 %v937
    %1510 = vmatmul.mubr.f32.gmra.mrb[0].mxu0 %v929
    %v1511 = vpop.f32.mrb[0].mxu0
    %v1512 = vadd.f32 %v1442, %v1511
    %v1513 = vpop.f32.mrb[0].mxu0
    %1514 = vdwg.mxu0
    %1515 = vmatprep.subr.mxu0 0.0
    %1516 = vmatpush1.msra.mxu0 %v222
    %1517 = vmatprep.subr.mxu0 0.0
    %1518 = vmatpush1.msra.mxu0 %v223
    %1519 = vmatprep.subr.mxu0 0.0
    %1520 = vmatpush1.msra.mxu0 %v224
    %1521 = vmatprep.subr.mxu0 0.0
    %1522 = vmatpush1.msra.mxu0 %v225
    %1523 = vmatprep.subr.mxu0 0.0
    %1524 = vmatpush1.msra.mxu0 %v226
    %1525 = vmatprep.subr.mxu0 0.0
    %1526 = vmatpush1.msra.mxu0 %v227
    %1527 = vmatprep.subr.mxu0 0.0
    %1528 = vmatpush1.msra.mxu0 %v228
    %1529 = vmatprep.subr.mxu0 0.0
    %1530 = vmatpush1.msra.mxu0 %v229
    %1531 = vmatprep.subr.mxu0 0.0
    %1532 = vmatpush1.msra.mxu0 %v230
    %1533 = vmatprep.subr.mxu0 0.0
    %1534 = vmatpush1.msra.mxu0 %v231
    %1535 = vmatprep.subr.mxu0 0.0
    %1536 = vmatpush1.msra.mxu0 %v232
    %1537 = vmatprep.subr.mxu0 0.0
    %1538 = vmatpush1.msra.mxu0 %v233
    %1539 = vmatprep.subr.mxu0 0.0
    %1540 = vmatpush1.msra.mxu0 %v234
    %1541 = vmatprep.subr.mxu0 0.0
    %1542 = vmatpush1.msra.mxu0 %v235
    %1543 = vmatprep.subr.mxu0 0.0
    %1544 = vmatpush1.msra.mxu0 %v236
    %1545 = vmatprep.subr.mxu0 0.0
    %1546 = vmatpush1.msra.mxu0 %v237
    %1547 = vmatprep.subr.mxu0 0.0
    %1548 = vmatpush1.msra.mxu0 %v238
    %1549 = vmatprep.subr.mxu0 0.0
    %1550 = vmatpush1.msra.mxu0 %v239
    %1551 = vmatprep.subr.mxu0 0.0
    %1552 = vmatpush1.msra.mxu0 %v240
    %1553 = vmatprep.subr.mxu0 0.0
    %1554 = vmatpush1.msra.mxu0 %v241
    %1555 = vmatprep.subr.mxu0 0.0
    %1556 = vmatpush1.msra.mxu0 %v242
    %1557 = vmatprep.subr.mxu0 0.0
    %1558 = vmatpush1.msra.mxu0 %v243
    %1559 = vmatprep.subr.mxu0 0.0
    %1560 = vmatpush1.msra.mxu0 %v244
    %1561 = vmatprep.subr.mxu0 0.0
    %1562 = vmatpush1.msra.mxu0 %v245
    %1563 = vmatprep.subr.mxu0 0.0
    %1564 = vmatpush1.msra.mxu0 %v246
    %1565 = vmatprep.subr.mxu0 0.0
    %1566 = vmatpush1.msra.mxu0 %v247
    %1567 = vmatprep.subr.mxu0 0.0
    %1568 = vmatpush1.msra.mxu0 %v248
    %1569 = vmatprep.subr.mxu0 0.0
    %1570 = vmatpush1.msra.mxu0 %v249
    %1571 = vmatprep.subr.mxu0 0.0
    %1572 = vmatpush1.msra.mxu0 %v250
    %1573 = vmatprep.subr.mxu0 0.0
    %1574 = vmatpush1.msra.mxu0 %v251
    %1575 = vmatprep.subr.mxu0 0.0
    %1576 = vmatpush1.msra.mxu0 %v252
    %1577 = vmatprep.subr.mxu0 0.0
    %1578 = vmatpush1.msra.mxu0 %v253
    %1579 = vmatprep.mubr.f32.mxu0 %v938
    %1580 = vmatmul.mubr.f32.gmra.mrb[0].mxu0 %v936
    %v1581 = vpop.f32.mrb[0].mxu0
    %v1582 = vadd.f32 %v1512, %v1581
    %v1583 = vpop.f32.mrb[0].mxu0
    %1584 = vdwg.mxu0
    %1585 = vmatprep.subr.mxu0 0.0
    %1586 = vmatpush1.msra.mxu0 %v254
    %1587 = vmatprep.subr.mxu0 0.0
    %1588 = vmatpush1.msra.mxu0 %v255
    %1589 = vmatprep.subr.mxu0 0.0
    %1590 = vmatpush1.msra.mxu0 %v256
    %1591 = vmatprep.subr.mxu0 0.0
    %1592 = vmatpush1.msra.mxu0 %v257
    %1593 = vmatprep.subr.mxu0 0.0
    %1594 = vmatpush1.msra.mxu0 %v258
    %1595 = vmatprep.subr.mxu0 0.0
    %1596 = vmatpush1.msra.mxu0 %v259
    %1597 = vmatprep.subr.mxu0 0.0
    %1598 = vmatpush1.msra.mxu0 %v260
    %1599 = vmatprep.subr.mxu0 0.0
    %1600 = vmatpush1.msra.mxu0 %v261
    %1601 = vmatprep.subr.mxu0 0.0
    %1602 = vmatpush1.msra.mxu0 %v262
    %1603 = vmatprep.subr.mxu0 0.0
    %1604 = vmatpush1.msra.mxu0 %v263
    %1605 = vmatprep.subr.mxu0 0.0
    %1606 = vmatpush1.msra.mxu0 %v264
    %1607 = vmatprep.subr.mxu0 0.0
    %1608 = vmatpush1.msra.mxu0 %v265
    %1609 = vmatprep.subr.mxu0 0.0
    %1610 = vmatpush1.msra.mxu0 %v266
    %1611 = vmatprep.subr.mxu0 0.0
    %1612 = vmatpush1.msra.mxu0 %v267
    %1613 = vmatprep.subr.mxu0 0.0
    %1614 = vmatpush1.msra.mxu0 %v268
    %1615 = vmatprep.subr.mxu0 0.0
    %1616 = vmatpush1.msra.mxu0 %v269
    %1617 = vmatprep.subr.mxu0 0.0
    %1618 = vmatpush1.msra.mxu0 %v270
    %1619 = vmatprep.subr.mxu0 0.0
    %1620 = vmatpush1.msra.mxu0 %v271
    %1621 = vmatprep.subr.mxu0 0.0
    %1622 = vmatpush1.msra.mxu0 %v272
    %1623 = vmatprep.subr.mxu0 0.0
    %1624 = vmatpush1.msra.mxu0 %v273
    %1625 = vmatprep.subr.mxu0 0.0
    %1626 = vmatpush1.msra.mxu0 %v274
    %1627 = vmatprep.subr.mxu0 0.0
    %1628 = vmatpush1.msra.mxu0 %v275
    %1629 = vmatprep.subr.mxu0 0.0
    %1630 = vmatpush1.msra.mxu0 %v276
    %1631 = vmatprep.subr.mxu0 0.0
    %1632 = vmatpush1.msra.mxu0 %v277
    %1633 = vmatprep.subr.mxu0 0.0
    %1634 = vmatpush1.msra.mxu0 %v278
    %1635 = vmatprep.subr.mxu0 0.0
    %1636 = vmatpush1.msra.mxu0 %v279
    %1637 = vmatprep.subr.mxu0 0.0
    %1638 = vmatpush1.msra.mxu0 %v280
    %1639 = vmatprep.subr.mxu0 0.0
    %1640 = vmatpush1.msra.mxu0 %v281
    %1641 = vmatprep.subr.mxu0 0.0
    %1642 = vmatpush1.msra.mxu0 %v282
    %1643 = vmatprep.subr.mxu0 0.0
    %1644 = vmatpush1.msra.mxu0 %v283
    %1645 = vmatprep.subr.mxu0 0.0
    %1646 = vmatpush1.msra.mxu0 %v284
    %1647 = vmatprep.subr.mxu0 0.0
    %1648 = vmatpush1.msra.mxu0 %v285
    %1649 = vmatprep.mubr.f32.mxu0 %v954
    %1650 = vmatmul.mubr.f32.gmra.mrb[0].mxu0 %v946
    %v1651 = vpop.f32.mrb[0].mxu0
    %v1652 = vadd.f32 %v1582, %v1651
    %v1653 = vpop.f32.mrb[0].mxu0
    %1654 = vdwg.mxu0
    %1655 = vmatprep.subr.mxu0 0.0
    %1656 = vmatpush1.msra.mxu0 %v286
    %1657 = vmatprep.subr.mxu0 0.0
    %1658 = vmatpush1.msra.mxu0 %v287
    %1659 = vmatprep.subr.mxu0 0.0
    %1660 = vmatpush1.msra.mxu0 %v288
    %1661 = vmatprep.subr.mxu0 0.0
    %1662 = vmatpush1.msra.mxu0 %v289
    %1663 = vmatprep.subr.mxu0 0.0
    %1664 = vmatpush1.msra.mxu0 %v290
    %1665 = vmatprep.subr.mxu0 0.0
    %1666 = vmatpush1.msra.mxu0 %v291
    %1667 = vmatprep.subr.mxu0 0.0
    %1668 = vmatpush1.msra.mxu0 %v292
    %1669 = vmatprep.subr.mxu0 0.0
    %1670 = vmatpush1.msra.mxu0 %v293
    %1671 = vmatprep.subr.mxu0 0.0
    %1672 = vmatpush1.msra.mxu0 %v294
    %1673 = vmatprep.subr.mxu0 0.0
    %1674 = vmatpush1.msra.mxu0 %v295
    %1675 = vmatprep.subr.mxu0 0.0
    %1676 = vmatpush1.msra.mxu0 %v296
    %1677 = vmatprep.subr.mxu0 0.0
    %1678 = vmatpush1.msra.mxu0 %v297
    %1679 = vmatprep.subr.mxu0 0.0
    %1680 = vmatpush1.msra.mxu0 %v298
    %1681 = vmatprep.subr.mxu0 0.0
    %1682 = vmatpush1.msra.mxu0 %v299
    %1683 = vmatprep.subr.mxu0 0.0
    %1684 = vmatpush1.msra.mxu0 %v300
    %1685 = vmatprep.subr.mxu0 0.0
    %1686 = vmatpush1.msra.mxu0 %v301
    %1687 = vmatprep.subr.mxu0 0.0
    %1688 = vmatpush1.msra.mxu0 %v302
    %1689 = vmatprep.subr.mxu0 0.0
    %1690 = vmatpush1.msra.mxu0 %v303
    %1691 = vmatprep.subr.mxu0 0.0
    %1692 = vmatpush1.msra.mxu0 %v304
    %1693 = vmatprep.subr.mxu0 0.0
    %1694 = vmatpush1.msra.mxu0 %v305
    %1695 = vmatprep.subr.mxu0 0.0
    %1696 = vmatpush1.msra.mxu0 %v306
    %1697 = vmatprep.subr.mxu0 0.0
    %1698 = vmatpush1.msra.mxu0 %v307
    %1699 = vmatprep.subr.mxu0 0.0
    %1700 = vmatpush1.msra.mxu0 %v308
    %1701 = vmatprep.subr.mxu0 0.0
    %1702 = vmatpush1.msra.mxu0 %v309
    %1703 = vmatprep.subr.mxu0 0.0
    %1704 = vmatpush1.msra.mxu0 %v310
    %1705 = vmatprep.subr.mxu0 0.0
    %1706 = vmatpush1.msra.mxu0 %v311
    %1707 = vmatprep.subr.mxu0 0.0
    %1708 = vmatpush1.msra.mxu0 %v312
    %1709 = vmatprep.subr.mxu0 0.0
    %1710 = vmatpush1.msra.mxu0 %v313
    %1711 = vmatprep.subr.mxu0 0.0
    %1712 = vmatpush1.msra.mxu0 %v314
    %1713 = vmatprep.subr.mxu0 0.0
    %1714 = vmatpush1.msra.mxu0 %v315
    %1715 = vmatprep.subr.mxu0 0.0
    %1716 = vmatpush1.msra.mxu0 %v316
    %1717 = vmatprep.subr.mxu0 0.0
    %1718 = vmatpush1.msra.mxu0 %v317
    %1719 = vmatprep.mubr.f32.mxu0 %v955
    %1720 = vmatmul.mubr.f32.gmra.mrb[0].mxu0 %v953
    %v1721 = vpop.f32.mrb[0].mxu0
    %v1722 = vadd.f32 %v1652, %v1721
    %v1723 = vpop.f32.mrb[0].mxu0
    %1724 = vdwg.mxu0
    %1725 = vmatprep.subr.mxu0 0.0
    %1726 = vmatpush1.msra.mxu0 %v318
    %1727 = vmatprep.subr.mxu0 0.0
    %1728 = vmatpush1.msra.mxu0 %v319
    %1729 = vmatprep.subr.mxu0 0.0
    %1730 = vmatpush1.msra.mxu0 %v320
    %1731 = vmatprep.subr.mxu0 0.0
    %1732 = vmatpush1.msra.mxu0 %v321
    %1733 = vmatprep.subr.mxu0 0.0
    %1734 = vmatpush1.msra.mxu0 %v322
    %1735 = vmatprep.subr.mxu0 0.0
    %1736 = vmatpush1.msra.mxu0 %v323
    %1737 = vmatprep.subr.mxu0 0.0
    %1738 = vmatpush1.msra.mxu0 %v324
    %1739 = vmatprep.subr.mxu0 0.0
    %1740 = vmatpush1.msra.mxu0 %v325
    %1741 = vmatprep.subr.mxu0 0.0
    %1742 = vmatpush1.msra.mxu0 %v326
    %1743 = vmatprep.subr.mxu0 0.0
    %1744 = vmatpush1.msra.mxu0 %v327
    %1745 = vmatprep.subr.mxu0 0.0
    %1746 = vmatpush1.msra.mxu0 %v328
    %1747 = vmatprep.subr.mxu0 0.0
    %1748 = vmatpush1.msra.mxu0 %v329
    %1749 = vmatprep.subr.mxu0 0.0
    %1750 = vmatpush1.msra.mxu0 %v330
    %1751 = vmatprep.subr.mxu0 0.0
    %1752 = vmatpush1.msra.mxu0 %v331
    %1753 = vmatprep.subr.mxu0 0.0
    %1754 = vmatpush1.msra.mxu0 %v332
    %1755 = vmatprep.subr.mxu0 0.0
    %1756 = vmatpush1.msra.mxu0 %v333
    %1757 = vmatprep.subr.mxu0 0.0
    %1758 = vmatpush1.msra.mxu0 %v334
    %1759 = vmatprep.subr.mxu0 0.0
    %1760 = vmatpush1.msra.mxu0 %v335
    %1761 = vmatprep.subr.mxu0 0.0
    %1762 = vmatpush1.msra.mxu0 %v336
    %1763 = vmatprep.subr.mxu0 0.0
    %1764 = vmatpush1.msra.mxu0 %v337
    %1765 = vmatprep.subr.mxu0 0.0
    %1766 = vmatpush1.msra.mxu0 %v338
    %1767 = vmatprep.subr.mxu0 0.0
    %1768 = vmatpush1.msra.mxu0 %v339
    %1769 = vmatprep.subr.mxu0 0.0
    %1770 = vmatpush1.msra.mxu0 %v340
    %1771 = vmatprep.subr.mxu0 0.0
    %1772 = vmatpush1.msra.mxu0 %v341
    %1773 = vmatprep.subr.mxu0 0.0
    %1774 = vmatpush1.msra.mxu0 %v342
    %1775 = vmatprep.subr.mxu0 0.0
    %1776 = vmatpush1.msra.mxu0 %v343
    %1777 = vmatprep.subr.mxu0 0.0
    %1778 = vmatpush1.msra.mxu0 %v344
    %1779 = vmatprep.subr.mxu0 0.0
    %1780 = vmatpush1.msra.mxu0 %v345
    %1781 = vmatprep.subr.mxu0 0.0
    %1782 = vmatpush1.msra.mxu0 %v346
    %1783 = vmatprep.subr.mxu0 0.0
    %1784 = vmatpush1.msra.mxu0 %v347
    %1785 = vmatprep.subr.mxu0 0.0
    %1786 = vmatpush1.msra.mxu0 %v348
    %1787 = vmatprep.subr.mxu0 0.0
    %1788 = vmatpush1.msra.mxu0 %v349
    %1789 = vmatprep.mubr.f32.mxu0 %v971
    %1790 = vmatmul.mubr.f32.gmra.mrb[0].mxu0 %v963
    %v1791 = vpop.f32.mrb[0].mxu0
    %v1792 = vadd.f32 %v1722, %v1791
    %v1793 = vpop.f32.mrb[0].mxu0
    %1794 = vdwg.mxu0
    %1795 = vmatprep.subr.mxu0 0.0
    %1796 = vmatpush1.msra.mxu0 %v350
    %1797 = vmatprep.subr.mxu0 0.0
    %1798 = vmatpush1.msra.mxu0 %v351
    %1799 = vmatprep.subr.mxu0 0.0
    %1800 = vmatpush1.msra.mxu0 %v352
    %1801 = vmatprep.subr.mxu0 0.0
    %1802 = vmatpush1.msra.mxu0 %v353
    %1803 = vmatprep.subr.mxu0 0.0
    %1804 = vmatpush1.msra.mxu0 %v354
    %1805 = vmatprep.subr.mxu0 0.0
    %1806 = vmatpush1.msra.mxu0 %v355
    %1807 = vmatprep.subr.mxu0 0.0
    %1808 = vmatpush1.msra.mxu0 %v356
    %1809 = vmatprep.subr.mxu0 0.0
    %1810 = vmatpush1.msra.mxu0 %v357
    %1811 = vmatprep.subr.mxu0 0.0
    %1812 = vmatpush1.msra.mxu0 %v358
    %1813 = vmatprep.subr.mxu0 0.0
    %1814 = vmatpush1.msra.mxu0 %v359
    %1815 = vmatprep.subr.mxu0 0.0
    %1816 = vmatpush1.msra.mxu0 %v360
    %1817 = vmatprep.subr.mxu0 0.0
    %1818 = vmatpush1.msra.mxu0 %v361
    %1819 = vmatprep.subr.mxu0 0.0
    %1820 = vmatpush1.msra.mxu0 %v362
    %1821 = vmatprep.subr.mxu0 0.0
    %1822 = vmatpush1.msra.mxu0 %v363
    %1823 = vmatprep.subr.mxu0 0.0
    %1824 = vmatpush1.msra.mxu0 %v364
    %1825 = vmatprep.subr.mxu0 0.0
    %1826 = vmatpush1.msra.mxu0 %v365
    %1827 = vmatprep.subr.mxu0 0.0
    %1828 = vmatpush1.msra.mxu0 %v366
    %1829 = vmatprep.subr.mxu0 0.0
    %1830 = vmatpush1.msra.mxu0 %v367
    %1831 = vmatprep.subr.mxu0 0.0
    %1832 = vmatpush1.msra.mxu0 %v368
    %1833 = vmatprep.subr.mxu0 0.0
    %1834 = vmatpush1.msra.mxu0 %v369
    %1835 = vmatprep.subr.mxu0 0.0
    %1836 = vmatpush1.msra.mxu0 %v370
    %1837 = vmatprep.subr.mxu0 0.0
    %1838 = vmatpush1.msra.mxu0 %v371
    %1839 = vmatprep.subr.mxu0 0.0
    %1840 = vmatpush1.msra.mxu0 %v372
    %1841 = vmatprep.subr.mxu0 0.0
    %1842 = vmatpush1.msra.mxu0 %v373
    %1843 = vmatprep.subr.mxu0 0.0
    %1844 = vmatpush1.msra.mxu0 %v374
    %1845 = vmatprep.subr.mxu0 0.0
    %1846 = vmatpush1.msra.mxu0 %v375
    %1847 = vmatprep.subr.mxu0 0.0
    %1848 = vmatpush1.msra.mxu0 %v376
    %1849 = vmatprep.subr.mxu0 0.0
    %1850 = vmatpush1.msra.mxu0 %v377
    %1851 = vmatprep.subr.mxu0 0.0
    %1852 = vmatpush1.msra.mxu0 %v378
    %1853 = vmatprep.subr.mxu0 0.0
    %1854 = vmatpush1.msra.mxu0 %v379
    %1855 = vmatprep.subr.mxu0 0.0
    %1856 = vmatpush1.msra.mxu0 %v380
    %1857 = vmatprep.subr.mxu0 0.0
    %1858 = vmatpush1.msra.mxu0 %v381
    %1859 = vmatprep.mubr.f32.mxu0 %v972
    %1860 = vmatmul.mubr.f32.gmra.mrb[0].mxu0 %v970
    %v1861 = vpop.f32.mrb[0].mxu0
    %v1862 = vadd.f32 %v1792, %v1861
    %v1863 = vpop.f32.mrb[0].mxu0
    %1864 = vdwg.mxu0
    %1865 = vmatprep.subr.mxu0 0.0
    %1866 = vmatpush1.msra.mxu0 %v382
    %1867 = vmatprep.subr.mxu0 0.0
    %1868 = vmatpush1.msra.mxu0 %v383
    %1869 = vmatprep.subr.mxu0 0.0
    %1870 = vmatpush1.msra.mxu0 %v384
    %1871 = vmatprep.subr.mxu0 0.0
    %1872 = vmatpush1.msra.mxu0 %v385
    %1873 = vmatprep.subr.mxu0 0.0
    %1874 = vmatpush1.msra.mxu0 %v386
    %1875 = vmatprep.subr.mxu0 0.0
    %1876 = vmatpush1.msra.mxu0 %v387
    %1877 = vmatprep.subr.mxu0 0.0
    %1878 = vmatpush1.msra.mxu0 %v388
    %1879 = vmatprep.subr.mxu0 0.0
    %1880 = vmatpush1.msra.mxu0 %v389
    %1881 = vmatprep.subr.mxu0 0.0
    %1882 = vmatpush1.msra.mxu0 %v390
    %1883 = vmatprep.subr.mxu0 0.0
    %1884 = vmatpush1.msra.mxu0 %v391
    %1885 = vmatprep.subr.mxu0 0.0
    %1886 = vmatpush1.msra.mxu0 %v392
    %1887 = vmatprep.subr.mxu0 0.0
    %1888 = vmatpush1.msra.mxu0 %v393
    %1889 = vmatprep.subr.mxu0 0.0
    %1890 = vmatpush1.msra.mxu0 %v394
    %1891 = vmatprep.subr.mxu0 0.0
    %1892 = vmatpush1.msra.mxu0 %v395
    %1893 = vmatprep.subr.mxu0 0.0
    %1894 = vmatpush1.msra.mxu0 %v396
    %1895 = vmatprep.subr.mxu0 0.0
    %1896 = vmatpush1.msra.mxu0 %v397
    %1897 = vmatprep.subr.mxu0 0.0
    %1898 = vmatpush1.msra.mxu0 %v398
    %1899 = vmatprep.subr.mxu0 0.0
    %1900 = vmatpush1.msra.mxu0 %v399
    %1901 = vmatprep.subr.mxu0 0.0
    %1902 = vmatpush1.msra.mxu0 %v400
    %1903 = vmatprep.subr.mxu0 0.0
    %1904 = vmatpush1.msra.mxu0 %v401
    %1905 = vmatprep.subr.mxu0 0.0
    %1906 = vmatpush1.msra.mxu0 %v402
    %1907 = vmatprep.subr.mxu0 0.0
    %1908 = vmatpush1.msra.mxu0 %v403
    %1909 = vmatprep.subr.mxu0 0.0
    %1910 = vmatpush1.msra.mxu0 %v404
    %1911 = vmatprep.subr.mxu0 0.0
    %1912 = vmatpush1.msra.mxu0 %v405
    %1913 = vmatprep.subr.mxu0 0.0
    %1914 = vmatpush1.msra.mxu0 %v406
    %1915 = vmatprep.subr.mxu0 0.0
    %1916 = vmatpush1.msra.mxu0 %v407
    %1917 = vmatprep.subr.mxu0 0.0
    %1918 = vmatpush1.msra.mxu0 %v408
    %1919 = vmatprep.subr.mxu0 0.0
    %1920 = vmatpush1.msra.mxu0 %v409
    %1921 = vmatprep.subr.mxu0 0.0
    %1922 = vmatpush1.msra.mxu0 %v410
    %1923 = vmatprep.subr.mxu0 0.0
    %1924 = vmatpush1.msra.mxu0 %v411
    %1925 = vmatprep.subr.mxu0 0.0
    %1926 = vmatpush1.msra.mxu0 %v412
    %1927 = vmatprep.subr.mxu0 0.0
    %1928 = vmatpush1.msra.mxu0 %v413
    %1929 = vmatprep.mubr.f32.mxu0 %v988
    %1930 = vmatmul.mubr.f32.gmra.mrb[0].mxu0 %v980
    %v1931 = vpop.f32.mrb[0].mxu0
    %v1932 = vadd.f32 %v1862, %v1931
    %v1933 = vpop.f32.mrb[0].mxu0
    %1934 = vdwg.mxu0
    %1935 = vmatprep.subr.mxu0 0.0
    %1936 = vmatpush1.msra.mxu0 %v414
    %1937 = vmatprep.subr.mxu0 0.0
    %1938 = vmatpush1.msra.mxu0 %v415
    %1939 = vmatprep.subr.mxu0 0.0
    %1940 = vmatpush1.msra.mxu0 %v416
    %1941 = vmatprep.subr.mxu0 0.0
    %1942 = vmatpush1.msra.mxu0 %v417
    %1943 = vmatprep.subr.mxu0 0.0
    %1944 = vmatpush1.msra.mxu0 %v418
    %1945 = vmatprep.subr.mxu0 0.0
    %1946 = vmatpush1.msra.mxu0 %v419
    %1947 = vmatprep.subr.mxu0 0.0
    %1948 = vmatpush1.msra.mxu0 %v420
    %1949 = vmatprep.subr.mxu0 0.0
    %1950 = vmatpush1.msra.mxu0 %v421
    %1951 = vmatprep.subr.mxu0 0.0
    %1952 = vmatpush1.msra.mxu0 %v422
    %1953 = vmatprep.subr.mxu0 0.0
    %1954 = vmatpush1.msra.mxu0 %v423
    %1955 = vmatprep.subr.mxu0 0.0
    %1956 = vmatpush1.msra.mxu0 %v424
    %1957 = vmatprep.subr.mxu0 0.0
    %1958 = vmatpush1.msra.mxu0 %v425
    %1959 = vmatprep.subr.mxu0 0.0
    %1960 = vmatpush1.msra.mxu0 %v426
    %1961 = vmatprep.subr.mxu0 0.0
    %1962 = vmatpush1.msra.mxu0 %v427
    %1963 = vmatprep.subr.mxu0 0.0
    %1964 = vmatpush1.msra.mxu0 %v428
    %1965 = vmatprep.subr.mxu0 0.0
    %1966 = vmatpush1.msra.mxu0 %v429
    %1967 = vmatprep.subr.mxu0 0.0
    %1968 = vmatpush1.msra.mxu0 %v430
    %1969 = vmatprep.subr.mxu0 0.0
    %1970 = vmatpush1.msra.mxu0 %v431
    %1971 = vmatprep.subr.mxu0 0.0
    %1972 = vmatpush1.msra.mxu0 %v432
    %1973 = vmatprep.subr.mxu0 0.0
    %1974 = vmatpush1.msra.mxu0 %v433
    %1975 = vmatprep.subr.mxu0 0.0
    %1976 = vmatpush1.msra.mxu0 %v434
    %1977 = vmatprep.subr.mxu0 0.0
    %1978 = vmatpush1.msra.mxu0 %v435
    %1979 = vmatprep.subr.mxu0 0.0
    %1980 = vmatpush1.msra.mxu0 %v436
    %1981 = vmatprep.subr.mxu0 0.0
    %1982 = vmatpush1.msra.mxu0 %v437
    %1983 = vmatprep.subr.mxu0 0.0
    %1984 = vmatpush1.msra.mxu0 %v438
    %1985 = vmatprep.subr.mxu0 0.0
    %1986 = vmatpush1.msra.mxu0 %v439
    %1987 = vmatprep.subr.mxu0 0.0
    %1988 = vmatpush1.msra.mxu0 %v440
    %1989 = vmatprep.subr.mxu0 0.0
    %1990 = vmatpush1.msra.mxu0 %v441
    %1991 = vmatprep.subr.mxu0 0.0
    %1992 = vmatpush1.msra.mxu0 %v442
    %1993 = vmatprep.subr.mxu0 0.0
    %1994 = vmatpush1.msra.mxu0 %v443
    %1995 = vmatprep.subr.mxu0 0.0
    %1996 = vmatpush1.msra.mxu0 %v444
    %1997 = vmatprep.subr.mxu0 0.0
    %1998 = vmatpush1.msra.mxu0 %v445
    %1999 = vmatprep.mubr.f32.mxu0 %v989
    %2000 = vmatmul.mubr.f32.gmra.mrb[0].mxu0 %v987
    %v2001 = vpop.f32.mrb[0].mxu0
    %v2002 = vadd.f32 %v1932, %v2001
    %v2003 = vpop.f32.mrb[0].mxu0
    %2004 = vdwg.mxu0
    %2005 = vmatprep.subr.mxu0 0.0
    %2006 = vmatpush1.msra.mxu0 %v446
    %2007 = vmatprep.subr.mxu0 0.0
    %2008 = vmatpush1.msra.mxu0 %v447
    %2009 = vmatprep.subr.mxu0 0.0
    %2010 = vmatpush1.msra.mxu0 %v448
    %2011 = vmatprep.subr.mxu0 0.0
    %2012 = vmatpush1.msra.mxu0 %v449
    %2013 = vmatprep.subr.mxu0 0.0
    %2014 = vmatpush1.msra.mxu0 %v450
    %2015 = vmatprep.subr.mxu0 0.0
    %2016 = vmatpush1.msra.mxu0 %v451
    %2017 = vmatprep.subr.mxu0 0.0
    %2018 = vmatpush1.msra.mxu0 %v452
    %2019 = vmatprep.subr.mxu0 0.0
    %2020 = vmatpush1.msra.mxu0 %v453
    %2021 = vmatprep.subr.mxu0 0.0
    %2022 = vmatpush1.msra.mxu0 %v454
    %2023 = vmatprep.subr.mxu0 0.0
    %2024 = vmatpush1.msra.mxu0 %v455
    %2025 = vmatprep.subr.mxu0 0.0
    %2026 = vmatpush1.msra.mxu0 %v456
    %2027 = vmatprep.subr.mxu0 0.0
    %2028 = vmatpush1.msra.mxu0 %v457
    %2029 = vmatprep.subr.mxu0 0.0
    %2030 = vmatpush1.msra.mxu0 %v458
    %2031 = vmatprep.subr.mxu0 0.0
    %2032 = vmatpush1.msra.mxu0 %v459
    %2033 = vmatprep.subr.mxu0 0.0
    %2034 = vmatpush1.msra.mxu0 %v460
    %2035 = vmatprep.subr.mxu0 0.0
    %2036 = vmatpush1.msra.mxu0 %v461
    %2037 = vmatprep.subr.mxu0 0.0
    %2038 = vmatpush1.msra.mxu0 %v462
    %2039 = vmatprep.subr.mxu0 0.0
    %2040 = vmatpush1.msra.mxu0 %v463
    %2041 = vmatprep.subr.mxu0 0.0
    %2042 = vmatpush1.msra.mxu0 %v464
    %2043 = vmatprep.subr.mxu0 0.0
    %2044 = vmatpush1.msra.mxu0 %v465
    %2045 = vmatprep.subr.mxu0 0.0
    %2046 = vmatpush1.msra.mxu0 %v466
    %2047 = vmatprep.subr.mxu0 0.0
    %2048 = vmatpush1.msra.mxu0 %v467
    %2049 = vmatprep.subr.mxu0 0.0
    %2050 = vmatpush1.msra.mxu0 %v468
    %2051 = vmatprep.subr.mxu0 0.0
    %2052 = vmatpush1.msra.mxu0 %v469
    %2053 = vmatprep.subr.mxu0 0.0
    %2054 = vmatpush1.msra.mxu0 %v470
    %2055 = vmatprep.subr.mxu0 0.0
    %2056 = vmatpush1.msra.mxu0 %v471
    %2057 = vmatprep.subr.mxu0 0.0
    %2058 = vmatpush1.msra.mxu0 %v472
    %2059 = vmatprep.subr.mxu0 0.0
    %2060 = vmatpush1.msra.mxu0 %v473
    %2061 = vmatprep.subr.mxu0 0.0
    %2062 = vmatpush1.msra.mxu0 %v474
    %2063 = vmatprep.subr.mxu0 0.0
    %2064 = vmatpush1.msra.mxu0 %v475
    %2065 = vmatprep.subr.mxu0 0.0
    %2066 = vmatpush1.msra.mxu0 %v476
    %2067 = vmatprep.subr.mxu0 0.0
    %2068 = vmatpush1.msra.mxu0 %v477
    %2069 = vmatprep.mubr.f32.mxu0 %v1005
    %2070 = vmatmul.mubr.f32.gmra.mrb[0].mxu0 %v997
    %v2071 = vpop.f32.mrb[0].mxu0
    %v2072 = vadd.f32 %v2002, %v2071
    %v2073 = vpop.f32.mrb[0].mxu0
    %2074 = vdwg.mxu0
    %2075 = vmatprep.subr.mxu0 0.0
    %2076 = vmatpush1.msra.mxu0 %v478
    %2077 = vmatprep.subr.mxu0 0.0
    %2078 = vmatpush1.msra.mxu0 %v479
    %2079 = vmatprep.subr.mxu0 0.0
    %2080 = vmatpush1.msra.mxu0 %v480
    %2081 = vmatprep.subr.mxu0 0.0
    %2082 = vmatpush1.msra.mxu0 %v481
    %2083 = vmatprep.subr.mxu0 0.0
    %2084 = vmatpush1.msra.mxu0 %v482
    %2085 = vmatprep.subr.mxu0 0.0
    %2086 = vmatpush1.msra.mxu0 %v483
    %2087 = vmatprep.subr.mxu0 0.0
    %2088 = vmatpush1.msra.mxu0 %v484
    %2089 = vmatprep.subr.mxu0 0.0
    %2090 = vmatpush1.msra.mxu0 %v485
    %2091 = vmatprep.subr.mxu0 0.0
    %2092 = vmatpush1.msra.mxu0 %v486
    %2093 = vmatprep.subr.mxu0 0.0
    %2094 = vmatpush1.msra.mxu0 %v487
    %2095 = vmatprep.subr.mxu0 0.0
    %2096 = vmatpush1.msra.mxu0 %v488
    %2097 = vmatprep.subr.mxu0 0.0
    %2098 = vmatpush1.msra.mxu0 %v489
    %2099 = vmatprep.subr.mxu0 0.0
    %2100 = vmatpush1.msra.mxu0 %v490
    %2101 = vmatprep.subr.mxu0 0.0
    %2102 = vmatpush1.msra.mxu0 %v491
    %2103 = vmatprep.subr.mxu0 0.0
    %2104 = vmatpush1.msra.mxu0 %v492
    %2105 = vmatprep.subr.mxu0 0.0
    %2106 = vmatpush1.msra.mxu0 %v493
    %2107 = vmatprep.subr.mxu0 0.0
    %2108 = vmatpush1.msra.mxu0 %v494
    %2109 = vmatprep.subr.mxu0 0.0
    %2110 = vmatpush1.msra.mxu0 %v495
    %2111 = vmatprep.subr.mxu0 0.0
    %2112 = vmatpush1.msra.mxu0 %v496
    %2113 = vmatprep.subr.mxu0 0.0
    %2114 = vmatpush1.msra.mxu0 %v497
    %2115 = vmatprep.subr.mxu0 0.0
    %2116 = vmatpush1.msra.mxu0 %v498
    %2117 = vmatprep.subr.mxu0 0.0
    %2118 = vmatpush1.msra.mxu0 %v499
    %2119 = vmatprep.subr.mxu0 0.0
    %2120 = vmatpush1.msra.mxu0 %v500
    %2121 = vmatprep.subr.mxu0 0.0
    %2122 = vmatpush1.msra.mxu0 %v501
    %2123 = vmatprep.subr.mxu0 0.0
    %2124 = vmatpush1.msra.mxu0 %v502
    %2125 = vmatprep.subr.mxu0 0.0
    %2126 = vmatpush1.msra.mxu0 %v503
    %2127 = vmatprep.subr.mxu0 0.0
    %2128 = vmatpush1.msra.mxu0 %v504
    %2129 = vmatprep.subr.mxu0 0.0
    %2130 = vmatpush1.msra.mxu0 %v505
    %2131 = vmatprep.subr.mxu0 0.0
    %2132 = vmatpush1.msra.mxu0 %v506
    %2133 = vmatprep.subr.mxu0 0.0
    %2134 = vmatpush1.msra.mxu0 %v507
    %2135 = vmatprep.subr.mxu0 0.0
    %2136 = vmatpush1.msra.mxu0 %v508
    %2137 = vmatprep.subr.mxu0 0.0
    %2138 = vmatpush1.msra.mxu0 %v509
    %2139 = vmatprep.mubr.f32.mxu0 %v1006
    %2140 = vmatmul.mubr.f32.gmra.mrb[0].mxu0 %v1004
    %v2141 = vpop.f32.mrb[0].mxu0
    %v2142 = vadd.f32 %v2072, %v2141
    %v2143 = vpop.f32.mrb[0].mxu0
    %2144 = vdwg.mxu0
    %2145 = vmatprep.subr.mxu0 0.0
    %2146 = vmatpush1.msra.mxu0 %v510
    %2147 = vmatprep.subr.mxu0 0.0
    %2148 = vmatpush1.msra.mxu0 %v511
    %2149 = vmatprep.subr.mxu0 0.0
    %2150 = vmatpush1.msra.mxu0 %v512
    %2151 = vmatprep.subr.mxu0 0.0
    %2152 = vmatpush1.msra.mxu0 %v513
    %2153 = vmatprep.subr.mxu0 0.0
    %2154 = vmatpush1.msra.mxu0 %v514
    %2155 = vmatprep.subr.mxu0 0.0
    %2156 = vmatpush1.msra.mxu0 %v515
    %2157 = vmatprep.subr.mxu0 0.0
    %2158 = vmatpush1.msra.mxu0 %v516
    %2159 = vmatprep.subr.mxu0 0.0
    %2160 = vmatpush1.msra.mxu0 %v517
    %2161 = vmatprep.subr.mxu0 0.0
    %2162 = vmatpush1.msra.mxu0 %v518
    %2163 = vmatprep.subr.mxu0 0.0
    %2164 = vmatpush1.msra.mxu0 %v519
    %2165 = vmatprep.subr.mxu0 0.0
    %2166 = vmatpush1.msra.mxu0 %v520
    %2167 = vmatprep.subr.mxu0 0.0
    %2168 = vmatpush1.msra.mxu0 %v521
    %2169 = vmatprep.subr.mxu0 0.0
    %2170 = vmatpush1.msra.mxu0 %v522
    %2171 = vmatprep.subr.mxu0 0.0
    %2172 = vmatpush1.msra.mxu0 %v523
    %2173 = vmatprep.subr.mxu0 0.0
    %2174 = vmatpush1.msra.mxu0 %v524
    %2175 = vmatprep.subr.mxu0 0.0
    %2176 = vmatpush1.msra.mxu0 %v525
    %2177 = vmatprep.subr.mxu0 0.0
    %2178 = vmatpush1.msra.mxu0 %v526
    %2179 = vmatprep.subr.mxu0 0.0
    %2180 = vmatpush1.msra.mxu0 %v527
    %2181 = vmatprep.subr.mxu0 0.0
    %2182 = vmatpush1.msra.mxu0 %v528
    %2183 = vmatprep.subr.mxu0 0.0
    %2184 = vmatpush1.msra.mxu0 %v529
    %2185 = vmatprep.subr.mxu0 0.0
    %2186 = vmatpush1.msra.mxu0 %v530
    %2187 = vmatprep.subr.mxu0 0.0
    %2188 = vmatpush1.msra.mxu0 %v531
    %2189 = vmatprep.subr.mxu0 0.0
    %2190 = vmatpush1.msra.mxu0 %v532
    %2191 = vmatprep.subr.mxu0 0.0
    %2192 = vmatpush1.msra.mxu0 %v533
    %2193 = vmatprep.subr.mxu0 0.0
    %2194 = vmatpush1.msra.mxu0 %v534
    %2195 = vmatprep.subr.mxu0 0.0
    %2196 = vmatpush1.msra.mxu0 %v535
    %2197 = vmatprep.subr.mxu0 0.0
    %2198 = vmatpush1.msra.mxu0 %v536
    %2199 = vmatprep.subr.mxu0 0.0
    %2200 = vmatpush1.msra.mxu0 %v537
    %2201 = vmatprep.subr.mxu0 0.0
    %2202 = vmatpush1.msra.mxu0 %v538
    %2203 = vmatprep.subr.mxu0 0.0
    %2204 = vmatpush1.msra.mxu0 %v539
    %2205 = vmatprep.subr.mxu0 0.0
    %2206 = vmatpush1.msra.mxu0 %v540
    %2207 = vmatprep.subr.mxu0 0.0
    %2208 = vmatpush1.msra.mxu0 %v541
    %2209 = vmatprep.mubr.f32.mxu0 %v1022
    %2210 = vmatmul.mubr.f32.gmra.mrb[0].mxu0 %v1014
    %v2211 = vpop.f32.mrb[0].mxu0
    %v2212 = vadd.f32 %v2142, %v2211
    %v2213 = vpop.f32.mrb[0].mxu0
    %2214 = vdwg.mxu0
    %2215 = vmatprep.subr.mxu0 0.0
    %2216 = vmatpush1.msra.mxu0 %v542
    %2217 = vmatprep.subr.mxu0 0.0
    %2218 = vmatpush1.msra.mxu0 %v543
    %2219 = vmatprep.subr.mxu0 0.0
    %2220 = vmatpush1.msra.mxu0 %v544
    %2221 = vmatprep.subr.mxu0 0.0
    %2222 = vmatpush1.msra.mxu0 %v545
    %2223 = vmatprep.subr.mxu0 0.0
    %2224 = vmatpush1.msra.mxu0 %v546
    %2225 = vmatprep.subr.mxu0 0.0
    %2226 = vmatpush1.msra.mxu0 %v547
    %2227 = vmatprep.subr.mxu0 0.0
    %2228 = vmatpush1.msra.mxu0 %v548
    %2229 = vmatprep.subr.mxu0 0.0
    %2230 = vmatpush1.msra.mxu0 %v549
    %2231 = vmatprep.subr.mxu0 0.0
    %2232 = vmatpush1.msra.mxu0 %v550
    %2233 = vmatprep.subr.mxu0 0.0
    %2234 = vmatpush1.msra.mxu0 %v551
    %2235 = vmatprep.subr.mxu0 0.0
    %2236 = vmatpush1.msra.mxu0 %v552
    %2237 = vmatprep.subr.mxu0 0.0
    %2238 = vmatpush1.msra.mxu0 %v553
    %2239 = vmatprep.subr.mxu0 0.0
    %2240 = vmatpush1.msra.mxu0 %v554
    %2241 = vmatprep.subr.mxu0 0.0
    %2242 = vmatpush1.msra.mxu0 %v555
    %2243 = vmatprep.subr.mxu0 0.0
    %2244 = vmatpush1.msra.mxu0 %v556
    %2245 = vmatprep.subr.mxu0 0.0
    %2246 = vmatpush1.msra.mxu0 %v557
    %2247 = vmatprep.subr.mxu0 0.0
    %2248 = vmatpush1.msra.mxu0 %v558
    %2249 = vmatprep.subr.mxu0 0.0
    %2250 = vmatpush1.msra.mxu0 %v559
    %2251 = vmatprep.subr.mxu0 0.0
    %2252 = vmatpush1.msra.mxu0 %v560
    %2253 = vmatprep.subr.mxu0 0.0
    %2254 = vmatpush1.msra.mxu0 %v561
    %2255 = vmatprep.subr.mxu0 0.0
    %2256 = vmatpush1.msra.mxu0 %v562
    %2257 = vmatprep.subr.mxu0 0.0
    %2258 = vmatpush1.msra.mxu0 %v563
    %2259 = vmatprep.subr.mxu0 0.0
    %2260 = vmatpush1.msra.mxu0 %v564
    %2261 = vmatprep.subr.mxu0 0.0
    %2262 = vmatpush1.msra.mxu0 %v565
    %2263 = vmatprep.subr.mxu0 0.0
    %2264 = vmatpush1.msra.mxu0 %v566
    %2265 = vmatprep.subr.mxu0 0.0
    %2266 = vmatpush1.msra.mxu0 %v567
    %2267 = vmatprep.subr.mxu0 0.0
    %2268 = vmatpush1.msra.mxu0 %v568
    %2269 = vmatprep.subr.mxu0 0.0
    %2270 = vmatpush1.msra.mxu0 %v569
    %2271 = vmatprep.subr.mxu0 0.0
    %2272 = vmatpush1.msra.mxu0 %v570
    %2273 = vmatprep.subr.mxu0 0.0
    %2274 = vmatpush1.msra.mxu0 %v571
    %2275 = vmatprep.subr.mxu0 0.0
    %2276 = vmatpush1.msra.mxu0 %v572
    %2277 = vmatprep.subr.mxu0 0.0
    %2278 = vmatpush1.msra.mxu0 %v573
    %2279 = vmatprep.mubr.f32.mxu0 %v1023
    %2280 = vmatmul.mubr.f32.gmra.mrb[0].mxu0 %v1021
    %v2281 = vpop.f32.mrb[0].mxu0
    %v2282 = vadd.f32 %v2212, %v2281
    %v2283 = vpop.f32.mrb[0].mxu0
    %2284 = vdwg.mxu0
    %2285 = vmatprep.subr.mxu0 0.0
    %2286 = vmatpush1.msra.mxu0 %v574
    %2287 = vmatprep.subr.mxu0 0.0
    %2288 = vmatpush1.msra.mxu0 %v575
    %2289 = vmatprep.subr.mxu0 0.0
    %2290 = vmatpush1.msra.mxu0 %v576
    %2291 = vmatprep.subr.mxu0 0.0
    %2292 = vmatpush1.msra.mxu0 %v577
    %2293 = vmatprep.subr.mxu0 0.0
    %2294 = vmatpush1.msra.mxu0 %v578
    %2295 = vmatprep.subr.mxu0 0.0
    %2296 = vmatpush1.msra.mxu0 %v579
    %2297 = vmatprep.subr.mxu0 0.0
    %2298 = vmatpush1.msra.mxu0 %v580
    %2299 = vmatprep.subr.mxu0 0.0
    %2300 = vmatpush1.msra.mxu0 %v581
    %2301 = vmatprep.subr.mxu0 0.0
    %2302 = vmatpush1.msra.mxu0 %v582
    %2303 = vmatprep.subr.mxu0 0.0
    %2304 = vmatpush1.msra.mxu0 %v583
    %2305 = vmatprep.subr.mxu0 0.0
    %2306 = vmatpush1.msra.mxu0 %v584
    %2307 = vmatprep.subr.mxu0 0.0
    %2308 = vmatpush1.msra.mxu0 %v585
    %2309 = vmatprep.subr.mxu0 0.0
    %2310 = vmatpush1.msra.mxu0 %v586
    %2311 = vmatprep.subr.mxu0 0.0
    %2312 = vmatpush1.msra.mxu0 %v587
    %2313 = vmatprep.subr.mxu0 0.0
    %2314 = vmatpush1.msra.mxu0 %v588
    %2315 = vmatprep.subr.mxu0 0.0
    %2316 = vmatpush1.msra.mxu0 %v589
    %2317 = vmatprep.subr.mxu0 0.0
    %2318 = vmatpush1.msra.mxu0 %v590
    %2319 = vmatprep.subr.mxu0 0.0
    %2320 = vmatpush1.msra.mxu0 %v591
    %2321 = vmatprep.subr.mxu0 0.0
    %2322 = vmatpush1.msra.mxu0 %v592
    %2323 = vmatprep.subr.mxu0 0.0
    %2324 = vmatpush1.msra.mxu0 %v593
    %2325 = vmatprep.subr.mxu0 0.0
    %2326 = vmatpush1.msra.mxu0 %v594
    %2327 = vmatprep.subr.mxu0 0.0
    %2328 = vmatpush1.msra.mxu0 %v595
    %2329 = vmatprep.subr.mxu0 0.0
    %2330 = vmatpush1.msra.mxu0 %v596
    %2331 = vmatprep.subr.mxu0 0.0
    %2332 = vmatpush1.msra.mxu0 %v597
    %2333 = vmatprep.subr.mxu0 0.0
    %2334 = vmatpush1.msra.mxu0 %v598
    %2335 = vmatprep.subr.mxu0 0.0
    %2336 = vmatpush1.msra.mxu0 %v599
    %2337 = vmatprep.subr.mxu0 0.0
    %2338 = vmatpush1.msra.mxu0 %v600
    %2339 = vmatprep.subr.mxu0 0.0
    %2340 = vmatpush1.msra.mxu0 %v601
    %2341 = vmatprep.subr.mxu0 0.0
    %2342 = vmatpush1.msra.mxu0 %v602
    %2343 = vmatprep.subr.mxu0 0.0
    %2344 = vmatpush1.msra.mxu0 %v603
    %2345 = vmatprep.subr.mxu0 0.0
    %2346 = vmatpush1.msra.mxu0 %v604
    %2347 = vmatprep.subr.mxu0 0.0
    %2348 = vmatpush1.msra.mxu0 %v605
    %2349 = vmatprep.mubr.f32.mxu0 %v1039
    %2350 = vmatmul.mubr.f32.gmra.mrb[0].mxu0 %v1031
    %v2351 = vpop.f32.mrb[0].mxu0
    %v2352 = vadd.f32 %v2282, %v2351
    %v2353 = vpop.f32.mrb[0].mxu0
    %2354 = vdwg.mxu0
    %2355 = vmatprep.subr.mxu0 0.0
    %2356 = vmatpush1.msra.mxu0 %v606
    %2357 = vmatprep.subr.mxu0 0.0
    %2358 = vmatpush1.msra.mxu0 %v607
    %2359 = vmatprep.subr.mxu0 0.0
    %2360 = vmatpush1.msra.mxu0 %v608
    %2361 = vmatprep.subr.mxu0 0.0
    %2362 = vmatpush1.msra.mxu0 %v609
    %2363 = vmatprep.subr.mxu0 0.0
    %2364 = vmatpush1.msra.mxu0 %v610
    %2365 = vmatprep.subr.mxu0 0.0
    %2366 = vmatpush1.msra.mxu0 %v611
    %2367 = vmatprep.subr.mxu0 0.0
    %2368 = vmatpush1.msra.mxu0 %v612
    %2369 = vmatprep.subr.mxu0 0.0
    %2370 = vmatpush1.msra.mxu0 %v613
    %2371 = vmatprep.subr.mxu0 0.0
    %2372 = vmatpush1.msra.mxu0 %v614
    %2373 = vmatprep.subr.mxu0 0.0
    %2374 = vmatpush1.msra.mxu0 %v615
    %2375 = vmatprep.subr.mxu0 0.0
    %2376 = vmatpush1.msra.mxu0 %v616
    %2377 = vmatprep.subr.mxu0 0.0
    %2378 = vmatpush1.msra.mxu0 %v617
    %2379 = vmatprep.subr.mxu0 0.0
    %2380 = vmatpush1.msra.mxu0 %v618
    %2381 = vmatprep.subr.mxu0 0.0
    %2382 = vmatpush1.msra.mxu0 %v619
    %2383 = vmatprep.subr.mxu0 0.0
    %2384 = vmatpush1.msra.mxu0 %v620
    %2385 = vmatprep.subr.mxu0 0.0
    %2386 = vmatpush1.msra.mxu0 %v621
    %2387 = vmatprep.subr.mxu0 0.0
    %2388 = vmatpush1.msra.mxu0 %v622
    %2389 = vmatprep.subr.mxu0 0.0
    %2390 = vmatpush1.msra.mxu0 %v623
    %2391 = vmatprep.subr.mxu0 0.0
    %2392 = vmatpush1.msra.mxu0 %v624
    %2393 = vmatprep.subr.mxu0 0.0
    %2394 = vmatpush1.msra.mxu0 %v625
    %2395 = vmatprep.subr.mxu0 0.0
    %2396 = vmatpush1.msra.mxu0 %v626
    %2397 = vmatprep.subr.mxu0 0.0
    %2398 = vmatpush1.msra.mxu0 %v627
    %2399 = vmatprep.subr.mxu0 0.0
    %2400 = vmatpush1.msra.mxu0 %v628
    %2401 = vmatprep.subr.mxu0 0.0
    %2402 = vmatpush1.msra.mxu0 %v629
    %2403 = vmatprep.subr.mxu0 0.0
    %2404 = vmatpush1.msra.mxu0 %v630
    %2405 = vmatprep.subr.mxu0 0.0
    %2406 = vmatpush1.msra.mxu0 %v631
    %2407 = vmatprep.subr.mxu0 0.0
    %2408 = vmatpush1.msra.mxu0 %v632
    %2409 = vmatprep.subr.mxu0 0.0
    %2410 = vmatpush1.msra.mxu0 %v633
    %2411 = vmatprep.subr.mxu0 0.0
    %2412 = vmatpush1.msra.mxu0 %v634
    %2413 = vmatprep.subr.mxu0 0.0
    %2414 = vmatpush1.msra.mxu0 %v635
    %2415 = vmatprep.subr.mxu0 0.0
    %2416 = vmatpush1.msra.mxu0 %v636
    %2417 = vmatprep.subr.mxu0 0.0
    %2418 = vmatpush1.msra.mxu0 %v637
    %2419 = vmatprep.mubr.f32.mxu0 %v1040
    %2420 = vmatmul.mubr.f32.gmra.mrb[0].mxu0 %v1038
    %v2421 = vpop.f32.mrb[0].mxu0
    %v2422 = vadd.f32 %v2352, %v2421
    %v2423 = vpop.f32.mrb[0].mxu0
    %2424 = vdwg.mxu0
    %2425 = vmatprep.subr.mxu0 0.0
    %2426 = vmatpush1.msra.mxu0 %v638
    %2427 = vmatprep.subr.mxu0 0.0
    %2428 = vmatpush1.msra.mxu0 %v639
    %2429 = vmatprep.subr.mxu0 0.0
    %2430 = vmatpush1.msra.mxu0 %v640
    %2431 = vmatprep.subr.mxu0 0.0
    %2432 = vmatpush1.msra.mxu0 %v641
    %2433 = vmatprep.subr.mxu0 0.0
    %2434 = vmatpush1.msra.mxu0 %v642
    %2435 = vmatprep.subr.mxu0 0.0
    %2436 = vmatpush1.msra.mxu0 %v643
    %2437 = vmatprep.subr.mxu0 0.0
    %2438 = vmatpush1.msra.mxu0 %v644
    %2439 = vmatprep.subr.mxu0 0.0
    %2440 = vmatpush1.msra.mxu0 %v645
    %2441 = vmatprep.subr.mxu0 0.0
    %2442 = vmatpush1.msra.mxu0 %v646
    %2443 = vmatprep.subr.mxu0 0.0
    %2444 = vmatpush1.msra.mxu0 %v647
    %2445 = vmatprep.subr.mxu0 0.0
    %2446 = vmatpush1.msra.mxu0 %v648
    %2447 = vmatprep.subr.mxu0 0.0
    %2448 = vmatpush1.msra.mxu0 %v649
    %2449 = vmatprep.subr.mxu0 0.0
    %2450 = vmatpush1.msra.mxu0 %v650
    %2451 = vmatprep.subr.mxu0 0.0
    %2452 = vmatpush1.msra.mxu0 %v651
    %2453 = vmatprep.subr.mxu0 0.0
    %2454 = vmatpush1.msra.mxu0 %v652
    %2455 = vmatprep.subr.mxu0 0.0
    %2456 = vmatpush1.msra.mxu0 %v653
    %2457 = vmatprep.subr.mxu0 0.0
    %2458 = vmatpush1.msra.mxu0 %v654
    %2459 = vmatprep.subr.mxu0 0.0
    %2460 = vmatpush1.msra.mxu0 %v655
    %2461 = vmatprep.subr.mxu0 0.0
    %2462 = vmatpush1.msra.mxu0 %v656
    %2463 = vmatprep.subr.mxu0 0.0
    %2464 = vmatpush1.msra.mxu0 %v657
    %2465 = vmatprep.subr.mxu0 0.0
    %2466 = vmatpush1.msra.mxu0 %v658
    %2467 = vmatprep.subr.mxu0 0.0
    %2468 = vmatpush1.msra.mxu0 %v659
    %2469 = vmatprep.subr.mxu0 0.0
    %2470 = vmatpush1.msra.mxu0 %v660
    %2471 = vmatprep.subr.mxu0 0.0
    %2472 = vmatpush1.msra.mxu0 %v661
    %2473 = vmatprep.subr.mxu0 0.0
    %2474 = vmatpush1.msra.mxu0 %v662
    %2475 = vmatprep.subr.mxu0 0.0
    %2476 = vmatpush1.msra.mxu0 %v663
    %2477 = vmatprep.subr.mxu0 0.0
    %2478 = vmatpush1.msra.mxu0 %v664
    %2479 = vmatprep.subr.mxu0 0.0
    %2480 = vmatpush1.msra.mxu0 %v665
    %2481 = vmatprep.subr.mxu0 0.0
    %2482 = vmatpush1.msra.mxu0 %v666
    %2483 = vmatprep.subr.mxu0 0.0
    %2484 = vmatpush1.msra.mxu0 %v667
    %2485 = vmatprep.subr.mxu0 0.0
    %2486 = vmatpush1.msra.mxu0 %v668
    %2487 = vmatprep.subr.mxu0 0.0
    %2488 = vmatpush1.msra.mxu0 %v669
    %2489 = vmatprep.mubr.f32.mxu0 %v1056
    %2490 = vmatmul.mubr.f32.gmra.mrb[0].mxu0 %v1048
    %v2491 = vpop.f32.mrb[0].mxu0
    %v2492 = vadd.f32 %v2422, %v2491
    %v2493 = vpop.f32.mrb[0].mxu0
    %2494 = vdwg.mxu0
    %2495 = vmatprep.subr.mxu0 0.0
    %2496 = vmatpush1.msra.mxu0 %v670
    %2497 = vmatprep.subr.mxu0 0.0
    %2498 = vmatpush1.msra.mxu0 %v671
    %2499 = vmatprep.subr.mxu0 0.0
    %2500 = vmatpush1.msra.mxu0 %v672
    %2501 = vmatprep.subr.mxu0 0.0
    %2502 = vmatpush1.msra.mxu0 %v673
    %2503 = vmatprep.subr.mxu0 0.0
    %2504 = vmatpush1.msra.mxu0 %v674
    %2505 = vmatprep.subr.mxu0 0.0
    %2506 = vmatpush1.msra.mxu0 %v675
    %2507 = vmatprep.subr.mxu0 0.0
    %2508 = vmatpush1.msra.mxu0 %v676
    %2509 = vmatprep.subr.mxu0 0.0
    %2510 = vmatpush1.msra.mxu0 %v677
    %2511 = vmatprep.subr.mxu0 0.0
    %2512 = vmatpush1.msra.mxu0 %v678
    %2513 = vmatprep.subr.mxu0 0.0
    %2514 = vmatpush1.msra.mxu0 %v679
    %2515 = vmatprep.subr.mxu0 0.0
    %2516 = vmatpush1.msra.mxu0 %v680
    %2517 = vmatprep.subr.mxu0 0.0
    %2518 = vmatpush1.msra.mxu0 %v681
    %2519 = vmatprep.subr.mxu0 0.0
    %2520 = vmatpush1.msra.mxu0 %v682
    %2521 = vmatprep.subr.mxu0 0.0
    %2522 = vmatpush1.msra.mxu0 %v683
    %2523 = vmatprep.subr.mxu0 0.0
    %2524 = vmatpush1.msra.mxu0 %v684
    %2525 = vmatprep.subr.mxu0 0.0
    %2526 = vmatpush1.msra.mxu0 %v685
    %2527 = vmatprep.subr.mxu0 0.0
    %2528 = vmatpush1.msra.mxu0 %v686
    %2529 = vmatprep.subr.mxu0 0.0
    %2530 = vmatpush1.msra.mxu0 %v687
    %2531 = vmatprep.subr.mxu0 0.0
    %2532 = vmatpush1.msra.mxu0 %v688
    %2533 = vmatprep.subr.mxu0 0.0
    %2534 = vmatpush1.msra.mxu0 %v689
    %2535 = vmatprep.subr.mxu0 0.0
    %2536 = vmatpush1.msra.mxu0 %v690
    %2537 = vmatprep.subr.mxu0 0.0
    %2538 = vmatpush1.msra.mxu0 %v691
    %2539 = vmatprep.subr.mxu0 0.0
    %2540 = vmatpush1.msra.mxu0 %v692
    %2541 = vmatprep.subr.mxu0 0.0
    %2542 = vmatpush1.msra.mxu0 %v693
    %2543 = vmatprep.subr.mxu0 0.0
    %2544 = vmatpush1.msra.mxu0 %v694
    %2545 = vmatprep.subr.mxu0 0.0
    %2546 = vmatpush1.msra.mxu0 %v695
    %2547 = vmatprep.subr.mxu0 0.0
    %2548 = vmatpush1.msra.mxu0 %v696
    %2549 = vmatprep.subr.mxu0 0.0
    %2550 = vmatpush1.msra.mxu0 %v697
    %2551 = vmatprep.subr.mxu0 0.0
    %2552 = vmatpush1.msra.mxu0 %v698
    %2553 = vmatprep.subr.mxu0 0.0
    %2554 = vmatpush1.msra.mxu0 %v699
    %2555 = vmatprep.subr.mxu0 0.0
    %2556 = vmatpush1.msra.mxu0 %v700
    %2557 = vmatprep.subr.mxu0 0.0
    %2558 = vmatpush1.msra.mxu0 %v701
    %2559 = vmatprep.mubr.f32.mxu0 %v1057
    %2560 = vmatmul.mubr.f32.gmra.mrb[0].mxu0 %v1055
    %v2561 = vpop.f32.mrb[0].mxu0
    %v2562 = vadd.f32 %v2492, %v2561
    %v2563 = vpop.f32.mrb[0].mxu0
    %2564 = vdwg.mxu0
    %2565 = vmatprep.subr.mxu0 0.0
    %2566 = vmatpush1.msra.mxu0 %v702
    %2567 = vmatprep.subr.mxu0 0.0
    %2568 = vmatpush1.msra.mxu0 %v703
    %2569 = vmatprep.subr.mxu0 0.0
    %2570 = vmatpush1.msra.mxu0 %v704
    %2571 = vmatprep.subr.mxu0 0.0
    %2572 = vmatpush1.msra.mxu0 %v705
    %2573 = vmatprep.subr.mxu0 0.0
    %2574 = vmatpush1.msra.mxu0 %v706
    %2575 = vmatprep.subr.mxu0 0.0
    %2576 = vmatpush1.msra.mxu0 %v707
    %2577 = vmatprep.subr.mxu0 0.0
    %2578 = vmatpush1.msra.mxu0 %v708
    %2579 = vmatprep.subr.mxu0 0.0
    %2580 = vmatpush1.msra.mxu0 %v709
    %2581 = vmatprep.subr.mxu0 0.0
    %2582 = vmatpush1.msra.mxu0 %v710
    %2583 = vmatprep.subr.mxu0 0.0
    %2584 = vmatpush1.msra.mxu0 %v711
    %2585 = vmatprep.subr.mxu0 0.0
    %2586 = vmatpush1.msra.mxu0 %v712
    %2587 = vmatprep.subr.mxu0 0.0
    %2588 = vmatpush1.msra.mxu0 %v713
    %2589 = vmatprep.subr.mxu0 0.0
    %2590 = vmatpush1.msra.mxu0 %v714
    %2591 = vmatprep.subr.mxu0 0.0
    %2592 = vmatpush1.msra.mxu0 %v715
    %2593 = vmatprep.subr.mxu0 0.0
    %2594 = vmatpush1.msra.mxu0 %v716
    %2595 = vmatprep.subr.mxu0 0.0
    %2596 = vmatpush1.msra.mxu0 %v717
    %2597 = vmatprep.subr.mxu0 0.0
    %2598 = vmatpush1.msra.mxu0 %v718
    %2599 = vmatprep.subr.mxu0 0.0
    %2600 = vmatpush1.msra.mxu0 %v719
    %2601 = vmatprep.subr.mxu0 0.0
    %2602 = vmatpush1.msra.mxu0 %v720
    %2603 = vmatprep.subr.mxu0 0.0
    %2604 = vmatpush1.msra.mxu0 %v721
    %2605 = vmatprep.subr.mxu0 0.0
    %2606 = vmatpush1.msra.mxu0 %v722
    %2607 = vmatprep.subr.mxu0 0.0
    %2608 = vmatpush1.msra.mxu0 %v723
    %2609 = vmatprep.subr.mxu0 0.0
    %2610 = vmatpush1.msra.mxu0 %v724
    %2611 = vmatprep.subr.mxu0 0.0
    %2612 = vmatpush1.msra.mxu0 %v725
    %2613 = vmatprep.subr.mxu0 0.0
    %2614 = vmatpush1.msra.mxu0 %v726
    %2615 = vmatprep.subr.mxu0 0.0
    %2616 = vmatpush1.msra.mxu0 %v727
    %2617 = vmatprep.subr.mxu0 0.0
    %2618 = vmatpush1.msra.mxu0 %v728
    %2619 = vmatprep.subr.mxu0 0.0
    %2620 = vmatpush1.msra.mxu0 %v729
    %2621 = vmatprep.subr.mxu0 0.0
    %2622 = vmatpush1.msra.mxu0 %v730
    %2623 = vmatprep.subr.mxu0 0.0
    %2624 = vmatpush1.msra.mxu0 %v731
    %2625 = vmatprep.subr.mxu0 0.0
    %2626 = vmatpush1.msra.mxu0 %v732
    %2627 = vmatprep.subr.mxu0 0.0
    %2628 = vmatpush1.msra.mxu0 %v733
    %2629 = vmatprep.mubr.f32.mxu0 %v1073
    %2630 = vmatmul.mubr.f32.gmra.mrb[0].mxu0 %v1065
    %v2631 = vpop.f32.mrb[0].mxu0
    %v2632 = vadd.f32 %v2562, %v2631
    %v2633 = vpop.f32.mrb[0].mxu0
    %2634 = vdwg.mxu0
    %2635 = vmatprep.subr.mxu0 0.0
    %2636 = vmatpush1.msra.mxu0 %v734
    %2637 = vmatprep.subr.mxu0 0.0
    %2638 = vmatpush1.msra.mxu0 %v735
    %2639 = vmatprep.subr.mxu0 0.0
    %2640 = vmatpush1.msra.mxu0 %v736
    %2641 = vmatprep.subr.mxu0 0.0
    %2642 = vmatpush1.msra.mxu0 %v737
    %2643 = vmatprep.subr.mxu0 0.0
    %2644 = vmatpush1.msra.mxu0 %v738
    %2645 = vmatprep.subr.mxu0 0.0
    %2646 = vmatpush1.msra.mxu0 %v739
    %2647 = vmatprep.subr.mxu0 0.0
    %2648 = vmatpush1.msra.mxu0 %v740
    %2649 = vmatprep.subr.mxu0 0.0
    %2650 = vmatpush1.msra.mxu0 %v741
    %2651 = vmatprep.subr.mxu0 0.0
    %2652 = vmatpush1.msra.mxu0 %v742
    %2653 = vmatprep.subr.mxu0 0.0
    %2654 = vmatpush1.msra.mxu0 %v743
    %2655 = vmatprep.subr.mxu0 0.0
    %2656 = vmatpush1.msra.mxu0 %v744
    %2657 = vmatprep.subr.mxu0 0.0
    %2658 = vmatpush1.msra.mxu0 %v745
    %2659 = vmatprep.subr.mxu0 0.0
    %2660 = vmatpush1.msra.mxu0 %v746
    %2661 = vmatprep.subr.mxu0 0.0
    %2662 = vmatpush1.msra.mxu0 %v747
    %2663 = vmatprep.subr.mxu0 0.0
    %2664 = vmatpush1.msra.mxu0 %v748
    %2665 = vmatprep.subr.mxu0 0.0
    %2666 = vmatpush1.msra.mxu0 %v749
    %2667 = vmatprep.subr.mxu0 0.0
    %2668 = vmatpush1.msra.mxu0 %v750
    %2669 = vmatprep.subr.mxu0 0.0
    %2670 = vmatpush1.msra.mxu0 %v751
    %2671 = vmatprep.subr.mxu0 0.0
    %2672 = vmatpush1.msra.mxu0 %v752
    %2673 = vmatprep.subr.mxu0 0.0
    %2674 = vmatpush1.msra.mxu0 %v753
    %2675 = vmatprep.subr.mxu0 0.0
    %2676 = vmatpush1.msra.mxu0 %v754
    %2677 = vmatprep.subr.mxu0 0.0
    %2678 = vmatpush1.msra.mxu0 %v755
    %2679 = vmatprep.subr.mxu0 0.0
    %2680 = vmatpush1.msra.mxu0 %v756
    %2681 = vmatprep.subr.mxu0 0.0
    %2682 = vmatpush1.msra.mxu0 %v757
    %2683 = vmatprep.subr.mxu0 0.0
    %2684 = vmatpush1.msra.mxu0 %v758
    %2685 = vmatprep.subr.mxu0 0.0
    %2686 = vmatpush1.msra.mxu0 %v759
    %2687 = vmatprep.subr.mxu0 0.0
    %2688 = vmatpush1.msra.mxu0 %v760
    %2689 = vmatprep.subr.mxu0 0.0
    %2690 = vmatpush1.msra.mxu0 %v761
    %2691 = vmatprep.subr.mxu0 0.0
    %2692 = vmatpush1.msra.mxu0 %v762
    %2693 = vmatprep.subr.mxu0 0.0
    %2694 = vmatpush1.msra.mxu0 %v763
    %2695 = vmatprep.subr.mxu0 0.0
    %2696 = vmatpush1.msra.mxu0 %v764
    %2697 = vmatprep.subr.mxu0 0.0
    %2698 = vmatpush1.msra.mxu0 %v765
    %2699 = vmatprep.mubr.f32.mxu0 %v1074
    %2700 = vmatmul.mubr.f32.gmra.mrb[0].mxu0 %v1072
    %v2701 = vpop.f32.mrb[0].mxu0
    %v2702 = vadd.f32 %v2632, %v2701
    %v2703 = vpop.f32.mrb[0].mxu0
    %2704 = vdwg.mxu0
    %2705 = vmatprep.subr.mxu0 0.0
    %2706 = vmatpush1.msra.mxu0 %v766
    %2707 = vmatprep.subr.mxu0 0.0
    %2708 = vmatpush1.msra.mxu0 %v767
    %2709 = vmatprep.subr.mxu0 0.0
    %2710 = vmatpush1.msra.mxu0 %v768
    %2711 = vmatprep.subr.mxu0 0.0
    %2712 = vmatpush1.msra.mxu0 %v769
    %2713 = vmatprep.subr.mxu0 0.0
    %2714 = vmatpush1.msra.mxu0 %v770
    %2715 = vmatprep.subr.mxu0 0.0
    %2716 = vmatpush1.msra.mxu0 %v771
    %2717 = vmatprep.subr.mxu0 0.0
    %2718 = vmatpush1.msra.mxu0 %v772
    %2719 = vmatprep.subr.mxu0 0.0
    %2720 = vmatpush1.msra.mxu0 %v773
    %2721 = vmatprep.subr.mxu0 0.0
    %2722 = vmatpush1.msra.mxu0 %v774
    %2723 = vmatprep.subr.mxu0 0.0
    %2724 = vmatpush1.msra.mxu0 %v775
    %2725 = vmatprep.subr.mxu0 0.0
    %2726 = vmatpush1.msra.mxu0 %v776
    %2727 = vmatprep.subr.mxu0 0.0
    %2728 = vmatpush1.msra.mxu0 %v777
    %2729 = vmatprep.subr.mxu0 0.0
    %2730 = vmatpush1.msra.mxu0 %v778
    %2731 = vmatprep.subr.mxu0 0.0
    %2732 = vmatpush1.msra.mxu0 %v779
    %2733 = vmatprep.subr.mxu0 0.0
    %2734 = vmatpush1.msra.mxu0 %v780
    %2735 = vmatprep.subr.mxu0 0.0
    %2736 = vmatpush1.msra.mxu0 %v781
    %2737 = vmatprep.subr.mxu0 0.0
    %2738 = vmatpush1.msra.mxu0 %v782
    %2739 = vmatprep.subr.mxu0 0.0
    %2740 = vmatpush1.msra.mxu0 %v783
    %2741 = vmatprep.subr.mxu0 0.0
    %2742 = vmatpush1.msra.mxu0 %v784
    %2743 = vmatprep.subr.mxu0 0.0
    %2744 = vmatpush1.msra.mxu0 %v785
    %2745 = vmatprep.subr.mxu0 0.0
    %2746 = vmatpush1.msra.mxu0 %v786
    %2747 = vmatprep.subr.mxu0 0.0
    %2748 = vmatpush1.msra.mxu0 %v787
    %2749 = vmatprep.subr.mxu0 0.0
    %2750 = vmatpush1.msra.mxu0 %v788
    %2751 = vmatprep.subr.mxu0 0.0
    %2752 = vmatpush1.msra.mxu0 %v789
    %2753 = vmatprep.subr.mxu0 0.0
    %2754 = vmatpush1.msra.mxu0 %v790
    %2755 = vmatprep.subr.mxu0 0.0
    %2756 = vmatpush1.msra.mxu0 %v791
    %2757 = vmatprep.subr.mxu0 0.0
    %2758 = vmatpush1.msra.mxu0 %v792
    %2759 = vmatprep.subr.mxu0 0.0
    %2760 = vmatpush1.msra.mxu0 %v793
    %2761 = vmatprep.subr.mxu0 0.0
    %2762 = vmatpush1.msra.mxu0 %v794
    %2763 = vmatprep.subr.mxu0 0.0
    %2764 = vmatpush1.msra.mxu0 %v795
    %2765 = vmatprep.subr.mxu0 0.0
    %2766 = vmatpush1.msra.mxu0 %v796
    %2767 = vmatprep.subr.mxu0 0.0
    %2768 = vmatpush1.msra.mxu0 %v797
    %2769 = vmatprep.mubr.f32.mxu0 %v1090
    %2770 = vmatmul.mubr.f32.gmra.mrb[0].mxu0 %v1082
    %v2771 = vpop.f32.mrb[0].mxu0
    %v2772 = vadd.f32 %v2702, %v2771
    %v2773 = vpop.f32.mrb[0].mxu0
    %2774 = vdwg.mxu0
    %2775 = vmatprep.subr.mxu0 0.0
    %2776 = vmatpush1.msra.mxu0 %v798
    %2777 = vmatprep.subr.mxu0 0.0
    %2778 = vmatpush1.msra.mxu0 %v799
    %2779 = vmatprep.subr.mxu0 0.0
    %2780 = vmatpush1.msra.mxu0 %v800
    %2781 = vmatprep.subr.mxu0 0.0
    %2782 = vmatpush1.msra.mxu0 %v801
    %2783 = vmatprep.subr.mxu0 0.0
    %2784 = vmatpush1.msra.mxu0 %v802
    %2785 = vmatprep.subr.mxu0 0.0
    %2786 = vmatpush1.msra.mxu0 %v803
    %2787 = vmatprep.subr.mxu0 0.0
    %2788 = vmatpush1.msra.mxu0 %v804
    %2789 = vmatprep.subr.mxu0 0.0
    %2790 = vmatpush1.msra.mxu0 %v805
    %2791 = vmatprep.subr.mxu0 0.0
    %2792 = vmatpush1.msra.mxu0 %v806
    %2793 = vmatprep.subr.mxu0 0.0
    %2794 = vmatpush1.msra.mxu0 %v807
    %2795 = vmatprep.subr.mxu0 0.0
    %2796 = vmatpush1.msra.mxu0 %v808
    %2797 = vmatprep.subr.mxu0 0.0
    %2798 = vmatpush1.msra.mxu0 %v809
    %2799 = vmatprep.subr.mxu0 0.0
    %2800 = vmatpush1.msra.mxu0 %v810
    %2801 = vmatprep.subr.mxu0 0.0
    %2802 = vmatpush1.msra.mxu0 %v811
    %2803 = vmatprep.subr.mxu0 0.0
    %2804 = vmatpush1.msra.mxu0 %v812
    %2805 = vmatprep.subr.mxu0 0.0
    %2806 = vmatpush1.msra.mxu0 %v813
    %2807 = vmatprep.subr.mxu0 0.0
    %2808 = vmatpush1.msra.mxu0 %v814
    %2809 = vmatprep.subr.mxu0 0.0
    %2810 = vmatpush1.msra.mxu0 %v815
    %2811 = vmatprep.subr.mxu0 0.0
    %2812 = vmatpush1.msra.mxu0 %v816
    %2813 = vmatprep.subr.mxu0 0.0
    %2814 = vmatpush1.msra.mxu0 %v817
    %2815 = vmatprep.subr.mxu0 0.0
    %2816 = vmatpush1.msra.mxu0 %v818
    %2817 = vmatprep.subr.mxu0 0.0
    %2818 = vmatpush1.msra.mxu0 %v819
    %2819 = vmatprep.subr.mxu0 0.0
    %2820 = vmatpush1.msra.mxu0 %v820
    %2821 = vmatprep.subr.mxu0 0.0
    %2822 = vmatpush1.msra.mxu0 %v821
    %2823 = vmatprep.subr.mxu0 0.0
    %2824 = vmatpush1.msra.mxu0 %v822
    %2825 = vmatprep.subr.mxu0 0.0
    %2826 = vmatpush1.msra.mxu0 %v823
    %2827 = vmatprep.subr.mxu0 0.0
    %2828 = vmatpush1.msra.mxu0 %v824
    %2829 = vmatprep.subr.mxu0 0.0
    %2830 = vmatpush1.msra.mxu0 %v825
    %2831 = vmatprep.subr.mxu0 0.0
    %2832 = vmatpush1.msra.mxu0 %v826
    %2833 = vmatprep.subr.mxu0 0.0
    %2834 = vmatpush1.msra.mxu0 %v827
    %2835 = vmatprep.subr.mxu0 0.0
    %2836 = vmatpush1.msra.mxu0 %v828
    %2837 = vmatprep.subr.mxu0 0.0
    %2838 = vmatpush1.msra.mxu0 %v829
    %2839 = vmatprep.mubr.f32.mxu0 %v1091
    %2840 = vmatmul.mubr.f32.gmra.mrb[0].mxu0 %v1089
    %v2841 = vpop.f32.mrb[0].mxu0
    %v2842 = vadd.f32 %v2772, %v2841
    %v2843 = vpop.f32.mrb[0].mxu0
    %2844 = vdwg.mxu0
    %2845 = vmatprep.subr.mxu0 0.0
    %2846 = vmatpush1.msra.mxu0 %v830
    %2847 = vmatprep.subr.mxu0 0.0
    %2848 = vmatpush1.msra.mxu0 %v831
    %2849 = vmatprep.subr.mxu0 0.0
    %2850 = vmatpush1.msra.mxu0 %v832
    %2851 = vmatprep.subr.mxu0 0.0
    %2852 = vmatpush1.msra.mxu0 %v833
    %2853 = vmatprep.subr.mxu0 0.0
    %2854 = vmatpush1.msra.mxu0 %v834
    %2855 = vmatprep.subr.mxu0 0.0
    %2856 = vmatpush1.msra.mxu0 %v835
    %2857 = vmatprep.subr.mxu0 0.0
    %2858 = vmatpush1.msra.mxu0 %v836
    %2859 = vmatprep.subr.mxu0 0.0
    %2860 = vmatpush1.msra.mxu0 %v837
    %2861 = vmatprep.subr.mxu0 0.0
    %2862 = vmatpush1.msra.mxu0 %v838
    %2863 = vmatprep.subr.mxu0 0.0
    %2864 = vmatpush1.msra.mxu0 %v839
    %2865 = vmatprep.subr.mxu0 0.0
    %2866 = vmatpush1.msra.mxu0 %v840
    %2867 = vmatprep.subr.mxu0 0.0
    %2868 = vmatpush1.msra.mxu0 %v841
    %2869 = vmatprep.subr.mxu0 0.0
    %2870 = vmatpush1.msra.mxu0 %v842
    %2871 = vmatprep.subr.mxu0 0.0
    %2872 = vmatpush1.msra.mxu0 %v843
    %2873 = vmatprep.subr.mxu0 0.0
    %2874 = vmatpush1.msra.mxu0 %v844
    %2875 = vmatprep.subr.mxu0 0.0
    %2876 = vmatpush1.msra.mxu0 %v845
    %2877 = vmatprep.subr.mxu0 0.0
    %2878 = vmatpush1.msra.mxu0 %v846
    %2879 = vmatprep.subr.mxu0 0.0
    %2880 = vmatpush1.msra.mxu0 %v847
    %2881 = vmatprep.subr.mxu0 0.0
    %2882 = vmatpush1.msra.mxu0 %v848
    %2883 = vmatprep.subr.mxu0 0.0
    %2884 = vmatpush1.msra.mxu0 %v849
    %2885 = vmatprep.subr.mxu0 0.0
    %2886 = vmatpush1.msra.mxu0 %v850
    %2887 = vmatprep.subr.mxu0 0.0
    %2888 = vmatpush1.msra.mxu0 %v851
    %2889 = vmatprep.subr.mxu0 0.0
    %2890 = vmatpush1.msra.mxu0 %v852
    %2891 = vmatprep.subr.mxu0 0.0
    %2892 = vmatpush1.msra.mxu0 %v853
    %2893 = vmatprep.subr.mxu0 0.0
    %2894 = vmatpush1.msra.mxu0 %v854
    %2895 = vmatprep.subr.mxu0 0.0
    %2896 = vmatpush1.msra.mxu0 %v855
    %2897 = vmatprep.subr.mxu0 0.0
    %2898 = vmatpush1.msra.mxu0 %v856
    %2899 = vmatprep.subr.mxu0 0.0
    %2900 = vmatpush1.msra.mxu0 %v857
    %2901 = vmatprep.subr.mxu0 0.0
    %2902 = vmatpush1.msra.mxu0 %v858
    %2903 = vmatprep.subr.mxu0 0.0
    %2904 = vmatpush1.msra.mxu0 %v859
    %2905 = vmatprep.subr.mxu0 0.0
    %2906 = vmatpush1.msra.mxu0 %v860
    %2907 = vmatprep.subr.mxu0 0.0
    %2908 = vmatpush1.msra.mxu0 %v861
    %2909 = vmatprep.mubr.f32.mxu0 %v1107
    %2910 = vmatmul.mubr.f32.gmra.mrb[0].mxu0 %v1099
    %v2911 = vpop.f32.mrb[0].mxu0
    %v2912 = vadd.f32 %v2842, %v2911
    %v2913 = vpop.f32.mrb[0].mxu0
    %2914 = vdwg.mxu0
    %2915 = vmatprep.subr.mxu0 0.0
    %2916 = vmatpush1.msra.mxu0 %v862
    %2917 = vmatprep.subr.mxu0 0.0
    %2918 = vmatpush1.msra.mxu0 %v863
    %2919 = vmatprep.subr.mxu0 0.0
    %2920 = vmatpush1.msra.mxu0 %v864
    %2921 = vmatprep.subr.mxu0 0.0
    %2922 = vmatpush1.msra.mxu0 %v865
    %2923 = vmatprep.subr.mxu0 0.0
    %2924 = vmatpush1.msra.mxu0 %v866
    %2925 = vmatprep.subr.mxu0 0.0
    %2926 = vmatpush1.msra.mxu0 %v867
    %2927 = vmatprep.subr.mxu0 0.0
    %2928 = vmatpush1.msra.mxu0 %v868
    %2929 = vmatprep.subr.mxu0 0.0
    %2930 = vmatpush1.msra.mxu0 %v869
    %2931 = vmatprep.subr.mxu0 0.0
    %2932 = vmatpush1.msra.mxu0 %v870
    %2933 = vmatprep.subr.mxu0 0.0
    %2934 = vmatpush1.msra.mxu0 %v871
    %2935 = vmatprep.subr.mxu0 0.0
    %2936 = vmatpush1.msra.mxu0 %v872
    %2937 = vmatprep.subr.mxu0 0.0
    %2938 = vmatpush1.msra.mxu0 %v873
    %2939 = vmatprep.subr.mxu0 0.0
    %2940 = vmatpush1.msra.mxu0 %v1163
    %2941 = vmatprep.subr.mxu0 0.0
    %2942 = vmatpush1.msra.mxu0 0.0
    %2943 = vmatprep.subr.mxu0 0.0
    %2944 = vmatpush1.msra.mxu0 0.0
    %2945 = vmatprep.subr.mxu0 0.0
    %2946 = vmatpush1.msra.mxu0 0.0
    %2947 = vmatprep.subr.mxu0 0.0
    %2948 = vmatpush1.msra.mxu0 0.0
    %2949 = vmatprep.subr.mxu0 0.0
    %2950 = vmatpush1.msra.mxu0 0.0
    %2951 = vmatprep.subr.mxu0 0.0
    %2952 = vmatpush1.msra.mxu0 0.0
    %2953 = vmatprep.subr.mxu0 0.0
    %2954 = vmatpush1.msra.mxu0 0.0
    %2955 = vmatprep.subr.mxu0 0.0
    %2956 = vmatpush1.msra.mxu0 0.0
    %2957 = vmatprep.subr.mxu0 0.0
    %2958 = vmatpush1.msra.mxu0 0.0
    %2959 = vmatprep.subr.mxu0 0.0
    %2960 = vmatpush1.msra.mxu0 0.0
    %2961 = vmatprep.subr.mxu0 0.0
    %2962 = vmatpush1.msra.mxu0 0.0
    %2963 = vmatprep.subr.mxu0 0.0
    %2964 = vmatpush1.msra.mxu0 0.0
    %2965 = vmatprep.subr.mxu0 0.0
    %2966 = vmatpush1.msra.mxu0 0.0
    %2967 = vmatprep.subr.mxu0 0.0
    %2968 = vmatpush1.msra.mxu0 0.0
    %2969 = vmatprep.subr.mxu0 0.0
    %2970 = vmatpush1.msra.mxu0 0.0
    %2971 = vmatprep.subr.mxu0 0.0
    %2972 = vmatpush1.msra.mxu0 0.0
    %2973 = vmatprep.subr.mxu0 0.0
    %2974 = vmatpush1.msra.mxu0 0.0
    %2975 = vmatprep.subr.mxu0 0.0
    %2976 = vmatpush1.msra.mxu0 0.0
    %2977 = vmatprep.subr.mxu0 0.0
    %2978 = vmatpush1.msra.mxu0 0.0
    %2979 = vmatprep.mubr.f32.mxu0 0.0
    %2980 = vmatmul.mubr.f32.gmra.mrb[0].mxu0 %v1159
    %v2981 = vpop.f32.mrb[0].mxu0
    %v2982 = vadd.f32 %v2912, %v2981
    %v2983 = vpop.f32.mrb[0].mxu0
    %2984 = vdwg.mxu0
    %s2985 = sld [smem:[#allocation3]]
    %v2986 = vstv %s2985
    %v2987 = vmul.f32 %v2986, %v2982
    %s2988 = sld [smem:[#allocation3 + $0x1]]
    %v2989 = vstv %s2988
    %v2990 = vmul.f32 %v2989, %v2982
    %2992 = vrot.lane.b32.xlu0 %v2990, 127
    %v2993 = vpop.permute.xlu0 %2992
    %v2995 = vadd.f32 %v2987, %v2993
    %s2996 = sld [smem:[#allocation3 + $0x2]]
    %v2997 = vstv %s2996
    %v2998 = vmul.f32 %v2997, %v2982
    %3000 = vrot.lane.b32.xlu0 %v2998, 126
    %v3001 = vpop.permute.xlu0 %3000
    %v3003 = vadd.f32 %v2995, %v3001
    %vm3004 = vcmp.ge.f32.partialorder %v3003, 0.0
    %v3005 = vmul.f32 %v3003, 0.01
    %v3006 = vsel %vm3004, %v3003, %v3005
    %s3007 = sld [smem:[#allocation3 + $0x3]]
    %v3008 = vstv %s3007
    %v3009 = vmul.f32 %v3008, %v2982
    %s3010 = sld [smem:[#allocation3 + $0x4]]
    %v3011 = vstv %s3010
    %v3012 = vmul.f32 %v3011, %v2982
    %3014 = vrot.lane.b32.xlu0 %v3012, 127
    %v3015 = vpop.permute.xlu0 %3014
    %v3017 = vadd.f32 %v3009, %v3015
    %s3018 = sld [smem:[#allocation3 + $0x5]]
    %v3019 = vstv %s3018
    %v3020 = vmul.f32 %v3019, %v2982
    %3022 = vrot.lane.b32.xlu0 %v3020, 126
    %v3023 = vpop.permute.xlu0 %3022
    %v3025 = vadd.f32 %v3017, %v3023
    %vm3026 = vcmp.ge.f32.partialorder %v3025, 0.0
    %v3027 = vmul.f32 %v3025, 0.01
    %v3028 = vsel %vm3026, %v3025, %v3027
    %s3029 = sld [smem:[#allocation3 + $0x6]]
    %v3030 = vstv %s3029
    %v3031 = vmul.f32 %v3030, %v2982
    %s3032 = sld [smem:[#allocation3 + $0x7]]
    %v3033 = vstv %s3032
    %v3034 = vmul.f32 %v3033, %v2982
    %3036 = vrot.lane.b32.xlu0 %v3034, 127
    %v3037 = vpop.permute.xlu0 %3036
    %v3039 = vadd.f32 %v3031, %v3037
    %s3040 = sld [smem:[#allocation3 + $0x8]]
    %v3041 = vstv %s3040
    %v3042 = vmul.f32 %v3041, %v2982
    %3044 = vrot.lane.b32.xlu0 %v3042, 126
    %v3045 = vpop.permute.xlu0 %3044
    %v3047 = vadd.f32 %v3039, %v3045
    %vm3048 = vcmp.ge.f32.partialorder %v3047, 0.0
    %v3049 = vmul.f32 %v3047, 0.01
    %v3050 = vsel %vm3048, %v3047, %v3049
    %s3051 = sld [smem:[#allocation3 + $0x9]]
    %v3052 = vstv %s3051
    %v3053 = vmul.f32 %v3052, %v2982
    %s3054 = sld [smem:[#allocation3 + $0xa]]
    %v3055 = vstv %s3054
    %v3056 = vmul.f32 %v3055, %v2982
    %3058 = vrot.lane.b32.xlu0 %v3056, 127
    %v3059 = vpop.permute.xlu0 %3058
    %v3061 = vadd.f32 %v3053, %v3059
    %s3062 = sld [smem:[#allocation3 + $0xb]]
    %v3063 = vstv %s3062
    %v3064 = vmul.f32 %v3063, %v2982
    %3066 = vrot.lane.b32.xlu0 %v3064, 126
    %v3067 = vpop.permute.xlu0 %3066
    %v3069 = vadd.f32 %v3061, %v3067
    %vm3070 = vcmp.ge.f32.partialorder %v3069, 0.0
    %v3071 = vmul.f32 %v3069, 0.01
    %v3072 = vsel %vm3070, %v3069, %v3071
    %v3073 = vld [vmem:[%s4] sm:$0x1]
    %s3074 = sld [smem:[#allocation2]]
    %s3075 = sld [smem:[#allocation5]]
    %v3076 = vstv %s3075
    %v3077 = vmul.f32 %v3076, %v3006
    %s3078 = sld [smem:[#allocation5 + $0x1]]
    %v3079 = vstv %s3078
    %v3080 = vmul.f32 %v3079, %v3006
    %3082 = vrot.lane.b32.xlu0 %v3080, 127
    %v3083 = vpop.permute.xlu0 %3082
    %v3085 = vadd.f32 %v3077, %v3083
    %s3086 = sld [smem:[#allocation5 + $0x2]]
    %v3087 = vstv %s3086
    %v3088 = vmul.f32 %v3087, %v3006
    %3090 = vrot.lane.b32.xlu0 %v3088, 126
    %v3091 = vpop.permute.xlu0 %3090
    %v3093 = vadd.f32 %v3085, %v3091
    %s3094 = sld [smem:[#allocation5 + $0x3]]
    %v3095 = vstv %s3094
    %v3096 = vmul.f32 %v3095, %v3028
    %v3097 = vadd.f32 %v3093, %v3096
    %s3098 = sld [smem:[#allocation5 + $0x4]]
    %v3099 = vstv %s3098
    %v3100 = vmul.f32 %v3099, %v3028
    %3102 = vrot.lane.b32.xlu0 %v3100, 127
    %v3103 = vpop.permute.xlu0 %3102
    %v3105 = vadd.f32 %v3097, %v3103
    %s3106 = sld [smem:[#allocation5 + $0x5]]
    %v3107 = vstv %s3106
    %v3108 = vmul.f32 %v3107, %v3028
    %3110 = vrot.lane.b32.xlu0 %v3108, 126
    %v3111 = vpop.permute.xlu0 %3110
    %v3113 = vadd.f32 %v3105, %v3111
    %s3114 = sld [smem:[#allocation5 + $0x6]]
    %v3115 = vstv %s3114
    %v3116 = vmul.f32 %v3115, %v3050
    %v3117 = vadd.f32 %v3113, %v3116
    %s3118 = sld [smem:[#allocation5 + $0x7]]
    %v3119 = vstv %s3118
    %v3120 = vmul.f32 %v3119, %v3050
    %3122 = vrot.lane.b32.xlu0 %v3120, 127
    %v3123 = vpop.permute.xlu0 %3122
    %v3125 = vadd.f32 %v3117, %v3123
    %s3126 = sld [smem:[#allocation5 + $0x8]]
    %v3127 = vstv %s3126
    %v3128 = vmul.f32 %v3127, %v3050
    %3130 = vrot.lane.b32.xlu0 %v3128, 126
    %v3131 = vpop.permute.xlu0 %3130
    %v3133 = vadd.f32 %v3125, %v3131
    %s3134 = sld [smem:[#allocation5 + $0x9]]
    %v3135 = vstv %s3134
    %v3136 = vmul.f32 %v3135, %v3072
    %v3137 = vadd.f32 %v3133, %v3136
    %s3138 = sld [smem:[#allocation5 + $0xa]]
    %v3139 = vstv %s3138
    %v3140 = vmul.f32 %v3139, %v3072
    %3142 = vrot.lane.b32.xlu0 %v3140, 127
    %v3143 = vpop.permute.xlu0 %3142
    %v3145 = vadd.f32 %v3137, %v3143
    %s3146 = sld [smem:[#allocation5 + $0xb]]
    %v3147 = vstv %s3146
    %v3148 = vmul.f32 %v3147, %v3072
    %3150 = vrot.lane.b32.xlu0 %v3148, 126
    %v3151 = vpop.permute.xlu0 %3150
    %v3153 = vadd.f32 %v3145, %v3151
    %3155 = vrot.lane.b32.xlu0 %v3153, 127
    %v3156 = vpop.permute.xlu0 %3155
    %v3158 = vmax.f32 %v3153, %v3156
    %3160 = vrot.lane.b32.xlu0 %v3158, 126
    %v3161 = vpop.permute.xlu0 %3160
    %v3163 = vmax.f32 %v3158, %v3161
    %v3165 = vlaneseq
    %v3166 = vshrl.u32 %v3165, 7
    %v3167 = vsub.s32 0, %v3166
    %v3168 = vrot.slane %v3073, %v3167
    %v3170 = vmul.f32 %v3163, %v3168
    %vm3171 = vcmask 361472
    %v3172 = vsel %vm3171, %v3170, 0.0
    %3173 = vadd.xlane.f32.xlu0 %v3172
    %v3174 = vpop.xlane.xlu0 %3173
    %v3175 = vstv %s3074
    %v3176 = vadd.f32 %v3174, %v3175
    %v3177 = vxor.u32 %v3176, 2147483648
    %v3178 = vmul.f32 %v3177, 1.442695
    %v3179 = vpow.pop %v3178
    %v3180 = vadd.f32 %v3179, 1.0
    %v3181 = vrcp.pop %v3180
    %v3182 = vmul.f32 1.0, %v3181
    %v3184 = vlaneseq
    %v3185 = vand.u32 %v3184, 127
    %v3186 = vlaneseq
    %v3187 = vshrl.u32 %v3186, 7
    %v3188 = vsub.s32 %v3185, %v3187
    %v3189 = vrot.slane %v3182, %v3188
    %vm3191 = vcmask 8192
    %3192 = vst.msk [vmem:[%s6] sm:$0x1] %vm3191, %v3189
    %s3193 = sld [smem:[#allocation5 + $0xc]]
    %v3194 = vstv %s3193
    %v3195 = vmul.f32 %v3194, %v3006
    %s3196 = sld [smem:[#allocation5 + $0xd]]
    %v3197 = vstv %s3196
    %v3198 = vmul.f32 %v3197, %v3006
    %3200 = vrot.lane.b32.xlu0 %v3198, 127
    %v3201 = vpop.permute.xlu0 %3200
    %v3203 = vadd.f32 %v3195, %v3201
    %s3204 = sld [smem:[#allocation5 + $0xe]]
    %v3205 = vstv %s3204
    %v3206 = vmul.f32 %v3205, %v3006
    %3208 = vrot.lane.b32.xlu0 %v3206, 126
    %v3209 = vpop.permute.xlu0 %3208
    %v3211 = vadd.f32 %v3203, %v3209
    %s3212 = sld [smem:[#allocation5 + $0xf]]
    %v3213 = vstv %s3212
    %v3214 = vmul.f32 %v3213, %v3028
    %v3215 = vadd.f32 %v3211, %v3214
    %s3216 = sld [smem:[#allocation5 + $0x10]]
    %v3217 = vstv %s3216
    %v3218 = vmul.f32 %v3217, %v3028
    %3220 = vrot.lane.b32.xlu0 %v3218, 127
    %v3221 = vpop.permute.xlu0 %3220
    %v3223 = vadd.f32 %v3215, %v3221
    %s3224 = sld [smem:[#allocation5 + $0x11]]
    %v3225 = vstv %s3224
    %v3226 = vmul.f32 %v3225, %v3028
    %3228 = vrot.lane.b32.xlu0 %v3226, 126
    %v3229 = vpop.permute.xlu0 %3228
    %v3231 = vadd.f32 %v3223, %v3229
    %s3232 = sld [smem:[#allocation5 + $0x12]]
    %v3233 = vstv %s3232
    %v3234 = vmul.f32 %v3233, %v3050
    %v3235 = vadd.f32 %v3231, %v3234
    %s3236 = sld [smem:[#allocation5 + $0x13]]
    %v3237 = vstv %s3236
    %v3238 = vmul.f32 %v3237, %v3050
    %3240 = vrot.lane.b32.xlu0 %v3238, 127
    %v3241 = vpop.permute.xlu0 %3240
    %v3243 = vadd.f32 %v3235, %v3241
    %s3244 = sld [smem:[#allocation5 + $0x14]]
    %v3245 = vstv %s3244
    %v3246 = vmul.f32 %v3245, %v3050
    %3248 = vrot.lane.b32.xlu0 %v3246, 126
    %v3249 = vpop.permute.xlu0 %3248
    %v3251 = vadd.f32 %v3243, %v3249
    %s3252 = sld [smem:[#allocation5 + $0x15]]
    %v3253 = vstv %s3252
    %v3254 = vmul.f32 %v3253, %v3072
    %v3255 = vadd.f32 %v3251, %v3254
    %s3256 = sld [smem:[#allocation5 + $0x16]]
    %v3257 = vstv %s3256
    %v3258 = vmul.f32 %v3257, %v3072
    %3260 = vrot.lane.b32.xlu0 %v3258, 127
    %v3261 = vpop.permute.xlu0 %3260
    %v3263 = vadd.f32 %v3255, %v3261
    %s3264 = sld [smem:[#allocation5 + $0x17]]
    %v3265 = vstv %s3264
    %v3266 = vmul.f32 %v3265, %v3072
    %3268 = vrot.lane.b32.xlu0 %v3266, 126
    %v3269 = vpop.permute.xlu0 %3268
    %v3271 = vadd.f32 %v3263, %v3269
    %3273 = vrot.lane.b32.xlu0 %v3271, 127
    %v3274 = vpop.permute.xlu0 %3273
    %v3276 = vmax.f32 %v3271, %v3274
    %3278 = vrot.lane.b32.xlu0 %v3276, 126
    %v3279 = vpop.permute.xlu0 %3278
    %v3281 = vmax.f32 %v3276, %v3279
    %v3282 = vmul.f32 %v3281, %v3168
    %v3283 = vsel %vm3171, %v3282, 0.0
    %3284 = vadd.xlane.f32.xlu0 %v3283
    %v3285 = vpop.xlane.xlu0 %3284
    %v3286 = vadd.f32 %v3285, %v3175
    %v3287 = vxor.u32 %v3286, 2147483648
    %v3288 = vmul.f32 %v3287, 1.442695
    %v3289 = vpow.pop %v3288
    %v3290 = vadd.f32 %v3289, 1.0
    %v3291 = vrcp.pop %v3290
    %v3292 = vmul.f32 1.0, %v3291
    %v3294 = vlaneseq
    %v3295 = vshrl.u32 %v3294, 7
    %v3296 = vsub.s32 %v3185, %v3295
    %v3297 = vrot.slane %v3292, %v3296
    %3299 = vst.msk [vmem:[%s6 + $0x1] sm:$0x1] %vm3191, %v3297
    %s3300 = sld [smem:[#allocation5 + $0x18]]
    %v3301 = vstv %s3300
    %v3302 = vmul.f32 %v3301, %v3006
    %s3303 = sld [smem:[#allocation5 + $0x19]]
    %v3304 = vstv %s3303
    %v3305 = vmul.f32 %v3304, %v3006
    %3307 = vrot.lane.b32.xlu0 %v3305, 127
    %v3308 = vpop.permute.xlu0 %3307
    %v3310 = vadd.f32 %v3302, %v3308
    %s3311 = sld [smem:[#allocation5 + $0x1a]]
    %v3312 = vstv %s3311
    %v3313 = vmul.f32 %v3312, %v3006
    %3315 = vrot.lane.b32.xlu0 %v3313, 126
    %v3316 = vpop.permute.xlu0 %3315
    %v3318 = vadd.f32 %v3310, %v3316
    %s3319 = sld [smem:[#allocation5 + $0x1b]]
    %v3320 = vstv %s3319
    %v3321 = vmul.f32 %v3320, %v3028
    %v3322 = vadd.f32 %v3318, %v3321
    %s3323 = sld [smem:[#allocation5 + $0x1c]]
    %v3324 = vstv %s3323
    %v3325 = vmul.f32 %v3324, %v3028
    %3327 = vrot.lane.b32.xlu0 %v3325, 127
    %v3328 = vpop.permute.xlu0 %3327
    %v3330 = vadd.f32 %v3322, %v3328
    %s3331 = sld [smem:[#allocation5 + $0x1d]]
    %v3332 = vstv %s3331
    %v3333 = vmul.f32 %v3332, %v3028
    %3335 = vrot.lane.b32.xlu0 %v3333, 126
    %v3336 = vpop.permute.xlu0 %3335
    %v3338 = vadd.f32 %v3330, %v3336
    %s3339 = sld [smem:[#allocation5 + $0x1e]]
    %v3340 = vstv %s3339
    %v3341 = vmul.f32 %v3340, %v3050
    %v3342 = vadd.f32 %v3338, %v3341
    %s3343 = sld [smem:[#allocation5 + $0x1f]]
    %v3344 = vstv %s3343
    %v3345 = vmul.f32 %v3344, %v3050
    %3347 = vrot.lane.b32.xlu0 %v3345, 127
    %v3348 = vpop.permute.xlu0 %3347
    %v3350 = vadd.f32 %v3342, %v3348
    %s3351 = sld [smem:[#allocation5 + $0x20]]
    %v3352 = vstv %s3351
    %v3353 = vmul.f32 %v3352, %v3050
    %3355 = vrot.lane.b32.xlu0 %v3353, 126
    %v3356 = vpop.permute.xlu0 %3355
    %v3358 = vadd.f32 %v3350, %v3356
    %s3359 = sld [smem:[#allocation5 + $0x21]]
    %v3360 = vstv %s3359
    %v3361 = vmul.f32 %v3360, %v3072
    %v3362 = vadd.f32 %v3358, %v3361
    %s3363 = sld [smem:[#allocation5 + $0x22]]
    %v3364 = vstv %s3363
    %v3365 = vmul.f32 %v3364, %v3072
    %3367 = vrot.lane.b32.xlu0 %v3365, 127
    %v3368 = vpop.permute.xlu0 %3367
    %v3370 = vadd.f32 %v3362, %v3368
    %s3371 = sld [smem:[#allocation5 + $0x23]]
    %v3372 = vstv %s3371
    %v3373 = vmul.f32 %v3372, %v3072
    %3375 = vrot.lane.b32.xlu0 %v3373, 126
    %v3376 = vpop.permute.xlu0 %3375
    %v3378 = vadd.f32 %v3370, %v3376
    %3380 = vrot.lane.b32.xlu0 %v3378, 127
    %v3381 = vpop.permute.xlu0 %3380
    %v3383 = vmax.f32 %v3378, %v3381
    %3385 = vrot.lane.b32.xlu0 %v3383, 126
    %v3386 = vpop.permute.xlu0 %3385
    %v3388 = vmax.f32 %v3383, %v3386
    %v3389 = vmul.f32 %v3388, %v3168
    %v3390 = vsel %vm3171, %v3389, 0.0
    %3391 = vadd.xlane.f32.xlu0 %v3390
    %v3392 = vpop.xlane.xlu0 %3391
    %v3393 = vadd.f32 %v3392, %v3175
    %v3394 = vxor.u32 %v3393, 2147483648
    %v3395 = vmul.f32 %v3394, 1.442695
    %v3396 = vpow.pop %v3395
    %v3397 = vadd.f32 %v3396, 1.0
    %v3398 = vrcp.pop %v3397
    %v3399 = vmul.f32 1.0, %v3398
    %v3401 = vlaneseq
    %v3402 = vshrl.u32 %v3401, 7
    %v3403 = vsub.s32 %v3185, %v3402
    %v3404 = vrot.slane %v3399, %v3403
    %3406 = vst.msk [vmem:[%s6 + $0x2] sm:$0x1] %vm3191, %v3404
    %s3407 = sld [smem:[#allocation5 + $0x24]]
    %v3408 = vstv %s3407
    %v3409 = vmul.f32 %v3408, %v3006
    %s3410 = sld [smem:[#allocation5 + $0x25]]
    %v3411 = vstv %s3410
    %v3412 = vmul.f32 %v3411, %v3006
    %3414 = vrot.lane.b32.xlu0 %v3412, 127
    %v3415 = vpop.permute.xlu0 %3414
    %v3417 = vadd.f32 %v3409, %v3415
    %s3418 = sld [smem:[#allocation5 + $0x26]]
    %v3419 = vstv %s3418
    %v3420 = vmul.f32 %v3419, %v3006
    %3422 = vrot.lane.b32.xlu0 %v3420, 126
    %v3423 = vpop.permute.xlu0 %3422
    %v3425 = vadd.f32 %v3417, %v3423
    %s3426 = sld [smem:[#allocation5 + $0x27]]
    %v3427 = vstv %s3426
    %v3428 = vmul.f32 %v3427, %v3028
    %v3429 = vadd.f32 %v3425, %v3428
    %s3430 = sld [smem:[#allocation5 + $0x28]]
    %v3431 = vstv %s3430
    %v3432 = vmul.f32 %v3431, %v3028
    %3434 = vrot.lane.b32.xlu0 %v3432, 127
    %v3435 = vpop.permute.xlu0 %3434
    %v3437 = vadd.f32 %v3429, %v3435
    %s3438 = sld [smem:[#allocation5 + $0x29]]
    %v3439 = vstv %s3438
    %v3440 = vmul.f32 %v3439, %v3028
    %3442 = vrot.lane.b32.xlu0 %v3440, 126
    %v3443 = vpop.permute.xlu0 %3442
    %v3445 = vadd.f32 %v3437, %v3443
    %s3446 = sld [smem:[#allocation5 + $0x2a]]
    %v3447 = vstv %s3446
    %v3448 = vmul.f32 %v3447, %v3050
    %v3449 = vadd.f32 %v3445, %v3448
    %s3450 = sld [smem:[#allocation5 + $0x2b]]
    %v3451 = vstv %s3450
    %v3452 = vmul.f32 %v3451, %v3050
    %3454 = vrot.lane.b32.xlu0 %v3452, 127
    %v3455 = vpop.permute.xlu0 %3454
    %v3457 = vadd.f32 %v3449, %v3455
    %s3458 = sld [smem:[#allocation5 + $0x2c]]
    %v3459 = vstv %s3458
    %v3460 = vmul.f32 %v3459, %v3050
    %3462 = vrot.lane.b32.xlu0 %v3460, 126
    %v3463 = vpop.permute.xlu0 %3462
    %v3465 = vadd.f32 %v3457, %v3463
    %s3466 = sld [smem:[#allocation5 + $0x2d]]
    %v3467 = vstv %s3466
    %v3468 = vmul.f32 %v3467, %v3072
    %v3469 = vadd.f32 %v3465, %v3468
    %s3470 = sld [smem:[#allocation5 + $0x2e]]
    %v3471 = vstv %s3470
    %v3472 = vmul.f32 %v3471, %v3072
    %3474 = vrot.lane.b32.xlu0 %v3472, 127
    %v3475 = vpop.permute.xlu0 %3474
    %v3477 = vadd.f32 %v3469, %v3475
    %s3478 = sld [smem:[#allocation5 + $0x2f]]
    %v3479 = vstv %s3478
    %v3480 = vmul.f32 %v3479, %v3072
    %3482 = vrot.lane.b32.xlu0 %v3480, 126
    %v3483 = vpop.permute.xlu0 %3482
    %v3485 = vadd.f32 %v3477, %v3483
    %3487 = vrot.lane.b32.xlu0 %v3485, 127
    %v3488 = vpop.permute.xlu0 %3487
    %v3490 = vmax.f32 %v3485, %v3488
    %3492 = vrot.lane.b32.xlu0 %v3490, 126
    %v3493 = vpop.permute.xlu0 %3492
    %v3495 = vmax.f32 %v3490, %v3493
    %v3496 = vmul.f32 %v3495, %v3168
    %v3497 = vsel %vm3171, %v3496, 0.0
    %3498 = vadd.xlane.f32.xlu0 %v3497
    %v3499 = vpop.xlane.xlu0 %3498
    %v3500 = vadd.f32 %v3499, %v3175
    %v3501 = vxor.u32 %v3500, 2147483648
    %v3502 = vmul.f32 %v3501, 1.442695
    %v3503 = vpow.pop %v3502
    %v3504 = vadd.f32 %v3503, 1.0
    %v3505 = vrcp.pop %v3504
    %v3506 = vmul.f32 1.0, %v3505
    %v3508 = vlaneseq
    %v3509 = vshrl.u32 %v3508, 7
    %v3510 = vsub.s32 %v3185, %v3509
    %v3511 = vrot.slane %v3506, %v3510
    %3513 = vst.msk [vmem:[%s6 + $0x3] sm:$0x1] %vm3191, %v3511
    // Predicated region
    $region34: #{tpu_custom_call.1} parent=1 // pred_check
      _
    $region35: #{tpu_custom_call.1} parent=1 // pred_check_branch
      %3515 = sbr.rel (0) target = $region37
    $region36: #{tpu_custom_call.1} parent=1 // pred_region
      _
    $region37: #{tpu_custom_call.1} parent=1 // pred_fallthru
      _
    // Predicated region
    $region38: #{tpu_custom_call.1} parent=1 // pred_check
      _
    $region39: #{tpu_custom_call.1} parent=1 // pred_check_branch
      %3517 = sbr.rel (0) target = $region41
    $region40: #{tpu_custom_call.1} parent=1 // pred_region
      _
    $region41: #{tpu_custom_call.1} parent=1 // pred_fallthru
      _
    %3518 = vsyncpa [#allocation4], 1
    %3519 = vsyncpa [#allocation6], 1

</llo_original>
